<compile_context>
chip_gen: v6e
topology: v6e:2x2x1
jax: 0.10.0
libtpu: 0.0.40
codegen_flags: <defaults>
</compile_context>

<pallas_src>
import jax
import jax.numpy as jnp
from jax.experimental import pallas as pl
from jax.experimental.pallas import tpu as pltpu


# ---------------------------------------------------------------------------
# shared in-kernel helpers
# ---------------------------------------------------------------------------
def _mm(h, w_ref, b_ref, relu):
    """2-D linear: bf16 MXU matmul, f32 accumulation + f32 bias (+ ReLU)."""
    y = jnp.dot(h.astype(jnp.bfloat16), w_ref[...],
                preferred_element_type=jnp.float32)
    y = y + b_ref[...]                                    # (1, Cout) broadcasts
    return jnp.maximum(y, 0.0) if relu else y


def _conv1(x_tile, w1p_ref, wfeat_ref, b1_ref):
    """Encoder conv1 with the 3x3 input transform folded into the xyz weight.

    h1 = relu( xyz @ (trans @ W1[:3]) + feat @ W1[3:] + b1 )
    """
    B, tn, C = x_tile.shape
    xyz = x_tile[:, :, :3]                                 # (B, tn, 3) bf16
    y = jax.lax.dot_general(                               # (B, tn, 64) f32
        xyz, w1p_ref[...], (((2,), (1,)), ((0,), (0,))),
        preferred_element_type=jnp.float32)
    feat = x_tile[:, :, 3:].reshape(B * tn, C - 3)         # bf16
    y = y + jnp.dot(feat, wfeat_ref[...],
                    preferred_element_type=jnp.float32).reshape(B, tn, 64)
    return jnp.maximum(y + b1_ref[...], 0.0)               # f32 bias + ReLU


# ---------------------------------------------------------------------------
# phase A: STN3d over N tiles -> composed conv1 xyz weight  W1' = trans @ W1[:3]
# ---------------------------------------------------------------------------
def _stn3d_kernel(x_ref, c1w, c1b, c2w, c2b, c3w, c3b,
                  f1w, f1b, f2w, f2b, f3w, f3b, e1w_xyz,
                  w1p_ref, g_acc):
    j = pl.program_id(0)

    @pl.when(j == 0)
    def _():
        g_acc[...] = jnp.full(g_acc.shape, -jnp.inf, g_acc.dtype)

    x = x_ref[...]                                        # (B, tn, C) bf16
    B, tn, C = x.shape
    h = x.reshape(B * tn, C)
    h = _mm(h, c1w, c1b, True)
    h = _mm(h, c2w, c2b, True)
    h = _mm(h, c3w, c3b, True)                            # (B*tn, 1024) f32
    g_acc[...] = jnp.maximum(g_acc[...],
                             jnp.max(h.reshape(B, tn, -1), axis=1))

    @pl.when(j == pl.num_programs(0) - 1)
    def _():
        g = _mm(g_acc[...], f1w, f1b, True)
        g = _mm(g, f2w, f2b, True)
        t9 = _mm(g, f3w, f3b, False)                      # (B, 9), eye(3) in bias
        ew = e1w_xyz[...]                                 # (3, 64) f32
        # W1'[b] = trans[b] @ W1[:3]  (tiny, done once; avoids per-tile
        # lane-sparse stack/concat of transformed xyz)
        rows = [(t9[:, 3 * r + 0:3 * r + 1] * ew[0:1, :]
                 + t9[:, 3 * r + 1:3 * r + 2] * ew[1:2, :]
                 + t9[:, 3 * r + 2:3 * r + 3] * ew[2:3, :])[:, None, :]
                for r in range(3)]
        w1p_ref[...] = jnp.concatenate(rows, axis=1).astype(w1p_ref.dtype)


# ---------------------------------------------------------------------------
# phase B: conv1 + STNkd over N tiles -> composed conv2 weight  W2' = T_f @ W2
# ---------------------------------------------------------------------------
def _fstn_kernel(x_ref, w1p, e1w_feat, e1b,
                 c1w, c1b, c2w, c2b, c3w, c3b,
                 f1w, f1b, f2w, f2b, f3w, f3b, e2w,
                 w2p_ref, g_acc):
    j = pl.program_id(0)

    @pl.when(j == 0)
    def _():
        g_acc[...] = jnp.full(g_acc.shape, -jnp.inf, g_acc.dtype)

    h1 = _conv1(x_ref[...], w1p, e1w_feat, e1b)           # (B, tn, 64)
    B, tn, _ = h1.shape
    h = h1.reshape(B * tn, 64)
    h = _mm(h, c1w, c1b, True)
    h = _mm(h, c2w, c2b, True)
    h = _mm(h, c3w, c3b, True)                            # (B*tn, 1024)
    g_acc[...] = jnp.maximum(g_acc[...],
                             jnp.max(h.reshape(B, tn, -1), axis=1))

    @pl.when(j == pl.num_programs(0) - 1)
    def _():
        g = _mm(g_acc[...], f1w, f1b, True)
        g = _mm(g, f2w, f2b, True)
        t = _mm(g, f3w, f3b, False)                       # (B, 4096), eye(64) in bias
        tfeat = t.reshape(t.shape[0], 64, 64).astype(jnp.bfloat16)
        # fold the feature transform into conv2: W2' = trans_feat @ W_conv2
        w2p_ref[...] = jax.lax.dot_general(               # (B, 64, 128)
            tfeat, e2w[...], (((2,), (0,)), ((), ())),
            preferred_element_type=jnp.float32).astype(w2p_ref.dtype)


# ---------------------------------------------------------------------------
# phase C: conv1 / conv2' / conv3 over N tiles -> global max feature (B, 1024)
# ---------------------------------------------------------------------------
def _encoder_kernel(x_ref, w1p, e1w_feat, e1b, w2p, e2b, e3w, e3b, out_ref):
    j = pl.program_id(0)

    @pl.when(j == 0)
    def _():
        out_ref[...] = jnp.full(out_ref.shape, -jnp.inf, out_ref.dtype)

    h1 = _conv1(x_ref[...], w1p, e1w_feat, e1b)           # (B, tn, 64)
    B, tn, _ = h1.shape
    # conv2 with the 64x64 feature transform folded into its weight
    h2 = jax.lax.dot_general(                              # (B, tn, 128)
        h1.astype(jnp.bfloat16), w2p[...], (((2,), (1,)), ((0,), (0,))),
        preferred_element_type=jnp.float32)
    h2 = jnp.maximum(h2 + e2b[...], 0.0)
    h3 = _mm(h2.reshape(B * tn, 128), e3w, e3b, False)     # bn3(conv3), no relu
    out_ref[...] = jnp.maximum(out_ref[...],
                               jnp.max(h3.reshape(B, tn, -1), axis=1))


# ---------------------------------------------------------------------------
# Wrapper: layout glue + three N-tiled pallas_calls
# ---------------------------------------------------------------------------
def pointnet_encoder_forward(x_bcn, params, *, tile_n=128,
                             feature_transform=True):
    """PointNetEncoder(global_feat=True) forward: (B, C, N) -> (B, 1024)."""
    B, C, N = x_bcn.shape
    assert C > 3, "kernel assumes xyz + at least one extra feature channel"
    # TODO(synk): channel == 3 (no extra features) needs a conv1 variant
    #             without the feature matmul (or zero-pad a fourth channel).

    # x is only ever consumed in bf16 by the MXU -> cast once, stream 3x cheaper
    x = jnp.transpose(x_bcn, (0, 2, 1)).astype(jnp.bfloat16)   # (B, N, C)

    tile_n = min(tile_n, N)
    assert N % tile_n == 0, "N must be a multiple of tile_n"
    nt = N // tile_n
    p = params

    def resident(a):                      # whole-array VMEM block, DMA'd once
        nd = a.ndim
        return pl.BlockSpec(a.shape, lambda j, nd=nd: (0,) * nd)

    x_spec = pl.BlockSpec((B, tile_n, C), lambda j: (0, j, 0))
    cparams = pltpu.CompilerParams(
        dimension_semantics=("arbitrary",),        # N axis is a (max) reduction
        vmem_limit_bytes=48 << 20)                 # fits v7x's 64 MiB VMEM
    acc = [pltpu.VMEM((B, 1024), jnp.float32)]

    # ---- phase A: STN3d -> W1' = trans @ conv1_w[:3]  (B, 3, 64) bf16
    a1 = [x, p["s_c1w"], p["s_c1b"], p["s_c2w"], p["s_c2b"], p["s_c3w"],
          p["s_c3b"], p["s_f1w"], p["s_f1b"], p["s_f2w"], p["s_f2b"],
          p["s_f3w"], p["s_f3b"], p["e_c1w_xyz"]]
    w1p = pl.pallas_call(
        _stn3d_kernel,
        out_shape=jax.ShapeDtypeStruct((B, 3, 64), jnp.bfloat16),
        grid=(nt,),
        in_specs=[x_spec] + [resident(a) for a in a1[1:]],
        out_specs=pl.BlockSpec((B, 3, 64), lambda j: (0, 0, 0)),
        scratch_shapes=acc,
        compiler_params=cparams,
    )(*a1)

    # ---- phase B: conv1 + STNkd -> W2' = trans_feat @ conv2_w  (B, 64, 128)
    if feature_transform:
        a2 = [x, w1p, p["e_c1w_feat"], p["e_c1b"],
              p["f_c1w"], p["f_c1b"], p["f_c2w"], p["f_c2b"], p["f_c3w"],
              p["f_c3b"], p["f_f1w"], p["f_f1b"], p["f_f2w"], p["f_f2b"],
              p["f_f3w"], p["f_f3b"], p["e_c2w"]]
        w2p = pl.pallas_call(
            _fstn_kernel,
            out_shape=jax.ShapeDtypeStruct((B, 64, 128), jnp.bfloat16),
            grid=(nt,),
            in_specs=[x_spec] + [resident(a) for a in a2[1:]],
            out_specs=pl.BlockSpec((B, 64, 128), lambda j: (0, 0, 0)),
            scratch_shapes=acc,
            compiler_params=cparams,
        )(*a2)
    else:
        # no feature transform: conv2 weight is shared across the batch
        w2p = jnp.broadcast_to(p["e_c2w"][None], (B, 64, 128)).astype(jnp.bfloat16)

    # ---- phase C: conv1 / conv2' / conv3 -> global max feature (B, 1024)
    a3 = [x, w1p, p["e_c1w_feat"], p["e_c1b"], w2p, p["e_c2b"],
          p["e_c3w"], p["e_c3b"]]
    gfeat = pl.pallas_call(
        _encoder_kernel,
        out_shape=jax.ShapeDtypeStruct((B, 1024), jnp.float32),
        grid=(nt,),
        in_specs=[x_spec] + [resident(a) for a in a3[1:]],
        out_specs=pl.BlockSpec((B, 1024), lambda j: (0, 0)),
        compiler_params=cparams,
    )(*a3)
    return gfeat


# ---------------------------------------------------------------------------
# Deterministic synthetic parameters (eval-mode BN folded into weights).
# Matmul weights stored bf16; biases / the tiny 3x64 compose weight stay f32.
# ---------------------------------------------------------------------------
def make_params(key, in_chans=4):
    keys = jax.random.split(key, 64)
    kit = iter(keys)
    bf16 = jnp.bfloat16

    def linear(cin, cout, w_scale=0.1):
        kw, kb = jax.random.split(next(kit))
        w = jax.random.normal(kw, (cin, cout), jnp.float32) * (w_scale / cin ** 0.5)
        b = jax.random.normal(kb, (cout,), jnp.float32) * 0.01
        return w, b

    def linear_bn(cin, cout, eps=1e-5):
        w, b = linear(cin, cout)
        kg, kbe, km, kv = jax.random.split(next(kit), 4)
        gamma = 1.0 + 0.1 * jax.random.normal(kg, (cout,), jnp.float32)
        beta = 0.1 * jax.random.normal(kbe, (cout,), jnp.float32)
        mean = 0.01 * jax.random.normal(km, (cout,), jnp.float32)
        var = 0.9 + 0.1 * jnp.abs(jax.random.normal(kv, (cout,), jnp.float32))
        s = gamma * jax.lax.rsqrt(var + eps)
        return w * s[None, :], (b - mean) * s + beta

    p = {}

    def stn_chain(prefix, cin0, k_out, iden):
        names = ["c1", "c2", "c3", "f1", "f2"]
        dims = [(cin0, 64), (64, 128), (128, 1024), (1024, 512), (512, 256)]
        for name, (cin, cout) in zip(names, dims):
            w, b = linear_bn(cin, cout)
            p[prefix + name + "w"] = w.astype(bf16)
            p[prefix + name + "b"] = b.reshape(1, -1)
        w, b = linear(256, k_out)
        p[prefix + "f3w"] = w.astype(bf16)
        p[prefix + "f3b"] = (b + iden).reshape(1, -1)      # identity baked in

    # STN3d(channel=in_chans) and STNkd(k=64)
    stn_chain("s_", in_chans, 9, jnp.eye(3, dtype=jnp.float32).reshape(-1))
    stn_chain("f_", 64, 64 * 64, jnp.eye(64, dtype=jnp.float32).reshape(-1))

    # Encoder conv1 (xyz rows kept f32 for the in-kernel compose with trans)
    w, b = linear_bn(in_chans, 64)
    p["e_c1w_xyz"] = w[:3, :]
    p["e_c1w_feat"] = w[3:, :].astype(bf16)
    p["e_c1b"] = b.reshape(1, -1)
    w, b = linear_bn(64, 128)
    p["e_c2w"] = w.astype(bf16)
    p["e_c2b"] = b.reshape(1, -1)
    w, b = linear_bn(128, 1024)
    p["e_c3w"] = w.astype(bf16)
    p["e_c3b"] = b.reshape(1, -1)
    return p


if __name__ == "__main__":
    B, C, N = 2, 4, 16                   # batch=2, channels=4, 16 points
    key = jax.random.PRNGKey(0)
    kx, kp = jax.random.split(key)
    x = jax.random.normal(kx, (B, C, N), jnp.float32)      # PyTorch NCW input
    params = make_params(kp, in_chans=C)

    out = pointnet_encoder_forward(x, params, tile_n=8,    # 2 N-tiles per phase
                                   feature_transform=True)
    out = jax.block_until_ready(out)
    assert out.shape == (B, 1024)
    assert bool(jnp.all(jnp.isfinite(out)))
    print("KERNEL_OK")
</pallas_src>

<mosaic_0001>
module attributes {stable_mosaic.version = 11 : i64} {
  func.func @_stn3d_kernel(%arg0: i32, %arg1: memref<2x8x4xbf16, #tpu.memory_space<vmem>>, %arg2: memref<4x64xbf16, #tpu.memory_space<vmem>>, %arg3: memref<1x64xf32, #tpu.memory_space<vmem>>, %arg4: memref<64x128xbf16, #tpu.memory_space<vmem>>, %arg5: memref<1x128xf32, #tpu.memory_space<vmem>>, %arg6: memref<128x1024xbf16, #tpu.memory_space<vmem>>, %arg7: memref<1x1024xf32, #tpu.memory_space<vmem>>, %arg8: memref<1024x512xbf16, #tpu.memory_space<vmem>>, %arg9: memref<1x512xf32, #tpu.memory_space<vmem>>, %arg10: memref<512x256xbf16, #tpu.memory_space<vmem>>, %arg11: memref<1x256xf32, #tpu.memory_space<vmem>>, %arg12: memref<256x9xbf16, #tpu.memory_space<vmem>>, %arg13: memref<1x9xf32, #tpu.memory_space<vmem>>, %arg14: memref<3x64xf32, #tpu.memory_space<vmem>>, %arg15: memref<2x3x64xbf16, #tpu.memory_space<vmem>>, %arg16: memref<2x1024xf32, #tpu.memory_space<vmem>>) attributes {dimension_semantics = [#tpu.dimension_semantics<arbitrary>], iteration_bounds = array<i64: 2>, scalar_prefetch = 0 : i64, scratch_operands = 1 : i64, tpu.core_type = #tpu.core_type<tc>, window_params = [{transform_indices = @transform_0, window_bounds = array<i64: 2, 8, 4>}, {pipeline_mode = #tpu.pipeline_mode<synchronous>, transform_indices = @transform_1, window_bounds = array<i64: 4, 64>}, {pipeline_mode = #tpu.pipeline_mode<synchronous>, transform_indices = @transform_2, window_bounds = array<i64: 1, 64>}, {pipeline_mode = #tpu.pipeline_mode<synchronous>, transform_indices = @transform_3, window_bounds = array<i64: 64, 128>}, {pipeline_mode = #tpu.pipeline_mode<synchronous>, transform_indices = @transform_4, window_bounds = array<i64: 1, 128>}, {pipeline_mode = #tpu.pipeline_mode<synchronous>, transform_indices = @transform_5, window_bounds = array<i64: 128, 1024>}, {pipeline_mode = #tpu.pipeline_mode<synchronous>, transform_indices = @transform_6, window_bounds = array<i64: 1, 1024>}, {pipeline_mode = #tpu.pipeline_mode<synchronous>, transform_indices = @transform_7, window_bounds = array<i64: 1024, 512>}, {pipeline_mode = #tpu.pipeline_mode<synchronous>, transform_indices = @transform_8, window_bounds = array<i64: 1, 512>}, {pipeline_mode = #tpu.pipeline_mode<synchronous>, transform_indices = @transform_9, window_bounds = array<i64: 512, 256>}, {pipeline_mode = #tpu.pipeline_mode<synchronous>, transform_indices = @transform_10, window_bounds = array<i64: 1, 256>}, {pipeline_mode = #tpu.pipeline_mode<synchronous>, transform_indices = @transform_11, window_bounds = array<i64: 256, 9>}, {pipeline_mode = #tpu.pipeline_mode<synchronous>, transform_indices = @transform_12, window_bounds = array<i64: 1, 9>}, {pipeline_mode = #tpu.pipeline_mode<synchronous>, transform_indices = @transform_13, window_bounds = array<i64: 3, 64>}, {pipeline_mode = #tpu.pipeline_mode<synchronous>, transform_indices = @transform_14, window_bounds = array<i64: 2, 3, 64>}]} {
    %c0_i32 = arith.constant 0 : i32
    %0 = arith.cmpi eq, %arg0, %c0_i32 : i32
    %1 = arith.extui %0 : i1 to i32
    %c0_i32_0 = arith.constant 0 : i32
    %2 = arith.cmpi ne, %1, %c0_i32_0 : i32
    scf.if %2 {
      %cst_26 = arith.constant 0xFF800000 : f32
      %36 = vector.broadcast %cst_26 : f32 to vector<2x1024xf32>
      %c0_27 = arith.constant 0 : index
      %c0_28 = arith.constant 0 : index
      %37 = vector.load %arg16[%c0_27, %c0_28] : memref<2x1024xf32, #tpu.memory_space<vmem>>, vector<2x1024xf32>
      tpu.vector_store %arg16[%c0_27, %c0_28], %36 {strides = array<i32>} : memref<2x1024xf32, #tpu.memory_space<vmem>>, vector<2x1024xf32>,
    } else {
    }
    %c0 = arith.constant 0 : index
    %c0_1 = arith.constant 0 : index
    %c0_2 = arith.constant 0 : index
    %3 = vector.load %arg1[%c0, %c0_1, %c0_2] : memref<2x8x4xbf16, #tpu.memory_space<vmem>>, vector<2x8x4xbf16>
    %4 = vector.shape_cast %3 : vector<2x8x4xbf16> to vector<16x4xbf16>
    %c0_3 = arith.constant 0 : index
    %c0_4 = arith.constant 0 : index
    %5 = vector.load %arg2[%c0_3, %c0_4] : memref<4x64xbf16, #tpu.memory_space<vmem>>, vector<4x64xbf16>
    %cst = arith.constant dense<0.000000e+00> : vector<16x64xf32>
    %6 = tpu.matmul %4, %5, %cst {dimension_numbers = #tpu.dot_dimension_numbers<[1], [0], [0], [1], [0, 0, 1, 1], [], []>} : vector<16x4xbf16>, vector<4x64xbf16>, vector<16x64xf32> -> vector<16x64xf32>
    %c0_5 = arith.constant 0 : index
    %c0_6 = arith.constant 0 : index
    %7 = vector.load %arg3[%c0_5, %c0_6] : memref<1x64xf32, #tpu.memory_space<vmem>>, vector<1x64xf32>
    %8 = vector.broadcast %7 : vector<1x64xf32> to vector<16x64xf32>
    %9 = arith.addf %6, %8 : vector<16x64xf32>
    %cst_7 = arith.constant 0.000000e+00 : f32
    %10 = vector.broadcast %cst_7 : f32 to vector<16x64xf32>
    %11 = arith.maximumf %9, %10 : vector<16x64xf32>
    %12 = arith.truncf %11 : vector<16x64xf32> to vector<16x64xbf16>
    %c0_8 = arith.constant 0 : index
    %c0_9 = arith.constant 0 : index
    %13 = vector.load %arg4[%c0_8, %c0_9] : memref<64x128xbf16, #tpu.memory_space<vmem>>, vector<64x128xbf16>
    %cst_10 = arith.constant dense<0.000000e+00> : vector<16x128xf32>
    %14 = tpu.matmul %12, %13, %cst_10 {dimension_numbers = #tpu.dot_dimension_numbers<[1], [0], [0], [1], [0, 0, 1, 1], [], []>} : vector<16x64xbf16>, vector<64x128xbf16>, vector<16x128xf32> -> vector<16x128xf32>
    %c0_11 = arith.constant 0 : index
    %c0_12 = arith.constant 0 : index
    %15 = vector.load %arg5[%c0_11, %c0_12] : memref<1x128xf32, #tpu.memory_space<vmem>>, vector<1x128xf32>
    %16 = vector.broadcast %15 : vector<1x128xf32> to vector<16x128xf32>
    %17 = arith.addf %14, %16 : vector<16x128xf32>
    %cst_13 = arith.constant 0.000000e+00 : f32
    %18 = vector.broadcast %cst_13 : f32 to vector<16x128xf32>
    %19 = arith.maximumf %17, %18 : vector<16x128xf32>
    %20 = arith.truncf %19 : vector<16x128xf32> to vector<16x128xbf16>
    %c0_14 = arith.constant 0 : index
    %c0_15 = arith.constant 0 : index
    %21 = vector.load %arg6[%c0_14, %c0_15] : memref<128x1024xbf16, #tpu.memory_space<vmem>>, vector<128x1024xbf16>
    %cst_16 = arith.constant dense<0.000000e+00> : vector<16x1024xf32>
    %22 = tpu.matmul %20, %21, %cst_16 {dimension_numbers = #tpu.dot_dimension_numbers<[1], [0], [0], [1], [0, 0, 1, 1], [], []>} : vector<16x128xbf16>, vector<128x1024xbf16>, vector<16x1024xf32> -> vector<16x1024xf32>
    %c0_17 = arith.constant 0 : index
    %c0_18 = arith.constant 0 : index
    %23 = vector.load %arg7[%c0_17, %c0_18] : memref<1x1024xf32, #tpu.memory_space<vmem>>, vector<1x1024xf32>
    %24 = vector.broadcast %23 : vector<1x1024xf32> to vector<16x1024xf32>
    %25 = arith.addf %22, %24 : vector<16x1024xf32>
    %cst_19 = arith.constant 0.000000e+00 : f32
    %26 = vector.broadcast %cst_19 : f32 to vector<16x1024xf32>
    %27 = arith.maximumf %25, %26 : vector<16x1024xf32>
    %c0_20 = arith.constant 0 : index
    %c0_21 = arith.constant 0 : index
    %28 = vector.load %arg16[%c0_20, %c0_21] : memref<2x1024xf32, #tpu.memory_space<vmem>>, vector<2x1024xf32>
    %29 = vector.shape_cast %27 : vector<16x1024xf32> to vector<2x8x1024xf32>
    %cst_22 = arith.constant dense<0xFF800000> : vector<2x1024xf32>
    %30 = vector.multi_reduction <maximumf>, %29, %cst_22 [1] : vector<2x8x1024xf32> to vector<2x1024xf32>
    %31 = arith.maximumf %28, %30 : vector<2x1024xf32>
    %c0_23 = arith.constant 0 : index
    %c0_24 = arith.constant 0 : index
    %32 = vector.load %arg16[%c0_23, %c0_24] : memref<2x1024xf32, #tpu.memory_space<vmem>>, vector<2x1024xf32>
    tpu.vector_store %arg16[%c0_23, %c0_24], %31 {strides = array<i32>} : memref<2x1024xf32, #tpu.memory_space<vmem>>, vector<2x1024xf32>,
    %c1_i32 = arith.constant 1 : i32
    %33 = arith.cmpi eq, %arg0, %c1_i32 : i32
    %34 = arith.extui %33 : i1 to i32
    %c0_i32_25 = arith.constant 0 : i32
    %35 = arith.cmpi ne, %34, %c0_i32_25 : i32
    scf.if %35 {
      %c0_26 = arith.constant 0 : index
      %c0_27 = arith.constant 0 : index
      %36 = vector.load %arg16[%c0_26, %c0_27] : memref<2x1024xf32, #tpu.memory_space<vmem>>, vector<2x1024xf32>
      %37 = arith.truncf %36 : vector<2x1024xf32> to vector<2x1024xbf16>
      %c0_28 = arith.constant 0 : index
      %c0_29 = arith.constant 0 : index
      %38 = vector.load %arg8[%c0_28, %c0_29] : memref<1024x512xbf16, #tpu.memory_space<vmem>>, vector<1024x512xbf16>
      %cst_30 = arith.constant dense<0.000000e+00> : vector<2x512xf32>
      %39 = tpu.matmul %37, %38, %cst_30 {dimension_numbers = #tpu.dot_dimension_numbers<[1], [0], [0], [1], [0, 0, 1, 1], [], []>} : vector<2x1024xbf16>, vector<1024x512xbf16>, vector<2x512xf32> -> vector<2x512xf32>
      %c0_31 = arith.constant 0 : index
      %c0_32 = arith.constant 0 : index
      %40 = vector.load %arg9[%c0_31, %c0_32] : memref<1x512xf32, #tpu.memory_space<vmem>>, vector<1x512xf32>
      %41 = vector.broadcast %40 : vector<1x512xf32> to vector<2x512xf32>
      %42 = arith.addf %39, %41 : vector<2x512xf32>
      %cst_33 = arith.constant 0.000000e+00 : f32
      %43 = vector.broadcast %cst_33 : f32 to vector<2x512xf32>
      %44 = arith.maximumf %42, %43 : vector<2x512xf32>
      %45 = arith.truncf %44 : vector<2x512xf32> to vector<2x512xbf16>
      %c0_34 = arith.constant 0 : index
      %c0_35 = arith.constant 0 : index
      %46 = vector.load %arg10[%c0_34, %c0_35] : memref<512x256xbf16, #tpu.memory_space<vmem>>, vector<512x256xbf16>
      %cst_36 = arith.constant dense<0.000000e+00> : vector<2x256xf32>
      %47 = tpu.matmul %45, %46, %cst_36 {dimension_numbers = #tpu.dot_dimension_numbers<[1], [0], [0], [1], [0, 0, 1, 1], [], []>} : vector<2x512xbf16>, vector<512x256xbf16>, vector<2x256xf32> -> vector<2x256xf32>
      %c0_37 = arith.constant 0 : index
      %c0_38 = arith.constant 0 : index
      %48 = vector.load %arg11[%c0_37, %c0_38] : memref<1x256xf32, #tpu.memory_space<vmem>>, vector<1x256xf32>
      %49 = vector.broadcast %48 : vector<1x256xf32> to vector<2x256xf32>
      %50 = arith.addf %47, %49 : vector<2x256xf32>
      %cst_39 = arith.constant 0.000000e+00 : f32
      %51 = vector.broadcast %cst_39 : f32 to vector<2x256xf32>
      %52 = arith.maximumf %50, %51 : vector<2x256xf32>
      %53 = arith.truncf %52 : vector<2x256xf32> to vector<2x256xbf16>
      %c0_40 = arith.constant 0 : index
      %c0_41 = arith.constant 0 : index
      %54 = vector.load %arg12[%c0_40, %c0_41] : memref<256x9xbf16, #tpu.memory_space<vmem>>, vector<256x9xbf16>
      %cst_42 = arith.constant dense<0.000000e+00> : vector<2x9xf32>
      %55 = tpu.matmul %53, %54, %cst_42 {dimension_numbers = #tpu.dot_dimension_numbers<[1], [0], [0], [1], [0, 0, 1, 1], [], []>} : vector<2x256xbf16>, vector<256x9xbf16>, vector<2x9xf32> -> vector<2x9xf32>
      %c0_43 = arith.constant 0 : index
      %c0_44 = arith.constant 0 : index
      %56 = vector.load %arg13[%c0_43, %c0_44] : memref<1x9xf32, #tpu.memory_space<vmem>>, vector<1x9xf32>
      %57 = vector.broadcast %56 : vector<1x9xf32> to vector<2x9xf32>
      %58 = arith.addf %55, %57 : vector<2x9xf32>
      %c0_45 = arith.constant 0 : index
      %c0_46 = arith.constant 0 : index
      %59 = vector.load %arg14[%c0_45, %c0_46] : memref<3x64xf32, #tpu.memory_space<vmem>>, vector<3x64xf32>
      %60 = vector.extract_strided_slice %58 {offsets = [0, 0], sizes = [2, 1], strides = [1, 1]} : vector<2x9xf32> to vector<2x1xf32>
      %61 = vector.extract_strided_slice %59 {offsets = [0, 0], sizes = [1, 64], strides = [1, 1]} : vector<3x64xf32> to vector<1x64xf32>
      %62 = vector.broadcast %60 : vector<2x1xf32> to vector<2x64xf32>
      %63 = vector.broadcast %61 : vector<1x64xf32> to vector<2x64xf32>
      %64 = arith.mulf %62, %63 : vector<2x64xf32>
      %65 = vector.extract_strided_slice %58 {offsets = [0, 1], sizes = [2, 1], strides = [1, 1]} : vector<2x9xf32> to vector<2x1xf32>
      %66 = vector.extract_strided_slice %59 {offsets = [1, 0], sizes = [1, 64], strides = [1, 1]} : vector<3x64xf32> to vector<1x64xf32>
      %67 = vector.broadcast %65 : vector<2x1xf32> to vector<2x64xf32>
      %68 = vector.broadcast %66 : vector<1x64xf32> to vector<2x64xf32>
      %69 = arith.mulf %67, %68 : vector<2x64xf32>
      %70 = arith.addf %64, %69 : vector<2x64xf32>
      %71 = vector.extract_strided_slice %58 {offsets = [0, 2], sizes = [2, 1], strides = [1, 1]} : vector<2x9xf32> to vector<2x1xf32>
      %72 = vector.extract_strided_slice %59 {offsets = [2, 0], sizes = [1, 64], strides = [1, 1]} : vector<3x64xf32> to vector<1x64xf32>
      %73 = vector.broadcast %71 : vector<2x1xf32> to vector<2x64xf32>
      %74 = vector.broadcast %72 : vector<1x64xf32> to vector<2x64xf32>
      %75 = arith.mulf %73, %74 : vector<2x64xf32>
      %76 = arith.addf %70, %75 : vector<2x64xf32>
      %77 = vector.shape_cast %76 : vector<2x64xf32> to vector<2x1x64xf32>
      %78 = vector.extract_strided_slice %58 {offsets = [0, 3], sizes = [2, 1], strides = [1, 1]} : vector<2x9xf32> to vector<2x1xf32>
      %79 = vector.extract_strided_slice %59 {offsets = [0, 0], sizes = [1, 64], strides = [1, 1]} : vector<3x64xf32> to vector<1x64xf32>
      %80 = vector.broadcast %78 : vector<2x1xf32> to vector<2x64xf32>
      %81 = vector.broadcast %79 : vector<1x64xf32> to vector<2x64xf32>
      %82 = arith.mulf %80, %81 : vector<2x64xf32>
      %83 = vector.extract_strided_slice %58 {offsets = [0, 4], sizes = [2, 1], strides = [1, 1]} : vector<2x9xf32> to vector<2x1xf32>
      %84 = vector.extract_strided_slice %59 {offsets = [1, 0], sizes = [1, 64], strides = [1, 1]} : vector<3x64xf32> to vector<1x64xf32>
      %85 = vector.broadcast %83 : vector<2x1xf32> to vector<2x64xf32>
      %86 = vector.broadcast %84 : vector<1x64xf32> to vector<2x64xf32>
      %87 = arith.mulf %85, %86 : vector<2x64xf32>
      %88 = arith.addf %82, %87 : vector<2x64xf32>
      %89 = vector.extract_strided_slice %58 {offsets = [0, 5], sizes = [2, 1], strides = [1, 1]} : vector<2x9xf32> to vector<2x1xf32>
      %90 = vector.extract_strided_slice %59 {offsets = [2, 0], sizes = [1, 64], strides = [1, 1]} : vector<3x64xf32> to vector<1x64xf32>
      %91 = vector.broadcast %89 : vector<2x1xf32> to vector<2x64xf32>
      %92 = vector.broadcast %90 : vector<1x64xf32> to vector<2x64xf32>
      %93 = arith.mulf %91, %92 : vector<2x64xf32>
      %94 = arith.addf %88, %93 : vector<2x64xf32>
      %95 = vector.shape_cast %94 : vector<2x64xf32> to vector<2x1x64xf32>
      %96 = vector.extract_strided_slice %58 {offsets = [0, 6], sizes = [2, 1], strides = [1, 1]} : vector<2x9xf32> to vector<2x1xf32>
      %97 = vector.extract_strided_slice %59 {offsets = [0, 0], sizes = [1, 64], strides = [1, 1]} : vector<3x64xf32> to vector<1x64xf32>
      %98 = vector.broadcast %96 : vector<2x1xf32> to vector<2x64xf32>
      %99 = vector.broadcast %97 : vector<1x64xf32> to vector<2x64xf32>
      %100 = arith.mulf %98, %99 : vector<2x64xf32>
      %101 = vector.extract_strided_slice %58 {offsets = [0, 7], sizes = [2, 1], strides = [1, 1]} : vector<2x9xf32> to vector<2x1xf32>
      %102 = vector.extract_strided_slice %59 {offsets = [1, 0], sizes = [1, 64], strides = [1, 1]} : vector<3x64xf32> to vector<1x64xf32>
      %103 = vector.broadcast %101 : vector<2x1xf32> to vector<2x64xf32>
      %104 = vector.broadcast %102 : vector<1x64xf32> to vector<2x64xf32>
      %105 = arith.mulf %103, %104 : vector<2x64xf32>
      %106 = arith.addf %100, %105 : vector<2x64xf32>
      %107 = vector.extract_strided_slice %58 {offsets = [0, 8], sizes = [2, 1], strides = [1, 1]} : vector<2x9xf32> to vector<2x1xf32>
      %108 = vector.extract_strided_slice %59 {offsets = [2, 0], sizes = [1, 64], strides = [1, 1]} : vector<3x64xf32> to vector<1x64xf32>
      %109 = vector.broadcast %107 : vector<2x1xf32> to vector<2x64xf32>
      %110 = vector.broadcast %108 : vector<1x64xf32> to vector<2x64xf32>
      %111 = arith.mulf %109, %110 : vector<2x64xf32>
      %112 = arith.addf %106, %111 : vector<2x64xf32>
      %113 = vector.shape_cast %112 : vector<2x64xf32> to vector<2x1x64xf32>
      %114 = tpu.concatenate %77, %95, %113 in 1 : vector<2x1x64xf32>, vector<2x1x64xf32>, vector<2x1x64xf32> -> vector<2x3x64xf32>
      %115 = arith.truncf %114 : vector<2x3x64xf32> to vector<2x3x64xbf16>
      %c0_47 = arith.constant 0 : index
      %c0_48 = arith.constant 0 : index
      %c0_49 = arith.constant 0 : index
      %116 = vector.load %arg15[%c0_47, %c0_48, %c0_49] : memref<2x3x64xbf16, #tpu.memory_space<vmem>>, vector<2x3x64xbf16>
      tpu.vector_store %arg15[%c0_47, %c0_48, %c0_49], %115 {strides = array<i32>} : memref<2x3x64xbf16, #tpu.memory_space<vmem>>, vector<2x3x64xbf16>,
    } else {
    }
    return
  }
  func.func @transform_0(%arg0: i32) -> (i32, i32, i32) {
    %c0_i32 = arith.constant 0 : i32
    %c0_i32_0 = arith.constant 0 : i32
    %c0_i32_1 = arith.constant 0 : i32
    return %c0_i32, %arg0, %c0_i32_0 : i32, i32, i32
  }
  func.func @transform_1(%arg0: i32) -> (i32, i32) {
    %c0_i32 = arith.constant 0 : i32
    %c0_i32_0 = arith.constant 0 : i32
    %c0_i32_1 = arith.constant 0 : i32
    return %c0_i32, %c0_i32_0 : i32, i32
  }
  func.func @transform_2(%arg0: i32) -> (i32, i32) {
    %c0_i32 = arith.constant 0 : i32
    %c0_i32_0 = arith.constant 0 : i32
    %c0_i32_1 = arith.constant 0 : i32
    return %c0_i32, %c0_i32_0 : i32, i32
  }
  func.func @transform_3(%arg0: i32) -> (i32, i32) {
    %c0_i32 = arith.constant 0 : i32
    %c0_i32_0 = arith.constant 0 : i32
    %c0_i32_1 = arith.constant 0 : i32
    return %c0_i32, %c0_i32_0 : i32, i32
  }
  func.func @transform_4(%arg0: i32) -> (i32, i32) {
    %c0_i32 = arith.constant 0 : i32
    %c0_i32_0 = arith.constant 0 : i32
    %c0_i32_1 = arith.constant 0 : i32
    return %c0_i32, %c0_i32_0 : i32, i32
  }
  func.func @transform_5(%arg0: i32) -> (i32, i32) {
    %c0_i32 = arith.constant 0 : i32
    %c0_i32_0 = arith.constant 0 : i32
    %c0_i32_1 = arith.constant 0 : i32
    return %c0_i32, %c0_i32_0 : i32, i32
  }
  func.func @transform_6(%arg0: i32) -> (i32, i32) {
    %c0_i32 = arith.constant 0 : i32
    %c0_i32_0 = arith.constant 0 : i32
    %c0_i32_1 = arith.constant 0 : i32
    return %c0_i32, %c0_i32_0 : i32, i32
  }
  func.func @transform_7(%arg0: i32) -> (i32, i32) {
    %c0_i32 = arith.constant 0 : i32
    %c0_i32_0 = arith.constant 0 : i32
    %c0_i32_1 = arith.constant 0 : i32
    return %c0_i32, %c0_i32_0 : i32, i32
  }
  func.func @transform_8(%arg0: i32) -> (i32, i32) {
    %c0_i32 = arith.constant 0 : i32
    %c0_i32_0 = arith.constant 0 : i32
    %c0_i32_1 = arith.constant 0 : i32
    return %c0_i32, %c0_i32_0 : i32, i32
  }
  func.func @transform_9(%arg0: i32) -> (i32, i32) {
    %c0_i32 = arith.constant 0 : i32
    %c0_i32_0 = arith.constant 0 : i32
    %c0_i32_1 = arith.constant 0 : i32
    return %c0_i32, %c0_i32_0 : i32, i32
  }
  func.func @transform_10(%arg0: i32) -> (i32, i32) {
    %c0_i32 = arith.constant 0 : i32
    %c0_i32_0 = arith.constant 0 : i32
    %c0_i32_1 = arith.constant 0 : i32
    return %c0_i32, %c0_i32_0 : i32, i32
  }
  func.func @transform_11(%arg0: i32) -> (i32, i32) {
    %c0_i32 = arith.constant 0 : i32
    %c0_i32_0 = arith.constant 0 : i32
    %c0_i32_1 = arith.constant 0 : i32
    return %c0_i32, %c0_i32_0 : i32, i32
  }
  func.func @transform_12(%arg0: i32) -> (i32, i32) {
    %c0_i32 = arith.constant 0 : i32
    %c0_i32_0 = arith.constant 0 : i32
    %c0_i32_1 = arith.constant 0 : i32
    return %c0_i32, %c0_i32_0 : i32, i32
  }
  func.func @transform_13(%arg0: i32) -> (i32, i32) {
    %c0_i32 = arith.constant 0 : i32
    %c0_i32_0 = arith.constant 0 : i32
    %c0_i32_1 = arith.constant 0 : i32
    return %c0_i32, %c0_i32_0 : i32, i32
  }
  func.func @transform_14(%arg0: i32) -> (i32, i32, i32) {
    %c0_i32 = arith.constant 0 : i32
    %c0_i32_0 = arith.constant 0 : i32
    %c0_i32_1 = arith.constant 0 : i32
    %c0_i32_2 = arith.constant 0 : i32
    return %c0_i32, %c0_i32_0, %c0_i32_1 : i32, i32, i32
  }
}

</mosaic_0001>

<llo_original>
// kernel: tpu_custom_call.1
$region0: #{tpu_custom_call.1}
  #allocation0 [shape = 'u32[]', space=smem, size = 0x4, offset = 0x4, fixed_abs, tag = 'smem constant byte address 0x4 - core index']
  #allocation1 [shape = 'u32[144,128]{1,0:T(1,128)}', space=vmem, size = 0x12000, scoped, tag = 'internal scratch']
  #allocation2 [shape = 'f32[2,1024]{1,0:T(2,128)}', space=vmem, size = 0x2000, scoped, tag = 'scratch operand']
  %s0 = inlined_call_operand.vmem [shape: bf16[2,16,4], index: 0, kind: input, shape index: {}]
  %s1 = inlined_call_operand.vmem [shape: bf16[4,64], index: 1, kind: input, shape index: {}]
  %s2 = inlined_call_operand.vmem [shape: f32[1,64], index: 2, kind: input, shape index: {}]
  %s3 = inlined_call_operand.vmem [shape: bf16[64,128], index: 3, kind: input, shape index: {}]
  %s4 = inlined_call_operand.vmem [shape: f32[1,128], index: 4, kind: input, shape index: {}]
  %s5 = inlined_call_operand.hbm [shape: bf16[128,1024], index: 5, kind: input, shape index: {}]
  %s6 = inlined_call_operand.vmem [shape: f32[1,1024], index: 6, kind: input, shape index: {}]
  %s7 = inlined_call_operand.hbm [shape: bf16[1024,512], index: 7, kind: input, shape index: {}]
  %s8 = inlined_call_operand.vmem [shape: f32[1,512], index: 8, kind: input, shape index: {}]
  %s9 = inlined_call_operand.hbm [shape: bf16[512,256], index: 9, kind: input, shape index: {}]
  %s10 = inlined_call_operand.vmem [shape: f32[1,256], index: 10, kind: input, shape index: {}]
  %s11 = inlined_call_operand.vmem [shape: bf16[256,9], index: 11, kind: input, shape index: {}]
  %s12 = inlined_call_operand.vmem [shape: f32[1,9], index: 12, kind: input, shape index: {}]
  %s13 = inlined_call_operand.vmem [shape: f32[3,64], index: 13, kind: input, shape index: {}]
  %s14 = inlined_call_operand.vmem [shape: bf16[2,3,64], index: 14, kind: output, shape index: {}]
  %s15 = sld [smem:[#allocation0]]
  $region150: #{tpu_custom_call.1} parent=0
    _
  %s17 = ssub.s32 1, %s15
  %s18 = scalar_select 0, %s17, %s15
  $region1: #{tpu_custom_call.1} parent=0
    #allocation3 [shape = 'u8[8192]{0}', space=vmem, size = 0x2000, scoped, tag = 'input window, operand 0']
    #allocation4 [shape = 'u8[262144]{0}', space=vmem, size = 0x40000, scoped, tag = 'input window, operand 5, single buffered']
    #allocation5 [shape = 's32[2]{0}', space=sflag, size = 0x8, scoped, tag = 'scoped memory for tpu_custom_call.1']
    #allocation6 [shape = 'u8[1048576]{0}', space=vmem, size = 0x100000, scoped, tag = 'input window, operand 7, single buffered']
    #allocation7 [shape = 's32[1]{0}', space=sflag, size = 0x4, scoped, tag = 'scoped memory for tpu_custom_call.1']
    #allocation8 [shape = 'u8[262144]{0}', space=vmem, size = 0x40000, scoped, tag = 'input window, operand 9, single buffered']
    %19 = vsyncpa [#allocation5], 0
    %20 = vsyncpa [#allocation7], 0
    loop: start=0, step=1, limit=4
    $region2: #{tpu_custom_call.1} parent=1 // loop_pre_header
      _
    $region3: #{tpu_custom_call.1} parent=1 // loop_header
      %s22 = sphi 0, %s26
      %p23 = scmp.ge.s32.totalorder %s22, 4
      %s32 = sphi 0, %s34
      %s35 = sphi 0, %s32
      %s36 = sphi 0, %s35
      %s52 = sphi 0, %s36
      %s56 = sphi 0, %s56
      %s58 = sphi 0, %s56
      %s59 = sphi 0, %s58
      %s73 = sphi 0, %s59
      %s77 = sphi 0, %s77
      %s79 = sphi 0, %s77
      %s80 = sphi 0, %s79
      %s94 = sphi 0, %s80
      %s98 = sphi 0, %s98
      %s100 = sphi 0, %s98
      %s101 = sphi 0, %s100
      %s115 = sphi 0, %s101
      %s119 = sphi 0, %s119
      %s121 = sphi 0, %s119
      %s122 = sphi 0, %s121
      %s136 = sphi 0, %s122
      %s140 = sphi 0, %s140
      %s142 = sphi 0, %s140
      %s143 = sphi 0, %s142
      %s157 = sphi 0, %s143
      %s161 = sphi 0, %s161
      %s163 = sphi 0, %s161
      %s164 = sphi 0, %s163
      %s178 = sphi 0, %s164
      %s182 = sphi 0, %s182
      %s184 = sphi 0, %s182
      %s185 = sphi 0, %s184
      %s199 = sphi 0, %s185
      %s203 = sphi 0, %s203
      %s205 = sphi 0, %s203
      %s206 = sphi 0, %s205
      %s220 = sphi 0, %s206
      %s224 = sphi 0, %s224
      %s226 = sphi 0, %s224
      %s227 = sphi 0, %s226
      %s241 = sphi 0, %s227
      %s245 = sphi 0, %s245
      %s247 = sphi 0, %s245
      %s248 = sphi 0, %s247
      %s262 = sphi 0, %s248
      %s266 = sphi 0, %s266
      %s268 = sphi 0, %s266
      %s269 = sphi 0, %s268
      %s283 = sphi 0, %s269
      %s287 = sphi 0, %s287
      %s289 = sphi 0, %s287
      %s290 = sphi 0, %s289
      %s304 = sphi 0, %s290
      %s308 = sphi 0, %s308
      %s310 = sphi 0, %s308
      %s311 = sphi 0, %s310
      %s325 = sphi 0, %s311
      %s329 = sphi 0, %s329
      %s331 = sphi 0, %s329
      %s332 = sphi 0, %s331
      %s346 = sphi 0, %s332
    $region4: #{tpu_custom_call.1} parent=1 // loop_header_branch
      %25 = sbr.rel (%p23) target = $region8
    $region5: #{tpu_custom_call.1} parent=1 // loop_body
      %s27 = ssub.s32 %s22, 1
      %s28 = ssub.s32 %s22, 2
      %s29 = sadd.s32 %s22, 1
      %s30 = ssub.s32 %s22, %s29
      %p31 = scmp.eq.s32.totalorder %s30, 0
      %s33 = sadd.s32 %s32, 1
      %s34 = scalar_select %p31, %s32, %s33
      %p37 = pneg %p31
      %p38 = scmp.eq.s32.totalorder %s22, 1
      %p39 = por %p37, %p38
      %p40 = scmp.ne.s32.totalorder %s32, %s35
      %p41 = scmp.eq.s32.totalorder %s22, 0
      %p42 = por %p40, %p41
      %p43 = scmp.ne.s32.totalorder %s32, %s35
      %p44 = scmp.eq.s32.totalorder %s27, 1
      %p45 = por %p43, %p44
      %p46 = scmp.ne.s32.totalorder %s35, %s36
      %p47 = scmp.eq.s32.totalorder %s27, 0
      %p48 = por %p46, %p47
      %p49 = scmp.ne.s32.totalorder %s35, %s36
      %p50 = scmp.eq.s32.totalorder %s28, 1
      %p51 = por %p49, %p50
      %p53 = scmp.ne.s32.totalorder %s36, %s52
      %p54 = scmp.eq.s32.totalorder %s28, 0
      %p55 = por %p53, %p54
      %s57 = sadd.s32 %s56, 1
      %p60 = scmp.eq.s32.totalorder %s22, 1
      %p61 = scmp.ne.s32.totalorder %s56, %s58
      %p62 = scmp.eq.s32.totalorder %s22, 0
      %p63 = por %p61, %p62
      %p64 = scmp.ne.s32.totalorder %s56, %s58
      %p65 = scmp.eq.s32.totalorder %s27, 1
      %p66 = por %p64, %p65
      %p67 = scmp.ne.s32.totalorder %s58, %s59
      %p68 = scmp.eq.s32.totalorder %s27, 0
      %p69 = por %p67, %p68
      %p70 = scmp.ne.s32.totalorder %s58, %s59
      %p71 = scmp.eq.s32.totalorder %s28, 1
      %p72 = por %p70, %p71
      %p74 = scmp.ne.s32.totalorder %s59, %s73
      %p75 = scmp.eq.s32.totalorder %s28, 0
      %p76 = por %p74, %p75
      %s78 = sadd.s32 %s77, 1
      %p81 = scmp.eq.s32.totalorder %s22, 1
      %p82 = scmp.ne.s32.totalorder %s77, %s79
      %p83 = scmp.eq.s32.totalorder %s22, 0
      %p84 = por %p82, %p83
      %p85 = scmp.ne.s32.totalorder %s77, %s79
      %p86 = scmp.eq.s32.totalorder %s27, 1
      %p87 = por %p85, %p86
      %p88 = scmp.ne.s32.totalorder %s79, %s80
      %p89 = scmp.eq.s32.totalorder %s27, 0
      %p90 = por %p88, %p89
      %p91 = scmp.ne.s32.totalorder %s79, %s80
      %p92 = scmp.eq.s32.totalorder %s28, 1
      %p93 = por %p91, %p92
      %p95 = scmp.ne.s32.totalorder %s80, %s94
      %p96 = scmp.eq.s32.totalorder %s28, 0
      %p97 = por %p95, %p96
      %s99 = sadd.s32 %s98, 1
      %p102 = scmp.eq.s32.totalorder %s22, 1
      %p103 = scmp.ne.s32.totalorder %s98, %s100
      %p104 = scmp.eq.s32.totalorder %s22, 0
      %p105 = por %p103, %p104
      %p106 = scmp.ne.s32.totalorder %s98, %s100
      %p107 = scmp.eq.s32.totalorder %s27, 1
      %p108 = por %p106, %p107
      %p109 = scmp.ne.s32.totalorder %s100, %s101
      %p110 = scmp.eq.s32.totalorder %s27, 0
      %p111 = por %p109, %p110
      %p112 = scmp.ne.s32.totalorder %s100, %s101
      %p113 = scmp.eq.s32.totalorder %s28, 1
      %p114 = por %p112, %p113
      %p116 = scmp.ne.s32.totalorder %s101, %s115
      %p117 = scmp.eq.s32.totalorder %s28, 0
      %p118 = por %p116, %p117
      %s120 = sadd.s32 %s119, 1
      %p123 = scmp.eq.s32.totalorder %s22, 1
      %p124 = scmp.ne.s32.totalorder %s119, %s121
      %p125 = scmp.eq.s32.totalorder %s22, 0
      %p126 = por %p124, %p125
      %p127 = scmp.ne.s32.totalorder %s119, %s121
      %p128 = scmp.eq.s32.totalorder %s27, 1
      %p129 = por %p127, %p128
      %p130 = scmp.ne.s32.totalorder %s121, %s122
      %p131 = scmp.eq.s32.totalorder %s27, 0
      %p132 = por %p130, %p131
      %p133 = scmp.ne.s32.totalorder %s121, %s122
      %p134 = scmp.eq.s32.totalorder %s28, 1
      %p135 = por %p133, %p134
      %p137 = scmp.ne.s32.totalorder %s122, %s136
      %p138 = scmp.eq.s32.totalorder %s28, 0
      %p139 = por %p137, %p138
      %s141 = sadd.s32 %s140, 1
      %p144 = scmp.eq.s32.totalorder %s22, 1
      %p145 = scmp.ne.s32.totalorder %s140, %s142
      %p146 = scmp.eq.s32.totalorder %s22, 0
      %p147 = por %p145, %p146
      %p148 = scmp.ne.s32.totalorder %s140, %s142
      %p149 = scmp.eq.s32.totalorder %s27, 1
      %p150 = por %p148, %p149
      %p151 = scmp.ne.s32.totalorder %s142, %s143
      %p152 = scmp.eq.s32.totalorder %s27, 0
      %p153 = por %p151, %p152
      %p154 = scmp.ne.s32.totalorder %s142, %s143
      %p155 = scmp.eq.s32.totalorder %s28, 1
      %p156 = por %p154, %p155
      %p158 = scmp.ne.s32.totalorder %s143, %s157
      %p159 = scmp.eq.s32.totalorder %s28, 0
      %p160 = por %p158, %p159
      %s162 = sadd.s32 %s161, 1
      %p165 = scmp.eq.s32.totalorder %s22, 1
      %p166 = scmp.ne.s32.totalorder %s161, %s163
      %p167 = scmp.eq.s32.totalorder %s22, 0
      %p168 = por %p166, %p167
      %p169 = scmp.ne.s32.totalorder %s161, %s163
      %p170 = scmp.eq.s32.totalorder %s27, 1
      %p171 = por %p169, %p170
      %p172 = scmp.ne.s32.totalorder %s163, %s164
      %p173 = scmp.eq.s32.totalorder %s27, 0
      %p174 = por %p172, %p173
      %p175 = scmp.ne.s32.totalorder %s163, %s164
      %p176 = scmp.eq.s32.totalorder %s28, 1
      %p177 = por %p175, %p176
      %p179 = scmp.ne.s32.totalorder %s164, %s178
      %p180 = scmp.eq.s32.totalorder %s28, 0
      %p181 = por %p179, %p180
      %s183 = sadd.s32 %s182, 1
      %p186 = scmp.eq.s32.totalorder %s22, 1
      %p187 = scmp.ne.s32.totalorder %s182, %s184
      %p188 = scmp.eq.s32.totalorder %s22, 0
      %p189 = por %p187, %p188
      %p190 = scmp.ne.s32.totalorder %s182, %s184
      %p191 = scmp.eq.s32.totalorder %s27, 1
      %p192 = por %p190, %p191
      %p193 = scmp.ne.s32.totalorder %s184, %s185
      %p194 = scmp.eq.s32.totalorder %s27, 0
      %p195 = por %p193, %p194
      %p196 = scmp.ne.s32.totalorder %s184, %s185
      %p197 = scmp.eq.s32.totalorder %s28, 1
      %p198 = por %p196, %p197
      %p200 = scmp.ne.s32.totalorder %s185, %s199
      %p201 = scmp.eq.s32.totalorder %s28, 0
      %p202 = por %p200, %p201
      %s204 = sadd.s32 %s203, 1
      %p207 = scmp.eq.s32.totalorder %s22, 1
      %p208 = scmp.ne.s32.totalorder %s203, %s205
      %p209 = scmp.eq.s32.totalorder %s22, 0
      %p210 = por %p208, %p209
      %p211 = scmp.ne.s32.totalorder %s203, %s205
      %p212 = scmp.eq.s32.totalorder %s27, 1
      %p213 = por %p211, %p212
      %p214 = scmp.ne.s32.totalorder %s205, %s206
      %p215 = scmp.eq.s32.totalorder %s27, 0
      %p216 = por %p214, %p215
      %p217 = scmp.ne.s32.totalorder %s205, %s206
      %p218 = scmp.eq.s32.totalorder %s28, 1
      %p219 = por %p217, %p218
      %p221 = scmp.ne.s32.totalorder %s206, %s220
      %p222 = scmp.eq.s32.totalorder %s28, 0
      %p223 = por %p221, %p222
      %s225 = sadd.s32 %s224, 1
      %p228 = scmp.eq.s32.totalorder %s22, 1
      %p229 = scmp.ne.s32.totalorder %s224, %s226
      %p230 = scmp.eq.s32.totalorder %s22, 0
      %p231 = por %p229, %p230
      %p232 = scmp.ne.s32.totalorder %s224, %s226
      %p233 = scmp.eq.s32.totalorder %s27, 1
      %p234 = por %p232, %p233
      %p235 = scmp.ne.s32.totalorder %s226, %s227
      %p236 = scmp.eq.s32.totalorder %s27, 0
      %p237 = por %p235, %p236
      %p238 = scmp.ne.s32.totalorder %s226, %s227
      %p239 = scmp.eq.s32.totalorder %s28, 1
      %p240 = por %p238, %p239
      %p242 = scmp.ne.s32.totalorder %s227, %s241
      %p243 = scmp.eq.s32.totalorder %s28, 0
      %p244 = por %p242, %p243
      %s246 = sadd.s32 %s245, 1
      %p249 = scmp.eq.s32.totalorder %s22, 1
      %p250 = scmp.ne.s32.totalorder %s245, %s247
      %p251 = scmp.eq.s32.totalorder %s22, 0
      %p252 = por %p250, %p251
      %p253 = scmp.ne.s32.totalorder %s245, %s247
      %p254 = scmp.eq.s32.totalorder %s27, 1
      %p255 = por %p253, %p254
      %p256 = scmp.ne.s32.totalorder %s247, %s248
      %p257 = scmp.eq.s32.totalorder %s27, 0
      %p258 = por %p256, %p257
      %p259 = scmp.ne.s32.totalorder %s247, %s248
      %p260 = scmp.eq.s32.totalorder %s28, 1
      %p261 = por %p259, %p260
      %p263 = scmp.ne.s32.totalorder %s248, %s262
      %p264 = scmp.eq.s32.totalorder %s28, 0
      %p265 = por %p263, %p264
      %s267 = sadd.s32 %s266, 1
      %p270 = scmp.eq.s32.totalorder %s22, 1
      %p271 = scmp.ne.s32.totalorder %s266, %s268
      %p272 = scmp.eq.s32.totalorder %s22, 0
      %p273 = por %p271, %p272
      %p274 = scmp.ne.s32.totalorder %s266, %s268
      %p275 = scmp.eq.s32.totalorder %s27, 1
      %p276 = por %p274, %p275
      %p277 = scmp.ne.s32.totalorder %s268, %s269
      %p278 = scmp.eq.s32.totalorder %s27, 0
      %p279 = por %p277, %p278
      %p280 = scmp.ne.s32.totalorder %s268, %s269
      %p281 = scmp.eq.s32.totalorder %s28, 1
      %p282 = por %p280, %p281
      %p284 = scmp.ne.s32.totalorder %s269, %s283
      %p285 = scmp.eq.s32.totalorder %s28, 0
      %p286 = por %p284, %p285
      %s288 = sadd.s32 %s287, 1
      %p291 = scmp.eq.s32.totalorder %s22, 1
      %p292 = scmp.ne.s32.totalorder %s287, %s289
      %p293 = scmp.eq.s32.totalorder %s22, 0
      %p294 = por %p292, %p293
      %p295 = scmp.ne.s32.totalorder %s287, %s289
      %p296 = scmp.eq.s32.totalorder %s27, 1
      %p297 = por %p295, %p296
      %p298 = scmp.ne.s32.totalorder %s289, %s290
      %p299 = scmp.eq.s32.totalorder %s27, 0
      %p300 = por %p298, %p299
      %p301 = scmp.ne.s32.totalorder %s289, %s290
      %p302 = scmp.eq.s32.totalorder %s28, 1
      %p303 = por %p301, %p302
      %p305 = scmp.ne.s32.totalorder %s290, %s304
      %p306 = scmp.eq.s32.totalorder %s28, 0
      %p307 = por %p305, %p306
      %s309 = sadd.s32 %s308, 1
      %p312 = scmp.eq.s32.totalorder %s22, 1
      %p313 = scmp.ne.s32.totalorder %s308, %s310
      %p314 = scmp.eq.s32.totalorder %s22, 0
      %p315 = por %p313, %p314
      %p316 = scmp.ne.s32.totalorder %s308, %s310
      %p317 = scmp.eq.s32.totalorder %s27, 1
      %p318 = por %p316, %p317
      %p319 = scmp.ne.s32.totalorder %s310, %s311
      %p320 = scmp.eq.s32.totalorder %s27, 0
      %p321 = por %p319, %p320
      %p322 = scmp.ne.s32.totalorder %s310, %s311
      %p323 = scmp.eq.s32.totalorder %s28, 1
      %p324 = por %p322, %p323
      %p326 = scmp.ne.s32.totalorder %s311, %s325
      %p327 = scmp.eq.s32.totalorder %s28, 0
      %p328 = por %p326, %p327
      %s330 = sadd.s32 %s329, 1
      %p333 = scmp.eq.s32.totalorder %s22, 1
      %p334 = scmp.ne.s32.totalorder %s329, %s331
      %p335 = scmp.eq.s32.totalorder %s22, 0
      %p336 = por %p334, %p335
      %p337 = scmp.ne.s32.totalorder %s329, %s331
      %p338 = scmp.eq.s32.totalorder %s27, 1
      %p339 = por %p337, %p338
      %p340 = scmp.ne.s32.totalorder %s331, %s332
      %p341 = scmp.eq.s32.totalorder %s27, 0
      %p342 = por %p340, %p341
      %p343 = scmp.ne.s32.totalorder %s331, %s332
      %p344 = scmp.eq.s32.totalorder %s28, 1
      %p345 = por %p343, %p344
      %p347 = scmp.ne.s32.totalorder %s332, %s346
      %p348 = scmp.eq.s32.totalorder %s28, 0
      %p349 = por %p347, %p348
      %p350 = scmp.le.s32.totalorder 1, %s22
      %p351 = scmp.lt.s32.totalorder %s22, 3
      %p352 = pnand %p350, %p351
      %p353 = pneg %p352
      // Predicated region
      $region9: #{tpu_custom_call.1} parent=5 // pred_check
        _
      $region10: #{tpu_custom_call.1} parent=5 // pred_check_branch
        %355 = sbr.rel (%p352) target = $region12
      $region11: #{tpu_custom_call.1} parent=5 // pred_region
        %s356 = ssub.s32 %s22, 1
        // Predicated region
        $region13: #{tpu_custom_call.1} parent=11 // pred_check
          %p357 = pneg %p69
        $region14: #{tpu_custom_call.1} parent=11 // pred_check_branch
          %359 = sbr.rel (%p357) target = $region16
        $region15: #{tpu_custom_call.1} parent=11 // pred_region
          _
        $region16: #{tpu_custom_call.1} parent=11 // pred_fallthru
          _
        // Predicated region
        $region17: #{tpu_custom_call.1} parent=11 // pred_check
          %p360 = pneg %p90
        $region18: #{tpu_custom_call.1} parent=11 // pred_check_branch
          %362 = sbr.rel (%p360) target = $region20
        $region19: #{tpu_custom_call.1} parent=11 // pred_region
          _
        $region20: #{tpu_custom_call.1} parent=11 // pred_fallthru
          _
        // Predicated region
        $region21: #{tpu_custom_call.1} parent=11 // pred_check
          %p363 = pneg %p111
        $region22: #{tpu_custom_call.1} parent=11 // pred_check_branch
          %365 = sbr.rel (%p363) target = $region24
        $region23: #{tpu_custom_call.1} parent=11 // pred_region
          _
        $region24: #{tpu_custom_call.1} parent=11 // pred_fallthru
          _
        // Predicated region
        $region25: #{tpu_custom_call.1} parent=11 // pred_check
          %p366 = pneg %p132
        $region26: #{tpu_custom_call.1} parent=11 // pred_check_branch
          %368 = sbr.rel (%p366) target = $region28
        $region27: #{tpu_custom_call.1} parent=11 // pred_region
          _
        $region28: #{tpu_custom_call.1} parent=11 // pred_fallthru
          _
        // Predicated region
        $region29: #{tpu_custom_call.1} parent=11 // pred_check
          %p369 = pneg %p153
        $region30: #{tpu_custom_call.1} parent=11 // pred_check_branch
          %371 = sbr.rel (%p369) target = $region32
        $region31: #{tpu_custom_call.1} parent=11 // pred_region
          %s373 = ssub.s32 8192, 8192
          %374 = vsyncadd [#allocation5], %s373
          %s375 = sshll.u32 [#allocation4], 4
          %s376 = int_to_ptr.vmem [resolvable:$true] %s375
          %381 = dma.hbm_to_vmem [thread:$0]  %s5, 8192, %s376, [#allocation5], 512, 512, 32
        $region32: #{tpu_custom_call.1} parent=11 // pred_fallthru
          _
        // Predicated region
        $region33: #{tpu_custom_call.1} parent=11 // pred_check
          %p382 = pneg %p174
        $region34: #{tpu_custom_call.1} parent=11 // pred_check_branch
          %384 = sbr.rel (%p382) target = $region36
        $region35: #{tpu_custom_call.1} parent=11 // pred_region
          _
        $region36: #{tpu_custom_call.1} parent=11 // pred_fallthru
          _
        // Predicated region
        $region37: #{tpu_custom_call.1} parent=11 // pred_check
          %p385 = pneg %p195
        $region38: #{tpu_custom_call.1} parent=11 // pred_check_branch
          %387 = sbr.rel (%p385) target = $region40
        $region39: #{tpu_custom_call.1} parent=11 // pred_region
          %s389 = ssub.s32 32768, 32768
          %390 = vsyncadd [#allocation7], %s389
          %s391 = sshll.u32 [#allocation6], 4
          %s392 = int_to_ptr.vmem [resolvable:$true] %s391
          %397 = dma.hbm_to_vmem [thread:$0]  %s7, 32768, %s392, [#allocation7], 256, 256, 16
        $region40: #{tpu_custom_call.1} parent=11 // pred_fallthru
          _
        // Predicated region
        $region41: #{tpu_custom_call.1} parent=11 // pred_check
          %p398 = pneg %p216
        $region42: #{tpu_custom_call.1} parent=11 // pred_check_branch
          %400 = sbr.rel (%p398) target = $region44
        $region43: #{tpu_custom_call.1} parent=11 // pred_region
          _
        $region44: #{tpu_custom_call.1} parent=11 // pred_fallthru
          _
        // Predicated region
        $region45: #{tpu_custom_call.1} parent=11 // pred_check
          %p401 = pneg %p237
        $region46: #{tpu_custom_call.1} parent=11 // pred_check_branch
          %403 = sbr.rel (%p401) target = $region48
        $region47: #{tpu_custom_call.1} parent=11 // pred_region
          %s405 = ssub.s32 8192, 8192
          %406 = vsyncadd [#allocation7], %s405
          %s407 = sshll.u32 [#allocation8], 4
          %s408 = int_to_ptr.vmem [resolvable:$true] %s407
          %413 = dma.hbm_to_vmem [thread:$0]  %s9, 8192, %s408, [#allocation7], 128, 128, 8
        $region48: #{tpu_custom_call.1} parent=11 // pred_fallthru
          _
        // Predicated region
        $region49: #{tpu_custom_call.1} parent=11 // pred_check
          %p414 = pneg %p258
        $region50: #{tpu_custom_call.1} parent=11 // pred_check_branch
          %416 = sbr.rel (%p414) target = $region52
        $region51: #{tpu_custom_call.1} parent=11 // pred_region
          _
        $region52: #{tpu_custom_call.1} parent=11 // pred_fallthru
          _
        // Predicated region
        $region53: #{tpu_custom_call.1} parent=11 // pred_check
          %p417 = pneg %p279
        $region54: #{tpu_custom_call.1} parent=11 // pred_check_branch
          %419 = sbr.rel (%p417) target = $region56
        $region55: #{tpu_custom_call.1} parent=11 // pred_region
          _
        $region56: #{tpu_custom_call.1} parent=11 // pred_fallthru
          _
        // Predicated region
        $region57: #{tpu_custom_call.1} parent=11 // pred_check
          %p420 = pneg %p300
        $region58: #{tpu_custom_call.1} parent=11 // pred_check_branch
          %422 = sbr.rel (%p420) target = $region60
        $region59: #{tpu_custom_call.1} parent=11 // pred_region
          _
        $region60: #{tpu_custom_call.1} parent=11 // pred_fallthru
          _
        // Predicated region
        $region61: #{tpu_custom_call.1} parent=11 // pred_check
          %p423 = pneg %p321
        $region62: #{tpu_custom_call.1} parent=11 // pred_check_branch
          %425 = sbr.rel (%p423) target = $region64
        $region63: #{tpu_custom_call.1} parent=11 // pred_region
          _
        $region64: #{tpu_custom_call.1} parent=11 // pred_fallthru
          _
      $region12: #{tpu_custom_call.1} parent=5 // pred_fallthru
        _
      %p426 = scmp.lt.s32.totalorder %s22, 2
      // Predicated region
      $region65: #{tpu_custom_call.1} parent=5 // pred_check
        %p427 = pneg %p426
      $region66: #{tpu_custom_call.1} parent=5 // pred_check_branch
        %429 = sbr.rel (%p427) target = $region68
      $region67: #{tpu_custom_call.1} parent=5 // pred_region
        // Predicated region
        $region69: #{tpu_custom_call.1} parent=67 // pred_check
          %p430 = pneg %p42
        $region70: #{tpu_custom_call.1} parent=67 // pred_check_branch
          %432 = sbr.rel (%p430) target = $region72
        $region71: #{tpu_custom_call.1} parent=67 // pred_region
          %s433 = sand.u32 %s32, 1
          %s434 = sand.u32 %s32, 1
          %s435 = smul.addr %s434, 8
          %s436 = scalar_lea.vmem [#allocation3], %s435
          %s437 = smul.addr %s22, 4
          %s438 = scalar_lea.vmem %s0, %s437
          // Predicated region
          $region73: #{tpu_custom_call.1} parent=71 // pred_check
            _
          $region74: #{tpu_custom_call.1} parent=71 // pred_check_branch
            %440 = sbr.rel (0) target = $region76
          $region75: #{tpu_custom_call.1} parent=71 // pred_region
            // Predicated region
            $region77: #{tpu_custom_call.1} parent=75 // pred_check
              _
            $region78: #{tpu_custom_call.1} parent=75 // pred_check_branch
              %442 = sbr.rel target = $region80
            $region79: #{tpu_custom_call.1} parent=75 // pred_region
              // Predicated region
              $region92: #{tpu_custom_call.1} parent=79 // pred_check
                _
              $region93: #{tpu_custom_call.1} parent=79 // pred_check_branch
                %460 = sbr.rel (0) target = $region95
              $region94: #{tpu_custom_call.1} parent=79 // pred_region
                loop: start=0, step=1, limit=1
                $region96: #{tpu_custom_call.1} parent=94 // loop_pre_header
                  _
                $region97: #{tpu_custom_call.1} parent=94 // loop_header
                  %s462 = sphi 0, %s466
                  %p463 = scmp.ge.s32.totalorder %s462, 1
                  %s467 = sphi %s438, %s438
                  %s468 = sphi %s436, %s436
                $region98: #{tpu_custom_call.1} parent=94 // loop_header_branch
                  %465 = sbr.rel (%p463) target = $region102
                $region99: #{tpu_custom_call.1} parent=94 // loop_body
                  _
                $region100: #{tpu_custom_call.1} parent=94 // loop_footer
                  %s466 = sadd.s32 1, %s462
                $region101: #{tpu_custom_call.1} parent=94 // loop_footer_branch
                  %461 = sbr.rel target = $region97
                $region102: #{tpu_custom_call.1} parent=94 // loop_exit
                  _
                %s470 = ssub.s32 16, 1
                loop: start=0, step=1, limit=1
                $region103: #{tpu_custom_call.1} parent=94 // loop_pre_header
                  _
                $region104: #{tpu_custom_call.1} parent=94 // loop_header
                  %s472 = sphi 0, %s476
                  %p473 = scmp.ge.s32.totalorder %s472, 1
                  %s477 = sphi %s438, %s438
                  %s478 = sphi %s436, %s436
                $region105: #{tpu_custom_call.1} parent=94 // loop_header_branch
                  %475 = sbr.rel (%p473) target = $region109
                $region106: #{tpu_custom_call.1} parent=94 // loop_body
                  %v479 = vld [vmem:[%s477] sm:%s470]
                  %480 = vst [vmem:[%s478] sm:%s470] %v479
                  %v481 = vld [vmem:[%s477 + $0x8] sm:%s470]
                  %482 = vst [vmem:[%s478 + $0x4] sm:%s470] %v481
                $region107: #{tpu_custom_call.1} parent=94 // loop_footer
                  %s476 = sadd.s32 1, %s472
                $region108: #{tpu_custom_call.1} parent=94 // loop_footer_branch
                  %471 = sbr.rel target = $region104
                $region109: #{tpu_custom_call.1} parent=94 // loop_exit
                  _
              $region95: #{tpu_custom_call.1} parent=79 // pred_fallthru
                _
            $region80: #{tpu_custom_call.1} parent=75 // pred_fallthru
              _
            // Predicated region
            $region81: #{tpu_custom_call.1} parent=75 // pred_check
              _
            $region82: #{tpu_custom_call.1} parent=75 // pred_check_branch
              %444 = sbr.rel (0) target = $region84
            $region83: #{tpu_custom_call.1} parent=75 // pred_region
              %s446 = ssub.s32 16, 1
              loop: start=0, step=1, limit=1
              $region85: #{tpu_custom_call.1} parent=83 // loop_pre_header
                _
              $region86: #{tpu_custom_call.1} parent=83 // loop_header
                %s448 = sphi 0, %s452
                %p449 = scmp.ge.s32.totalorder %s448, 1
                %s453 = sphi %s438, %s438
                %s454 = sphi %s436, %s436
              $region87: #{tpu_custom_call.1} parent=83 // loop_header_branch
                %451 = sbr.rel (%p449) target = $region91
              $region88: #{tpu_custom_call.1} parent=83 // loop_body
                %v455 = vld [vmem:[%s453] sm:%s446]
                %456 = vst [vmem:[%s454] sm:%s446] %v455
                %v457 = vld [vmem:[%s453 + $0x8] sm:%s446]
                %458 = vst [vmem:[%s454 + $0x4] sm:%s446] %v457
              $region89: #{tpu_custom_call.1} parent=83 // loop_footer
                %s452 = sadd.s32 1, %s448
              $region90: #{tpu_custom_call.1} parent=83 // loop_footer_branch
                %447 = sbr.rel target = $region86
              $region91: #{tpu_custom_call.1} parent=83 // loop_exit
                _
            $region84: #{tpu_custom_call.1} parent=75 // pred_fallthru
              _
          $region76: #{tpu_custom_call.1} parent=71 // pred_fallthru
            _
          %483 = vnop
        $region72: #{tpu_custom_call.1} parent=67 // pred_fallthru
          _
      $region68: #{tpu_custom_call.1} parent=5 // pred_fallthru
        _
      %p484 = scmp.le.s32.totalorder 1, %s22
      %p485 = scmp.lt.s32.totalorder %s22, 3
      %p486 = pnand %p484, %p485
      %p487 = pneg %p486
      // Predicated region
      $region110: #{tpu_custom_call.1} parent=5 // pred_check
        _
      $region111: #{tpu_custom_call.1} parent=5 // pred_check_branch
        %489 = sbr.rel (%p486) target = $region113
      $region112: #{tpu_custom_call.1} parent=5 // pred_region
        %s490 = ssub.s32 %s22, 1
        %s491 = sand.u32 %s35, 1
        %s492 = sand.u32 %s35, 1
        %s493 = smul.addr %s492, 8
        %s494 = scalar_lea.vmem [#allocation3], %s493
        // Predicated region
        $region114: #{tpu_custom_call.1} parent=112 // pred_check
          %p495 = pneg %p48
        $region115: #{tpu_custom_call.1} parent=112 // pred_check_branch
          %497 = sbr.rel (%p495) target = $region117
        $region116: #{tpu_custom_call.1} parent=112 // pred_region
          _
        $region117: #{tpu_custom_call.1} parent=112 // pred_fallthru
          _
        // Predicated region
        $region118: #{tpu_custom_call.1} parent=112 // pred_check
          %p498 = pneg %p153
        $region119: #{tpu_custom_call.1} parent=112 // pred_check_branch
          %500 = sbr.rel (%p498) target = $region121
        $region120: #{tpu_custom_call.1} parent=112 // pred_region
          %501 = dma.done [#allocation5], 8192
        $region121: #{tpu_custom_call.1} parent=112 // pred_fallthru
          _
        // Predicated region
        $region122: #{tpu_custom_call.1} parent=112 // pred_check
          %p502 = pneg %p195
        $region123: #{tpu_custom_call.1} parent=112 // pred_check_branch
          %504 = sbr.rel (%p502) target = $region125
        $region124: #{tpu_custom_call.1} parent=112 // pred_region
          %505 = dma.done [#allocation7], 32768
        $region125: #{tpu_custom_call.1} parent=112 // pred_fallthru
          _
        // Predicated region
        $region126: #{tpu_custom_call.1} parent=112 // pred_check
          %p506 = pneg %p237
        $region127: #{tpu_custom_call.1} parent=112 // pred_check_branch
          %508 = sbr.rel (%p506) target = $region129
        $region128: #{tpu_custom_call.1} parent=112 // pred_region
          %509 = dma.done [#allocation7], 8192
        $region129: #{tpu_custom_call.1} parent=112 // pred_fallthru
          _
        %s510 = sand.u32 %s35, 1
        %s511 = sand.u32 %s35, 1
        %s512 = smul.addr %s511, 8
        %s513 = scalar_lea.vmem [#allocation3], %s512
        %p514 = pneg %p48
        %p515 = pneg %p45
        %p516 = pneg %p69
        %p517 = pneg %p66
        %p518 = pneg %p90
        %p519 = pneg %p87
        %p520 = pneg %p111
        %p521 = pneg %p108
        %p522 = pneg %p132
        %p523 = pneg %p129
        %p524 = pneg %p153
        %p525 = pneg %p150
        %p526 = pneg %p174
        %p527 = pneg %p171
        %p528 = pneg %p195
        %p529 = pneg %p192
        %p530 = pneg %p216
        %p531 = pneg %p213
        %p532 = pneg %p237
        %p533 = pneg %p234
        %p534 = pneg %p258
        %p535 = pneg %p255
        %p536 = pneg %p279
        %p537 = pneg %p276
        %p538 = pneg %p300
        %p539 = pneg %p297
        %p540 = pneg %p321
        %p541 = pneg %p318
        %p542 = pneg %p342
        %p543 = pneg %p339
        %p545 = scmp.eq.s32.totalorder %s27, 0
        // Predicated region
        $region130: #{tpu_custom_call.1} parent=112 // pred_check
          %p546 = pneg %p545
        $region131: #{tpu_custom_call.1} parent=112 // pred_check_branch
          %548 = sbr.rel (%p546) target = $region133
        $region132: #{tpu_custom_call.1} parent=112 // pred_region
          %549 = vst [vmem:[#allocation2] sm:$0xff] -inf
          %550 = vst [vmem:[#allocation2 + $0x8] sm:$0xff] -inf
        $region133: #{tpu_custom_call.1} parent=112 // pred_fallthru
          _
        %v551 = vld [vmem:[%s494] sm:$0xf]
        %v552 = vld [vmem:[%s494 + $0x4] sm:$0xf]
        %v553 = vld [vmem:[%s1] sm:$0x3]
        %v554 = vld [vmem:[%s2] sm:$0x1]
        %v556 = vlaneseq
        %v557 = vshrl.u32 %v556, 7
        %v558 = vsub.s32 0, %v557
        %v559 = vrot.slane %v554, %v558
        %v563 = vunpack.c.l.b16 %v551
        %v564 = vunpack.c.l.b16 %v552
        %v565 = vpack.c.b16 %v564, %v563
        %vm566 = vcmask 31744
        %v568 = vsel %vm566, %v565, 0
        %vm570 = vcmask 1041408
        %v572 = vsel %vm570, %v553, 0
        %574 = vmatprep.subr.bf16.mxu0 0
        %575 = vmatpush1.bf16.msra.mxu0 0
        %576 = vmatprep.subr.bf16.mxu0 0
        %577 = vmatpush1.bf16.msra.mxu0 0
        %578 = vmatprep.subr.bf16.mxu0 0
        %579 = vmatpush1.bf16.msra.mxu0 0
        %580 = vmatprep.subr.bf16.mxu0 0
        %581 = vmatpush1.bf16.msra.mxu0 0
        %582 = vmatprep.subr.bf16.mxu0 0
        %583 = vmatpush1.bf16.msra.mxu0 0
        %584 = vmatprep.subr.bf16.mxu0 0
        %585 = vmatpush1.bf16.msra.mxu0 0
        %586 = vmatprep.subr.bf16.mxu0 0
        %587 = vmatpush1.bf16.msra.mxu0 0
        %588 = vmatprep.subr.bf16.mxu0 0
        %589 = vmatpush1.bf16.msra.mxu0 %v572
        %590 = vmatprep.subr.bf16.mxu0 0
        %591 = vmatpush2.bf16.msra.mxu0 0
        %592 = vmatprep.subr.bf16.mxu0 0
        %593 = vmatpush2.bf16.msra.mxu0 0
        %594 = vmatprep.subr.bf16.mxu0 0
        %595 = vmatpush2.bf16.msra.mxu0 0
        %596 = vmatprep.subr.bf16.mxu0 0
        %597 = vmatpush2.bf16.msra.mxu0 0
        %598 = vmatprep.subr.bf16.mxu0 0
        %599 = vmatpush2.bf16.msra.mxu0 0
        %600 = vmatprep.subr.bf16.mxu0 0
        %601 = vmatpush2.bf16.msra.mxu0 0
        %602 = vmatprep.subr.bf16.mxu0 0
        %603 = vmatpush2.bf16.msra.mxu0 0
        %604 = vmatprep.subr.bf16.mxu0 0
        %605 = vmatpush2.bf16.msra.mxu0 0
        %606 = vmatprep.mubr.bf16.mxu0 0
        %607 = vmatmul.mubr.bf16.gmra.mxu0 %v568
        %v608 = vpop.f32.mrf.mxu0
        %v609 = vadd.f32 %v559, %v608
        %v610 = vpop.f32.mrf.mxu0
        %v611 = vpop.f32.mrf.mxu0
        %v612 = vadd.f32 %v559, %v611
        %v613 = vpop.f32.mrf.mxu0
        %614 = vdwg.mxu0
        %v615 = vmax.f32 %v609, 0.0
        %v616 = vmax.f32 %v612, 0.0
        %v617 = vpack.c.bf16 %v616, %v615
        %v618 = vld [vmem:[%s3] sm:$0xf]
        %v619 = vld [vmem:[%s3 + $0x4] sm:$0xf]
        %v620 = vld [vmem:[%s3 + $0x8] sm:$0xf]
        %v621 = vld [vmem:[%s3 + $0xc] sm:$0xf]
        %v622 = vld [vmem:[%s3 + $0x10] sm:$0xf]
        %v623 = vld [vmem:[%s3 + $0x14] sm:$0xf]
        %v624 = vld [vmem:[%s3 + $0x18] sm:$0xf]
        %v625 = vld [vmem:[%s3 + $0x1c] sm:$0xf]
        %v626 = vld [vmem:[%s4] sm:$0x1]
        %v628 = vlaneseq
        %v629 = vshrl.u32 %v628, 7
        %v630 = vsub.s32 0, %v629
        %v631 = vrot.slane %v626, %v630
        %v641 = vunpack.c.l.b16 %v618
        %v642 = vunpack.c.l.b16 %v619
        %v643 = vunpack.c.l.b16 %v620
        %v644 = vunpack.c.l.b16 %v621
        %v645 = vunpack.c.l.b16 %v622
        %v646 = vunpack.c.l.b16 %v623
        %v647 = vunpack.c.l.b16 %v624
        %v648 = vunpack.c.l.b16 %v625
        %v649 = vpack.c.b16 %v642, %v641
        %v650 = vpack.c.b16 %v644, %v643
        %v651 = vpack.c.b16 %v646, %v645
        %v652 = vpack.c.b16 %v648, %v647
        %vm657 = vcmask 523264
        %v659 = vsel %vm657, %v617, 0
        %661 = vmatprep.subr.bf16.mxu0 0
        %662 = vmatpush1.bf16.msra.mxu0 0
        %663 = vmatprep.subr.bf16.mxu0 0
        %664 = vmatpush1.bf16.msra.mxu0 0
        %665 = vmatprep.subr.bf16.mxu0 0
        %666 = vmatpush1.bf16.msra.mxu0 0
        %667 = vmatprep.subr.bf16.mxu0 0
        %668 = vmatpush1.bf16.msra.mxu0 0
        %669 = vmatprep.subr.bf16.mxu0 0
        %670 = vmatpush1.bf16.msra.mxu0 %v652
        %671 = vmatprep.subr.bf16.mxu0 0
        %672 = vmatpush1.bf16.msra.mxu0 %v651
        %673 = vmatprep.subr.bf16.mxu0 0
        %674 = vmatpush1.bf16.msra.mxu0 %v650
        %675 = vmatprep.subr.bf16.mxu0 0
        %676 = vmatpush1.bf16.msra.mxu0 %v649
        %677 = vmatprep.subr.bf16.mxu0 0
        %678 = vmatpush2.bf16.msra.mxu0 0
        %679 = vmatprep.subr.bf16.mxu0 0
        %680 = vmatpush2.bf16.msra.mxu0 0
        %681 = vmatprep.subr.bf16.mxu0 0
        %682 = vmatpush2.bf16.msra.mxu0 0
        %683 = vmatprep.subr.bf16.mxu0 0
        %684 = vmatpush2.bf16.msra.mxu0 0
        %685 = vmatprep.subr.bf16.mxu0 0
        %686 = vmatpush2.bf16.msra.mxu0 0
        %687 = vmatprep.subr.bf16.mxu0 0
        %688 = vmatpush2.bf16.msra.mxu0 0
        %689 = vmatprep.subr.bf16.mxu0 0
        %690 = vmatpush2.bf16.msra.mxu0 0
        %691 = vmatprep.subr.bf16.mxu0 0
        %692 = vmatpush2.bf16.msra.mxu0 0
        %693 = vmatprep.mubr.bf16.mxu0 0
        %694 = vmatmul.mubr.bf16.gmra.mxu0 %v659
        %v695 = vpop.f32.mrf.mxu0
        %v696 = vadd.f32 %v631, %v695
        %v697 = vpop.f32.mrf.mxu0
        %v698 = vpop.f32.mrf.mxu0
        %v699 = vadd.f32 %v631, %v698
        %v700 = vpop.f32.mrf.mxu0
        %701 = vdwg.mxu0
        %v702 = vmax.f32 %v696, 0.0
        %v703 = vmax.f32 %v699, 0.0
        %v704 = vpack.c.bf16 %v703, %v702
        %v705 = vld [vmem:[#allocation4] sm:$0xff]
        %v706 = vld [vmem:[#allocation4 + $0x8] sm:$0xff]
        %v707 = vld [vmem:[#allocation4 + $0x10] sm:$0xff]
        %v708 = vld [vmem:[#allocation4 + $0x18] sm:$0xff]
        %v709 = vld [vmem:[#allocation4 + $0x20] sm:$0xff]
        %v710 = vld [vmem:[#allocation4 + $0x28] sm:$0xff]
        %v711 = vld [vmem:[#allocation4 + $0x30] sm:$0xff]
        %v712 = vld [vmem:[#allocation4 + $0x38] sm:$0xff]
        %v713 = vld [vmem:[#allocation4 + $0x40] sm:$0xff]
        %v714 = vld [vmem:[#allocation4 + $0x48] sm:$0xff]
        %v715 = vld [vmem:[#allocation4 + $0x50] sm:$0xff]
        %v716 = vld [vmem:[#allocation4 + $0x58] sm:$0xff]
        %v717 = vld [vmem:[#allocation4 + $0x60] sm:$0xff]
        %v718 = vld [vmem:[#allocation4 + $0x68] sm:$0xff]
        %v719 = vld [vmem:[#allocation4 + $0x70] sm:$0xff]
        %v720 = vld [vmem:[#allocation4 + $0x78] sm:$0xff]
        %v721 = vld [vmem:[#allocation4 + $0x80] sm:$0xff]
        %v722 = vld [vmem:[#allocation4 + $0x88] sm:$0xff]
        %v723 = vld [vmem:[#allocation4 + $0x90] sm:$0xff]
        %v724 = vld [vmem:[#allocation4 + $0x98] sm:$0xff]
        %v725 = vld [vmem:[#allocation4 + $0xa0] sm:$0xff]
        %v726 = vld [vmem:[#allocation4 + $0xa8] sm:$0xff]
        %v727 = vld [vmem:[#allocation4 + $0xb0] sm:$0xff]
        %v728 = vld [vmem:[#allocation4 + $0xb8] sm:$0xff]
        %v729 = vld [vmem:[#allocation4 + $0xc0] sm:$0xff]
        %v730 = vld [vmem:[#allocation4 + $0xc8] sm:$0xff]
        %v731 = vld [vmem:[#allocation4 + $0xd0] sm:$0xff]
        %v732 = vld [vmem:[#allocation4 + $0xd8] sm:$0xff]
        %v733 = vld [vmem:[#allocation4 + $0xe0] sm:$0xff]
        %v734 = vld [vmem:[#allocation4 + $0xe8] sm:$0xff]
        %v735 = vld [vmem:[#allocation4 + $0xf0] sm:$0xff]
        %v736 = vld [vmem:[#allocation4 + $0xf8] sm:$0xff]
        %v737 = vld [vmem:[#allocation4 + $0x100] sm:$0xff]
        %v738 = vld [vmem:[#allocation4 + $0x108] sm:$0xff]
        %v739 = vld [vmem:[#allocation4 + $0x110] sm:$0xff]
        %v740 = vld [vmem:[#allocation4 + $0x118] sm:$0xff]
        %v741 = vld [vmem:[#allocation4 + $0x120] sm:$0xff]
        %v742 = vld [vmem:[#allocation4 + $0x128] sm:$0xff]
        %v743 = vld [vmem:[#allocation4 + $0x130] sm:$0xff]
        %v744 = vld [vmem:[#allocation4 + $0x138] sm:$0xff]
        %v745 = vld [vmem:[#allocation4 + $0x140] sm:$0xff]
        %v746 = vld [vmem:[#allocation4 + $0x148] sm:$0xff]
        %v747 = vld [vmem:[#allocation4 + $0x150] sm:$0xff]
        %v748 = vld [vmem:[#allocation4 + $0x158] sm:$0xff]
        %v749 = vld [vmem:[#allocation4 + $0x160] sm:$0xff]
        %v750 = vld [vmem:[#allocation4 + $0x168] sm:$0xff]
        %v751 = vld [vmem:[#allocation4 + $0x170] sm:$0xff]
        %v752 = vld [vmem:[#allocation4 + $0x178] sm:$0xff]
        %v753 = vld [vmem:[#allocation4 + $0x180] sm:$0xff]
        %v754 = vld [vmem:[#allocation4 + $0x188] sm:$0xff]
        %v755 = vld [vmem:[#allocation4 + $0x190] sm:$0xff]
        %v756 = vld [vmem:[#allocation4 + $0x198] sm:$0xff]
        %v757 = vld [vmem:[#allocation4 + $0x1a0] sm:$0xff]
        %v758 = vld [vmem:[#allocation4 + $0x1a8] sm:$0xff]
        %v759 = vld [vmem:[#allocation4 + $0x1b0] sm:$0xff]
        %v760 = vld [vmem:[#allocation4 + $0x1b8] sm:$0xff]
        %v761 = vld [vmem:[#allocation4 + $0x1c0] sm:$0xff]
        %v762 = vld [vmem:[#allocation4 + $0x1c8] sm:$0xff]
        %v763 = vld [vmem:[#allocation4 + $0x1d0] sm:$0xff]
        %v764 = vld [vmem:[#allocation4 + $0x1d8] sm:$0xff]
        %v765 = vld [vmem:[#allocation4 + $0x1e0] sm:$0xff]
        %v766 = vld [vmem:[#allocation4 + $0x1e8] sm:$0xff]
        %v767 = vld [vmem:[#allocation4 + $0x1f0] sm:$0xff]
        %v768 = vld [vmem:[#allocation4 + $0x1f8] sm:$0xff]
        %v769 = vld [vmem:[%s6] sm:$0xff]
        %v771 = vlaneseq
        %v772 = vshrl.u32 %v771, 7
        %v773 = vsub.s32 0, %v772
        %v774 = vrot.slane %v769, %v773
        %v775 = vlaneseq
        %v776 = vshrl.u32 %v775, 7
        %v777 = vsub.s32 1, %v776
        %v778 = vrot.slane %v769, %v777
        %v779 = vlaneseq
        %v780 = vshrl.u32 %v779, 7
        %v781 = vsub.s32 2, %v780
        %v782 = vrot.slane %v769, %v781
        %v783 = vlaneseq
        %v784 = vshrl.u32 %v783, 7
        %v785 = vsub.s32 3, %v784
        %v786 = vrot.slane %v769, %v785
        %v787 = vlaneseq
        %v788 = vshrl.u32 %v787, 7
        %v789 = vsub.s32 4, %v788
        %v790 = vrot.slane %v769, %v789
        %v791 = vlaneseq
        %v792 = vshrl.u32 %v791, 7
        %v793 = vsub.s32 5, %v792
        %v794 = vrot.slane %v769, %v793
        %v795 = vlaneseq
        %v796 = vshrl.u32 %v795, 7
        %v797 = vsub.s32 6, %v796
        %v798 = vrot.slane %v769, %v797
        %v799 = vlaneseq
        %v800 = vshrl.u32 %v799, 7
        %v801 = vsub.s32 7, %v800
        %v802 = vrot.slane %v769, %v801
        %v875 = vunpack.c.l.b16 %v705
        %v876 = vunpack.c.h.b16 %v705
        %v877 = vunpack.c.l.b16 %v706
        %v878 = vunpack.c.h.b16 %v706
        %v879 = vunpack.c.l.b16 %v707
        %v880 = vunpack.c.h.b16 %v707
        %v881 = vunpack.c.l.b16 %v708
        %v882 = vunpack.c.h.b16 %v708
        %v883 = vunpack.c.l.b16 %v709
        %v884 = vunpack.c.h.b16 %v709
        %v885 = vunpack.c.l.b16 %v710
        %v886 = vunpack.c.h.b16 %v710
        %v887 = vunpack.c.l.b16 %v711
        %v888 = vunpack.c.h.b16 %v711
        %v889 = vunpack.c.l.b16 %v712
        %v890 = vunpack.c.h.b16 %v712
        %v891 = vunpack.c.l.b16 %v713
        %v892 = vunpack.c.h.b16 %v713
        %v893 = vunpack.c.l.b16 %v714
        %v894 = vunpack.c.h.b16 %v714
        %v895 = vunpack.c.l.b16 %v715
        %v896 = vunpack.c.h.b16 %v715
        %v897 = vunpack.c.l.b16 %v716
        %v898 = vunpack.c.h.b16 %v716
        %v899 = vunpack.c.l.b16 %v717
        %v900 = vunpack.c.h.b16 %v717
        %v901 = vunpack.c.l.b16 %v718
        %v902 = vunpack.c.h.b16 %v718
        %v903 = vunpack.c.l.b16 %v719
        %v904 = vunpack.c.h.b16 %v719
        %v905 = vunpack.c.l.b16 %v720
        %v906 = vunpack.c.h.b16 %v720
        %v907 = vunpack.c.l.b16 %v721
        %v908 = vunpack.c.h.b16 %v721
        %v909 = vunpack.c.l.b16 %v722
        %v910 = vunpack.c.h.b16 %v722
        %v911 = vunpack.c.l.b16 %v723
        %v912 = vunpack.c.h.b16 %v723
        %v913 = vunpack.c.l.b16 %v724
        %v914 = vunpack.c.h.b16 %v724
        %v915 = vunpack.c.l.b16 %v725
        %v916 = vunpack.c.h.b16 %v725
        %v917 = vunpack.c.l.b16 %v726
        %v918 = vunpack.c.h.b16 %v726
        %v919 = vunpack.c.l.b16 %v727
        %v920 = vunpack.c.h.b16 %v727
        %v921 = vunpack.c.l.b16 %v728
        %v922 = vunpack.c.h.b16 %v728
        %v923 = vunpack.c.l.b16 %v729
        %v924 = vunpack.c.h.b16 %v729
        %v925 = vunpack.c.l.b16 %v730
        %v926 = vunpack.c.h.b16 %v730
        %v927 = vunpack.c.l.b16 %v731
        %v928 = vunpack.c.h.b16 %v731
        %v929 = vunpack.c.l.b16 %v732
        %v930 = vunpack.c.h.b16 %v732
        %v931 = vunpack.c.l.b16 %v733
        %v932 = vunpack.c.h.b16 %v733
        %v933 = vunpack.c.l.b16 %v734
        %v934 = vunpack.c.h.b16 %v734
        %v935 = vunpack.c.l.b16 %v735
        %v936 = vunpack.c.h.b16 %v735
        %v937 = vunpack.c.l.b16 %v736
        %v938 = vunpack.c.h.b16 %v736
        %v939 = vunpack.c.l.b16 %v737
        %v940 = vunpack.c.h.b16 %v737
        %v941 = vunpack.c.l.b16 %v738
        %v942 = vunpack.c.h.b16 %v738
        %v943 = vunpack.c.l.b16 %v739
        %v944 = vunpack.c.h.b16 %v739
        %v945 = vunpack.c.l.b16 %v740
        %v946 = vunpack.c.h.b16 %v740
        %v947 = vunpack.c.l.b16 %v741
        %v948 = vunpack.c.h.b16 %v741
        %v949 = vunpack.c.l.b16 %v742
        %v950 = vunpack.c.h.b16 %v742
        %v951 = vunpack.c.l.b16 %v743
        %v952 = vunpack.c.h.b16 %v743
        %v953 = vunpack.c.l.b16 %v744
        %v954 = vunpack.c.h.b16 %v744
        %v955 = vunpack.c.l.b16 %v745
        %v956 = vunpack.c.h.b16 %v745
        %v957 = vunpack.c.l.b16 %v746
        %v958 = vunpack.c.h.b16 %v746
        %v959 = vunpack.c.l.b16 %v747
        %v960 = vunpack.c.h.b16 %v747
        %v961 = vunpack.c.l.b16 %v748
        %v962 = vunpack.c.h.b16 %v748
        %v963 = vunpack.c.l.b16 %v749
        %v964 = vunpack.c.h.b16 %v749
        %v965 = vunpack.c.l.b16 %v750
        %v966 = vunpack.c.h.b16 %v750
        %v967 = vunpack.c.l.b16 %v751
        %v968 = vunpack.c.h.b16 %v751
        %v969 = vunpack.c.l.b16 %v752
        %v970 = vunpack.c.h.b16 %v752
        %v971 = vunpack.c.l.b16 %v753
        %v972 = vunpack.c.h.b16 %v753
        %v973 = vunpack.c.l.b16 %v754
        %v974 = vunpack.c.h.b16 %v754
        %v975 = vunpack.c.l.b16 %v755
        %v976 = vunpack.c.h.b16 %v755
        %v977 = vunpack.c.l.b16 %v756
        %v978 = vunpack.c.h.b16 %v756
        %v979 = vunpack.c.l.b16 %v757
        %v980 = vunpack.c.h.b16 %v757
        %v981 = vunpack.c.l.b16 %v758
        %v982 = vunpack.c.h.b16 %v758
        %v983 = vunpack.c.l.b16 %v759
        %v984 = vunpack.c.h.b16 %v759
        %v985 = vunpack.c.l.b16 %v760
        %v986 = vunpack.c.h.b16 %v760
        %v987 = vunpack.c.l.b16 %v761
        %v988 = vunpack.c.h.b16 %v761
        %v989 = vunpack.c.l.b16 %v762
        %v990 = vunpack.c.h.b16 %v762
        %v991 = vunpack.c.l.b16 %v763
        %v992 = vunpack.c.h.b16 %v763
        %v993 = vunpack.c.l.b16 %v764
        %v994 = vunpack.c.h.b16 %v764
        %v995 = vunpack.c.l.b16 %v765
        %v996 = vunpack.c.h.b16 %v765
        %v997 = vunpack.c.l.b16 %v766
        %v998 = vunpack.c.h.b16 %v766
        %v999 = vunpack.c.l.b16 %v767
        %v1000 = vunpack.c.h.b16 %v767
        %v1001 = vunpack.c.l.b16 %v768
        %v1002 = vunpack.c.h.b16 %v768
        %v1003 = vpack.c.b16 %v883, %v875
        %v1004 = vpack.c.b16 %v884, %v876
        %v1005 = vpack.c.b16 %v885, %v877
        %v1006 = vpack.c.b16 %v886, %v878
        %v1007 = vpack.c.b16 %v887, %v879
        %v1008 = vpack.c.b16 %v888, %v880
        %v1009 = vpack.c.b16 %v889, %v881
        %v1010 = vpack.c.b16 %v890, %v882
        %v1011 = vpack.c.b16 %v899, %v891
        %v1012 = vpack.c.b16 %v900, %v892
        %v1013 = vpack.c.b16 %v901, %v893
        %v1014 = vpack.c.b16 %v902, %v894
        %v1015 = vpack.c.b16 %v903, %v895
        %v1016 = vpack.c.b16 %v904, %v896
        %v1017 = vpack.c.b16 %v905, %v897
        %v1018 = vpack.c.b16 %v906, %v898
        %v1019 = vpack.c.b16 %v915, %v907
        %v1020 = vpack.c.b16 %v916, %v908
        %v1021 = vpack.c.b16 %v917, %v909
        %v1022 = vpack.c.b16 %v918, %v910
        %v1023 = vpack.c.b16 %v919, %v911
        %v1024 = vpack.c.b16 %v920, %v912
        %v1025 = vpack.c.b16 %v921, %v913
        %v1026 = vpack.c.b16 %v922, %v914
        %v1027 = vpack.c.b16 %v931, %v923
        %v1028 = vpack.c.b16 %v932, %v924
        %v1029 = vpack.c.b16 %v933, %v925
        %v1030 = vpack.c.b16 %v934, %v926
        %v1031 = vpack.c.b16 %v935, %v927
        %v1032 = vpack.c.b16 %v936, %v928
        %v1033 = vpack.c.b16 %v937, %v929
        %v1034 = vpack.c.b16 %v938, %v930
        %v1035 = vpack.c.b16 %v947, %v939
        %v1036 = vpack.c.b16 %v948, %v940
        %v1037 = vpack.c.b16 %v949, %v941
        %v1038 = vpack.c.b16 %v950, %v942
        %v1039 = vpack.c.b16 %v951, %v943
        %v1040 = vpack.c.b16 %v952, %v944
        %v1041 = vpack.c.b16 %v953, %v945
        %v1042 = vpack.c.b16 %v954, %v946
        %v1043 = vpack.c.b16 %v963, %v955
        %v1044 = vpack.c.b16 %v964, %v956
        %v1045 = vpack.c.b16 %v965, %v957
        %v1046 = vpack.c.b16 %v966, %v958
        %v1047 = vpack.c.b16 %v967, %v959
        %v1048 = vpack.c.b16 %v968, %v960
        %v1049 = vpack.c.b16 %v969, %v961
        %v1050 = vpack.c.b16 %v970, %v962
        %v1051 = vpack.c.b16 %v979, %v971
        %v1052 = vpack.c.b16 %v980, %v972
        %v1053 = vpack.c.b16 %v981, %v973
        %v1054 = vpack.c.b16 %v982, %v974
        %v1055 = vpack.c.b16 %v983, %v975
        %v1056 = vpack.c.b16 %v984, %v976
        %v1057 = vpack.c.b16 %v985, %v977
        %v1058 = vpack.c.b16 %v986, %v978
        %v1059 = vpack.c.b16 %v995, %v987
        %v1060 = vpack.c.b16 %v996, %v988
        %v1061 = vpack.c.b16 %v997, %v989
        %v1062 = vpack.c.b16 %v998, %v990
        %v1063 = vpack.c.b16 %v999, %v991
        %v1064 = vpack.c.b16 %v1000, %v992
        %v1065 = vpack.c.b16 %v1001, %v993
        %v1066 = vpack.c.b16 %v1002, %v994
        %1131 = vmatprep.subr.bf16.mxu0 %v1060
        %1132 = vmatpush1.bf16.msra.mxu0 %v1059
        %1133 = vmatprep.subr.bf16.mxu0 %v1052
        %1134 = vmatpush1.bf16.msra.mxu0 %v1051
        %1135 = vmatprep.subr.bf16.mxu0 %v1044
        %1136 = vmatpush1.bf16.msra.mxu0 %v1043
        %1137 = vmatprep.subr.bf16.mxu0 %v1036
        %1138 = vmatpush1.bf16.msra.mxu0 %v1035
        %1139 = vmatprep.subr.bf16.mxu0 %v1028
        %1140 = vmatpush1.bf16.msra.mxu0 %v1027
        %1141 = vmatprep.subr.bf16.mxu0 %v1020
        %1142 = vmatpush1.bf16.msra.mxu0 %v1019
        %1143 = vmatprep.subr.bf16.mxu0 %v1012
        %1144 = vmatpush1.bf16.msra.mxu0 %v1011
        %1145 = vmatprep.subr.bf16.mxu0 %v1004
        %1146 = vmatpush1.bf16.msra.mxu0 %v1003
        %1147 = vmatprep.subr.bf16.mxu0 0
        %1148 = vmatpush2.bf16.msra.mxu0 0
        %1149 = vmatprep.subr.bf16.mxu0 0
        %1150 = vmatpush2.bf16.msra.mxu0 0
        %1151 = vmatprep.subr.bf16.mxu0 0
        %1152 = vmatpush2.bf16.msra.mxu0 0
        %1153 = vmatprep.subr.bf16.mxu0 0
        %1154 = vmatpush2.bf16.msra.mxu0 0
        %1155 = vmatprep.subr.bf16.mxu0 0
        %1156 = vmatpush2.bf16.msra.mxu0 0
        %1157 = vmatprep.subr.bf16.mxu0 0
        %1158 = vmatpush2.bf16.msra.mxu0 0
        %1159 = vmatprep.subr.bf16.mxu0 0
        %1160 = vmatpush2.bf16.msra.mxu0 0
        %1161 = vmatprep.subr.bf16.mxu0 0
        %1162 = vmatpush2.bf16.msra.mxu0 0
        %1163 = vmatprep.mubr.bf16.mxu0 0
        %1164 = vmatmul.mubr.bf16.gmra.mxu0 %v704
        %v1165 = vpop.f32.mrf.mxu0
        %v1166 = vadd.f32 %v774, %v1165
        %v1167 = vpop.f32.mrf.mxu0
        %v1168 = vadd.f32 %v778, %v1167
        %v1169 = vpop.f32.mrf.mxu0
        %v1170 = vadd.f32 %v774, %v1169
        %v1171 = vpop.f32.mrf.mxu0
        %v1172 = vadd.f32 %v778, %v1171
        %1173 = vdwg.mxu0
        %1174 = vmatprep.subr.bf16.mxu0 %v1062
        %1175 = vmatpush1.bf16.msra.mxu0 %v1061
        %1176 = vmatprep.subr.bf16.mxu0 %v1054
        %1177 = vmatpush1.bf16.msra.mxu0 %v1053
        %1178 = vmatprep.subr.bf16.mxu0 %v1046
        %1179 = vmatpush1.bf16.msra.mxu0 %v1045
        %1180 = vmatprep.subr.bf16.mxu0 %v1038
        %1181 = vmatpush1.bf16.msra.mxu0 %v1037
        %1182 = vmatprep.subr.bf16.mxu0 %v1030
        %1183 = vmatpush1.bf16.msra.mxu0 %v1029
        %1184 = vmatprep.subr.bf16.mxu0 %v1022
        %1185 = vmatpush1.bf16.msra.mxu0 %v1021
        %1186 = vmatprep.subr.bf16.mxu0 %v1014
        %1187 = vmatpush1.bf16.msra.mxu0 %v1013
        %1188 = vmatprep.subr.bf16.mxu0 %v1006
        %1189 = vmatpush1.bf16.msra.mxu0 %v1005
        %1190 = vmatprep.subr.bf16.mxu0 0
        %1191 = vmatpush2.bf16.msra.mxu0 0
        %1192 = vmatprep.subr.bf16.mxu0 0
        %1193 = vmatpush2.bf16.msra.mxu0 0
        %1194 = vmatprep.subr.bf16.mxu0 0
        %1195 = vmatpush2.bf16.msra.mxu0 0
        %1196 = vmatprep.subr.bf16.mxu0 0
        %1197 = vmatpush2.bf16.msra.mxu0 0
        %1198 = vmatprep.subr.bf16.mxu0 0
        %1199 = vmatpush2.bf16.msra.mxu0 0
        %1200 = vmatprep.subr.bf16.mxu0 0
        %1201 = vmatpush2.bf16.msra.mxu0 0
        %1202 = vmatprep.subr.bf16.mxu0 0
        %1203 = vmatpush2.bf16.msra.mxu0 0
        %1204 = vmatprep.subr.bf16.mxu0 0
        %1205 = vmatpush2.bf16.msra.mxu0 0
        %1206 = vmatprep.mubr.bf16.mxu0 0
        %1207 = vmatmul.mubr.bf16.gmra.mxu0 %v704
        %v1208 = vpop.f32.mrf.mxu0
        %v1209 = vadd.f32 %v782, %v1208
        %v1210 = vpop.f32.mrf.mxu0
        %v1211 = vadd.f32 %v786, %v1210
        %v1212 = vpop.f32.mrf.mxu0
        %v1213 = vadd.f32 %v782, %v1212
        %v1214 = vpop.f32.mrf.mxu0
        %v1215 = vadd.f32 %v786, %v1214
        %1216 = vdwg.mxu0
        %1217 = vmatprep.subr.bf16.mxu0 %v1064
        %1218 = vmatpush1.bf16.msra.mxu0 %v1063
        %1219 = vmatprep.subr.bf16.mxu0 %v1056
        %1220 = vmatpush1.bf16.msra.mxu0 %v1055
        %1221 = vmatprep.subr.bf16.mxu0 %v1048
        %1222 = vmatpush1.bf16.msra.mxu0 %v1047
        %1223 = vmatprep.subr.bf16.mxu0 %v1040
        %1224 = vmatpush1.bf16.msra.mxu0 %v1039
        %1225 = vmatprep.subr.bf16.mxu0 %v1032
        %1226 = vmatpush1.bf16.msra.mxu0 %v1031
        %1227 = vmatprep.subr.bf16.mxu0 %v1024
        %1228 = vmatpush1.bf16.msra.mxu0 %v1023
        %1229 = vmatprep.subr.bf16.mxu0 %v1016
        %1230 = vmatpush1.bf16.msra.mxu0 %v1015
        %1231 = vmatprep.subr.bf16.mxu0 %v1008
        %1232 = vmatpush1.bf16.msra.mxu0 %v1007
        %1233 = vmatprep.subr.bf16.mxu0 0
        %1234 = vmatpush2.bf16.msra.mxu0 0
        %1235 = vmatprep.subr.bf16.mxu0 0
        %1236 = vmatpush2.bf16.msra.mxu0 0
        %1237 = vmatprep.subr.bf16.mxu0 0
        %1238 = vmatpush2.bf16.msra.mxu0 0
        %1239 = vmatprep.subr.bf16.mxu0 0
        %1240 = vmatpush2.bf16.msra.mxu0 0
        %1241 = vmatprep.subr.bf16.mxu0 0
        %1242 = vmatpush2.bf16.msra.mxu0 0
        %1243 = vmatprep.subr.bf16.mxu0 0
        %1244 = vmatpush2.bf16.msra.mxu0 0
        %1245 = vmatprep.subr.bf16.mxu0 0
        %1246 = vmatpush2.bf16.msra.mxu0 0
        %1247 = vmatprep.subr.bf16.mxu0 0
        %1248 = vmatpush2.bf16.msra.mxu0 0
        %1249 = vmatprep.mubr.bf16.mxu0 0
        %1250 = vmatmul.mubr.bf16.gmra.mxu0 %v704
        %v1251 = vpop.f32.mrf.mxu0
        %v1252 = vadd.f32 %v790, %v1251
        %v1253 = vpop.f32.mrf.mxu0
        %v1254 = vadd.f32 %v794, %v1253
        %v1255 = vpop.f32.mrf.mxu0
        %v1256 = vadd.f32 %v790, %v1255
        %v1257 = vpop.f32.mrf.mxu0
        %v1258 = vadd.f32 %v794, %v1257
        %1259 = vdwg.mxu0
        %1260 = vmatprep.subr.bf16.mxu0 %v1066
        %1261 = vmatpush1.bf16.msra.mxu0 %v1065
        %1262 = vmatprep.subr.bf16.mxu0 %v1058
        %1263 = vmatpush1.bf16.msra.mxu0 %v1057
        %1264 = vmatprep.subr.bf16.mxu0 %v1050
        %1265 = vmatpush1.bf16.msra.mxu0 %v1049
        %1266 = vmatprep.subr.bf16.mxu0 %v1042
        %1267 = vmatpush1.bf16.msra.mxu0 %v1041
        %1268 = vmatprep.subr.bf16.mxu0 %v1034
        %1269 = vmatpush1.bf16.msra.mxu0 %v1033
        %1270 = vmatprep.subr.bf16.mxu0 %v1026
        %1271 = vmatpush1.bf16.msra.mxu0 %v1025
        %1272 = vmatprep.subr.bf16.mxu0 %v1018
        %1273 = vmatpush1.bf16.msra.mxu0 %v1017
        %1274 = vmatprep.subr.bf16.mxu0 %v1010
        %1275 = vmatpush1.bf16.msra.mxu0 %v1009
        %1276 = vmatprep.subr.bf16.mxu0 0
        %1277 = vmatpush2.bf16.msra.mxu0 0
        %1278 = vmatprep.subr.bf16.mxu0 0
        %1279 = vmatpush2.bf16.msra.mxu0 0
        %1280 = vmatprep.subr.bf16.mxu0 0
        %1281 = vmatpush2.bf16.msra.mxu0 0
        %1282 = vmatprep.subr.bf16.mxu0 0
        %1283 = vmatpush2.bf16.msra.mxu0 0
        %1284 = vmatprep.subr.bf16.mxu0 0
        %1285 = vmatpush2.bf16.msra.mxu0 0
        %1286 = vmatprep.subr.bf16.mxu0 0
        %1287 = vmatpush2.bf16.msra.mxu0 0
        %1288 = vmatprep.subr.bf16.mxu0 0
        %1289 = vmatpush2.bf16.msra.mxu0 0
        %1290 = vmatprep.subr.bf16.mxu0 0
        %1291 = vmatpush2.bf16.msra.mxu0 0
        %1292 = vmatprep.mubr.bf16.mxu0 0
        %1293 = vmatmul.mubr.bf16.gmra.mxu0 %v704
        %v1294 = vpop.f32.mrf.mxu0
        %v1295 = vadd.f32 %v798, %v1294
        %v1296 = vpop.f32.mrf.mxu0
        %v1297 = vadd.f32 %v802, %v1296
        %v1298 = vpop.f32.mrf.mxu0
        %v1299 = vadd.f32 %v798, %v1298
        %v1300 = vpop.f32.mrf.mxu0
        %v1301 = vadd.f32 %v802, %v1300
        %1302 = vdwg.mxu0
        %v1303 = vmax.f32 %v1166, 0.0
        %v1304 = vmax.f32 %v1168, 0.0
        %v1305 = vmax.f32 %v1209, 0.0
        %v1306 = vmax.f32 %v1211, 0.0
        %v1307 = vmax.f32 %v1252, 0.0
        %v1308 = vmax.f32 %v1254, 0.0
        %v1309 = vmax.f32 %v1295, 0.0
        %v1310 = vmax.f32 %v1297, 0.0
        %v1311 = vmax.f32 %v1170, 0.0
        %v1312 = vmax.f32 %v1172, 0.0
        %v1313 = vmax.f32 %v1213, 0.0
        %v1314 = vmax.f32 %v1215, 0.0
        %v1315 = vmax.f32 %v1256, 0.0
        %v1316 = vmax.f32 %v1258, 0.0
        %v1317 = vmax.f32 %v1299, 0.0
        %v1318 = vmax.f32 %v1301, 0.0
        %v1319 = vld [vmem:[#allocation2] sm:$0xff]
        %v1320 = vld [vmem:[#allocation2 + $0x8] sm:$0xff]
        %v1321 = vrot.slane %v1303, 4
        %v1322 = vmax.f32 %v1303, %v1321
        %v1323 = vrot.slane %v1322, 2
        %v1324 = vmax.f32 %v1322, %v1323
        %v1325 = vrot.slane %v1324, 1
        %v1326 = vmax.f32 %v1324, %v1325
        %v1327 = vrot.slane %v1304, 4
        %v1328 = vmax.f32 %v1304, %v1327
        %v1329 = vrot.slane %v1328, 2
        %v1330 = vmax.f32 %v1328, %v1329
        %v1331 = vrot.slane %v1330, 1
        %v1332 = vmax.f32 %v1330, %v1331
        %v1333 = vrot.slane %v1305, 4
        %v1334 = vmax.f32 %v1305, %v1333
        %v1335 = vrot.slane %v1334, 2
        %v1336 = vmax.f32 %v1334, %v1335
        %v1337 = vrot.slane %v1336, 1
        %v1338 = vmax.f32 %v1336, %v1337
        %v1339 = vrot.slane %v1306, 4
        %v1340 = vmax.f32 %v1306, %v1339
        %v1341 = vrot.slane %v1340, 2
        %v1342 = vmax.f32 %v1340, %v1341
        %v1343 = vrot.slane %v1342, 1
        %v1344 = vmax.f32 %v1342, %v1343
        %v1345 = vrot.slane %v1307, 4
        %v1346 = vmax.f32 %v1307, %v1345
        %v1347 = vrot.slane %v1346, 2
        %v1348 = vmax.f32 %v1346, %v1347
        %v1349 = vrot.slane %v1348, 1
        %v1350 = vmax.f32 %v1348, %v1349
        %v1351 = vrot.slane %v1308, 4
        %v1352 = vmax.f32 %v1308, %v1351
        %v1353 = vrot.slane %v1352, 2
        %v1354 = vmax.f32 %v1352, %v1353
        %v1355 = vrot.slane %v1354, 1
        %v1356 = vmax.f32 %v1354, %v1355
        %v1357 = vrot.slane %v1309, 4
        %v1358 = vmax.f32 %v1309, %v1357
        %v1359 = vrot.slane %v1358, 2
        %v1360 = vmax.f32 %v1358, %v1359
        %v1361 = vrot.slane %v1360, 1
        %v1362 = vmax.f32 %v1360, %v1361
        %v1363 = vrot.slane %v1310, 4
        %v1364 = vmax.f32 %v1310, %v1363
        %v1365 = vrot.slane %v1364, 2
        %v1366 = vmax.f32 %v1364, %v1365
        %v1367 = vrot.slane %v1366, 1
        %v1368 = vmax.f32 %v1366, %v1367
        %v1369 = vrot.slane %v1311, 4
        %v1370 = vmax.f32 %v1311, %v1369
        %v1371 = vrot.slane %v1370, 2
        %v1372 = vmax.f32 %v1370, %v1371
        %v1373 = vrot.slane %v1372, 1
        %v1374 = vmax.f32 %v1372, %v1373
        %v1375 = vrot.slane %v1312, 4
        %v1376 = vmax.f32 %v1312, %v1375
        %v1377 = vrot.slane %v1376, 2
        %v1378 = vmax.f32 %v1376, %v1377
        %v1379 = vrot.slane %v1378, 1
        %v1380 = vmax.f32 %v1378, %v1379
        %v1381 = vrot.slane %v1313, 4
        %v1382 = vmax.f32 %v1313, %v1381
        %v1383 = vrot.slane %v1382, 2
        %v1384 = vmax.f32 %v1382, %v1383
        %v1385 = vrot.slane %v1384, 1
        %v1386 = vmax.f32 %v1384, %v1385
        %v1387 = vrot.slane %v1314, 4
        %v1388 = vmax.f32 %v1314, %v1387
        %v1389 = vrot.slane %v1388, 2
        %v1390 = vmax.f32 %v1388, %v1389
        %v1391 = vrot.slane %v1390, 1
        %v1392 = vmax.f32 %v1390, %v1391
        %v1393 = vrot.slane %v1315, 4
        %v1394 = vmax.f32 %v1315, %v1393
        %v1395 = vrot.slane %v1394, 2
        %v1396 = vmax.f32 %v1394, %v1395
        %v1397 = vrot.slane %v1396, 1
        %v1398 = vmax.f32 %v1396, %v1397
        %v1399 = vrot.slane %v1316, 4
        %v1400 = vmax.f32 %v1316, %v1399
        %v1401 = vrot.slane %v1400, 2
        %v1402 = vmax.f32 %v1400, %v1401
        %v1403 = vrot.slane %v1402, 1
        %v1404 = vmax.f32 %v1402, %v1403
        %v1405 = vrot.slane %v1317, 4
        %v1406 = vmax.f32 %v1317, %v1405
        %v1407 = vrot.slane %v1406, 2
        %v1408 = vmax.f32 %v1406, %v1407
        %v1409 = vrot.slane %v1408, 1
        %v1410 = vmax.f32 %v1408, %v1409
        %v1411 = vrot.slane %v1318, 4
        %v1412 = vmax.f32 %v1318, %v1411
        %v1413 = vrot.slane %v1412, 2
        %v1414 = vmax.f32 %v1412, %v1413
        %v1415 = vrot.slane %v1414, 1
        %v1416 = vmax.f32 %v1414, %v1415
        %v1433 = vcombine.low %v1326, %v1332
        %v1434 = vcombine.low %v1338, %v1344
        %v1436 = vunpack.c.l.s4 1983009808
        %v1437 = vunpack.c.0.s8 %v1436
        %v1438 = vlaneseq
        %v1439 = vshrl.u32 %v1438, 7
        %v1440 = vsub.s32 %v1437, %v1439
        %v1441 = vrot.slane %v1433, %v1440
        %v1443 = vunpack.c.l.s4 1983009808
        %v1444 = vunpack.c.0.s8 %v1443
        %v1445 = vlaneseq
        %v1446 = vshrl.u32 %v1445, 7
        %v1447 = vsub.s32 %v1444, %v1446
        %v1448 = vrot.slane %v1434, %v1447
        %v1449 = vcombine.low %v1441, %v1448
        %v1450 = vcombine.low %v1350, %v1356
        %v1451 = vcombine.low %v1362, %v1368
        %v1453 = vunpack.c.l.s4 1983009808
        %v1454 = vunpack.c.0.s8 %v1453
        %v1455 = vlaneseq
        %v1456 = vshrl.u32 %v1455, 7
        %v1457 = vsub.s32 %v1454, %v1456
        %v1458 = vrot.slane %v1450, %v1457
        %v1460 = vunpack.c.l.s4 1983009808
        %v1461 = vunpack.c.0.s8 %v1460
        %v1462 = vlaneseq
        %v1463 = vshrl.u32 %v1462, 7
        %v1464 = vsub.s32 %v1461, %v1463
        %v1465 = vrot.slane %v1451, %v1464
        %v1466 = vcombine.low %v1458, %v1465
        %v1467 = vcombine.low %v1374, %v1380
        %v1468 = vcombine.low %v1386, %v1392
        %v1470 = vunpack.c.l.s4 1983009808
        %v1471 = vunpack.c.0.s8 %v1470
        %v1472 = vlaneseq
        %v1473 = vshrl.u32 %v1472, 7
        %v1474 = vsub.s32 %v1471, %v1473
        %v1475 = vrot.slane %v1467, %v1474
        %v1477 = vunpack.c.l.s4 1983009808
        %v1478 = vunpack.c.0.s8 %v1477
        %v1479 = vlaneseq
        %v1480 = vshrl.u32 %v1479, 7
        %v1481 = vsub.s32 %v1478, %v1480
        %v1482 = vrot.slane %v1468, %v1481
        %v1483 = vcombine.low %v1475, %v1482
        %v1484 = vcombine.low %v1398, %v1404
        %v1485 = vcombine.low %v1410, %v1416
        %v1487 = vunpack.c.l.s4 1983009808
        %v1488 = vunpack.c.0.s8 %v1487
        %v1489 = vlaneseq
        %v1490 = vshrl.u32 %v1489, 7
        %v1491 = vsub.s32 %v1488, %v1490
        %v1492 = vrot.slane %v1484, %v1491
        %v1494 = vunpack.c.l.s4 1983009808
        %v1495 = vunpack.c.0.s8 %v1494
        %v1496 = vlaneseq
        %v1497 = vshrl.u32 %v1496, 7
        %v1498 = vsub.s32 %v1495, %v1497
        %v1499 = vrot.slane %v1485, %v1498
        %v1500 = vcombine.low %v1492, %v1499
        %vm1501 = vcmask 1044484
        %v1502 = vsel %vm1501, %v1449, %v1449
        %vm1503 = vcmask 1046534
        %v1504 = vsel %vm1503, %v1449, %v1502
        %v1505 = vrot.slane %v1483, 7
        %vm1506 = vcmask 1041409
        %v1507 = vsel %vm1506, %v1505, %v1504
        %vm1508 = vcmask 1043459
        %v1509 = vsel %vm1508, %v1505, %v1507
        %vm1510 = vcmask 1045509
        %v1511 = vsel %vm1510, %v1505, %v1509
        %vm1512 = vcmask 1047559
        %v1513 = vsel %vm1512, %v1505, %v1511
        %v1514 = vsel %vm1501, %v1466, %v1466
        %v1515 = vsel %vm1503, %v1466, %v1514
        %v1516 = vrot.slane %v1500, 7
        %v1517 = vsel %vm1506, %v1516, %v1515
        %v1518 = vsel %vm1508, %v1516, %v1517
        %v1519 = vsel %vm1510, %v1516, %v1518
        %v1520 = vsel %vm1512, %v1516, %v1519
        %v1523 = vmax.f32 %v1319, %v1513
        %v1524 = vmax.f32 %v1320, %v1520
        %1525 = vst [vmem:[#allocation2] sm:$0xff] %v1523
        %1526 = vst [vmem:[#allocation2 + $0x8] sm:$0xff] %v1524
        %p1527 = scmp.eq.s32.totalorder %s27, 1
        // Predicated region
        $region134: #{tpu_custom_call.1} parent=112 // pred_check
          %p1528 = pneg %p1527
        $region135: #{tpu_custom_call.1} parent=112 // pred_check_branch
          %1530 = sbr.rel (%p1528) target = $region137
        $region136: #{tpu_custom_call.1} parent=112 // pred_region
          %v1531 = vld [vmem:[#allocation2] sm:$0xff]
          %v1532 = vld [vmem:[#allocation2 + $0x8] sm:$0xff]
          %v1535 = vcombine.high %v1531, %v1531
          %v1537 = vunpack.c.l.s4 1983009808
          %v1538 = vunpack.c.0.s8 %v1537
          %v1539 = vlaneseq
          %v1540 = vshrl.u32 %v1539, 7
          %v1541 = vsub.s32 %v1538, %v1540
          %v1542 = vrot.slane %v1531, %v1541
          %v1544 = vunpack.c.l.s4 1983009808
          %v1545 = vunpack.c.0.s8 %v1544
          %v1546 = vlaneseq
          %v1547 = vshrl.u32 %v1546, 7
          %v1548 = vsub.s32 %v1545, %v1547
          %v1549 = vrot.slane %v1535, %v1548
          %v1550 = vcombine.high %v1542, %v1542
          %v1551 = vcombine.high %v1549, %v1549
          %v1552 = vcombine.high %v1532, %v1532
          %v1554 = vunpack.c.l.s4 1983009808
          %v1555 = vunpack.c.0.s8 %v1554
          %v1556 = vlaneseq
          %v1557 = vshrl.u32 %v1556, 7
          %v1558 = vsub.s32 %v1555, %v1557
          %v1559 = vrot.slane %v1532, %v1558
          %v1561 = vunpack.c.l.s4 1983009808
          %v1562 = vunpack.c.0.s8 %v1561
          %v1563 = vlaneseq
          %v1564 = vshrl.u32 %v1563, 7
          %v1565 = vsub.s32 %v1562, %v1564
          %v1566 = vrot.slane %v1552, %v1565
          %v1567 = vcombine.high %v1559, %v1559
          %v1568 = vcombine.high %v1566, %v1566
          %v1577 = vpack.c.bf16 %v1542, %v1542
          %v1578 = vpack.c.bf16 %v1550, %v1550
          %v1579 = vpack.c.bf16 %v1549, %v1549
          %v1580 = vpack.c.bf16 %v1551, %v1551
          %v1581 = vpack.c.bf16 %v1559, %v1559
          %v1582 = vpack.c.bf16 %v1567, %v1567
          %v1583 = vpack.c.bf16 %v1566, %v1566
          %v1584 = vpack.c.bf16 %v1568, %v1568
          %v1585 = vld [vmem:[#allocation6] sm:$0xff]
          %v1586 = vld [vmem:[#allocation6 + $0x8] sm:$0xff]
          %v1587 = vld [vmem:[#allocation6 + $0x10] sm:$0xff]
          %v1588 = vld [vmem:[#allocation6 + $0x18] sm:$0xff]
          %v1589 = vld [vmem:[#allocation6 + $0x20] sm:$0xff]
          %v1590 = vld [vmem:[#allocation6 + $0x28] sm:$0xff]
          %v1591 = vld [vmem:[#allocation6 + $0x30] sm:$0xff]
          %v1592 = vld [vmem:[#allocation6 + $0x38] sm:$0xff]
          %v1593 = vld [vmem:[#allocation6 + $0x40] sm:$0xff]
          %v1594 = vld [vmem:[#allocation6 + $0x48] sm:$0xff]
          %v1595 = vld [vmem:[#allocation6 + $0x50] sm:$0xff]
          %v1596 = vld [vmem:[#allocation6 + $0x58] sm:$0xff]
          %v1597 = vld [vmem:[#allocation6 + $0x60] sm:$0xff]
          %v1598 = vld [vmem:[#allocation6 + $0x68] sm:$0xff]
          %v1599 = vld [vmem:[#allocation6 + $0x70] sm:$0xff]
          %v1600 = vld [vmem:[#allocation6 + $0x78] sm:$0xff]
          %v1601 = vld [vmem:[#allocation6 + $0x80] sm:$0xff]
          %v1602 = vld [vmem:[#allocation6 + $0x88] sm:$0xff]
          %v1603 = vld [vmem:[#allocation6 + $0x90] sm:$0xff]
          %v1604 = vld [vmem:[#allocation6 + $0x98] sm:$0xff]
          %v1605 = vld [vmem:[#allocation6 + $0xa0] sm:$0xff]
          %v1606 = vld [vmem:[#allocation6 + $0xa8] sm:$0xff]
          %v1607 = vld [vmem:[#allocation6 + $0xb0] sm:$0xff]
          %v1608 = vld [vmem:[#allocation6 + $0xb8] sm:$0xff]
          %v1609 = vld [vmem:[#allocation6 + $0xc0] sm:$0xff]
          %v1610 = vld [vmem:[#allocation6 + $0xc8] sm:$0xff]
          %v1611 = vld [vmem:[#allocation6 + $0xd0] sm:$0xff]
          %v1612 = vld [vmem:[#allocation6 + $0xd8] sm:$0xff]
          %v1613 = vld [vmem:[#allocation6 + $0xe0] sm:$0xff]
          %v1614 = vld [vmem:[#allocation6 + $0xe8] sm:$0xff]
          %v1615 = vld [vmem:[#allocation6 + $0xf0] sm:$0xff]
          %v1616 = vld [vmem:[#allocation6 + $0xf8] sm:$0xff]
          %v1617 = vld [vmem:[#allocation6 + $0x100] sm:$0xff]
          %v1618 = vld [vmem:[#allocation6 + $0x108] sm:$0xff]
          %v1619 = vld [vmem:[#allocation6 + $0x110] sm:$0xff]
          %v1620 = vld [vmem:[#allocation6 + $0x118] sm:$0xff]
          %v1621 = vld [vmem:[#allocation6 + $0x120] sm:$0xff]
          %v1622 = vld [vmem:[#allocation6 + $0x128] sm:$0xff]
          %v1623 = vld [vmem:[#allocation6 + $0x130] sm:$0xff]
          %v1624 = vld [vmem:[#allocation6 + $0x138] sm:$0xff]
          %v1625 = vld [vmem:[#allocation6 + $0x140] sm:$0xff]
          %v1626 = vld [vmem:[#allocation6 + $0x148] sm:$0xff]
          %v1627 = vld [vmem:[#allocation6 + $0x150] sm:$0xff]
          %v1628 = vld [vmem:[#allocation6 + $0x158] sm:$0xff]
          %v1629 = vld [vmem:[#allocation6 + $0x160] sm:$0xff]
          %v1630 = vld [vmem:[#allocation6 + $0x168] sm:$0xff]
          %v1631 = vld [vmem:[#allocation6 + $0x170] sm:$0xff]
          %v1632 = vld [vmem:[#allocation6 + $0x178] sm:$0xff]
          %v1633 = vld [vmem:[#allocation6 + $0x180] sm:$0xff]
          %v1634 = vld [vmem:[#allocation6 + $0x188] sm:$0xff]
          %v1635 = vld [vmem:[#allocation6 + $0x190] sm:$0xff]
          %v1636 = vld [vmem:[#allocation6 + $0x198] sm:$0xff]
          %v1637 = vld [vmem:[#allocation6 + $0x1a0] sm:$0xff]
          %v1638 = vld [vmem:[#allocation6 + $0x1a8] sm:$0xff]
          %v1639 = vld [vmem:[#allocation6 + $0x1b0] sm:$0xff]
          %v1640 = vld [vmem:[#allocation6 + $0x1b8] sm:$0xff]
          %v1641 = vld [vmem:[#allocation6 + $0x1c0] sm:$0xff]
          %v1642 = vld [vmem:[#allocation6 + $0x1c8] sm:$0xff]
          %v1643 = vld [vmem:[#allocation6 + $0x1d0] sm:$0xff]
          %v1644 = vld [vmem:[#allocation6 + $0x1d8] sm:$0xff]
          %v1645 = vld [vmem:[#allocation6 + $0x1e0] sm:$0xff]
          %v1646 = vld [vmem:[#allocation6 + $0x1e8] sm:$0xff]
          %v1647 = vld [vmem:[#allocation6 + $0x1f0] sm:$0xff]
          %v1648 = vld [vmem:[#allocation6 + $0x1f8] sm:$0xff]
          %v1649 = vld [vmem:[#allocation6 + $0x200] sm:$0xff]
          %v1650 = vld [vmem:[#allocation6 + $0x208] sm:$0xff]
          %v1651 = vld [vmem:[#allocation6 + $0x210] sm:$0xff]
          %v1652 = vld [vmem:[#allocation6 + $0x218] sm:$0xff]
          %v1653 = vld [vmem:[#allocation6 + $0x220] sm:$0xff]
          %v1654 = vld [vmem:[#allocation6 + $0x228] sm:$0xff]
          %v1655 = vld [vmem:[#allocation6 + $0x230] sm:$0xff]
          %v1656 = vld [vmem:[#allocation6 + $0x238] sm:$0xff]
          %v1657 = vld [vmem:[#allocation6 + $0x240] sm:$0xff]
          %v1658 = vld [vmem:[#allocation6 + $0x248] sm:$0xff]
          %v1659 = vld [vmem:[#allocation6 + $0x250] sm:$0xff]
          %v1660 = vld [vmem:[#allocation6 + $0x258] sm:$0xff]
          %v1661 = vld [vmem:[#allocation6 + $0x260] sm:$0xff]
          %v1662 = vld [vmem:[#allocation6 + $0x268] sm:$0xff]
          %v1663 = vld [vmem:[#allocation6 + $0x270] sm:$0xff]
          %v1664 = vld [vmem:[#allocation6 + $0x278] sm:$0xff]
          %v1665 = vld [vmem:[#allocation6 + $0x280] sm:$0xff]
          %v1666 = vld [vmem:[#allocation6 + $0x288] sm:$0xff]
          %v1667 = vld [vmem:[#allocation6 + $0x290] sm:$0xff]
          %v1668 = vld [vmem:[#allocation6 + $0x298] sm:$0xff]
          %v1669 = vld [vmem:[#allocation6 + $0x2a0] sm:$0xff]
          %v1670 = vld [vmem:[#allocation6 + $0x2a8] sm:$0xff]
          %v1671 = vld [vmem:[#allocation6 + $0x2b0] sm:$0xff]
          %v1672 = vld [vmem:[#allocation6 + $0x2b8] sm:$0xff]
          %v1673 = vld [vmem:[#allocation6 + $0x2c0] sm:$0xff]
          %v1674 = vld [vmem:[#allocation6 + $0x2c8] sm:$0xff]
          %v1675 = vld [vmem:[#allocation6 + $0x2d0] sm:$0xff]
          %v1676 = vld [vmem:[#allocation6 + $0x2d8] sm:$0xff]
          %v1677 = vld [vmem:[#allocation6 + $0x2e0] sm:$0xff]
          %v1678 = vld [vmem:[#allocation6 + $0x2e8] sm:$0xff]
          %v1679 = vld [vmem:[#allocation6 + $0x2f0] sm:$0xff]
          %v1680 = vld [vmem:[#allocation6 + $0x2f8] sm:$0xff]
          %v1681 = vld [vmem:[#allocation6 + $0x300] sm:$0xff]
          %v1682 = vld [vmem:[#allocation6 + $0x308] sm:$0xff]
          %v1683 = vld [vmem:[#allocation6 + $0x310] sm:$0xff]
          %v1684 = vld [vmem:[#allocation6 + $0x318] sm:$0xff]
          %v1685 = vld [vmem:[#allocation6 + $0x320] sm:$0xff]
          %v1686 = vld [vmem:[#allocation6 + $0x328] sm:$0xff]
          %v1687 = vld [vmem:[#allocation6 + $0x330] sm:$0xff]
          %v1688 = vld [vmem:[#allocation6 + $0x338] sm:$0xff]
          %v1689 = vld [vmem:[#allocation6 + $0x340] sm:$0xff]
          %v1690 = vld [vmem:[#allocation6 + $0x348] sm:$0xff]
          %v1691 = vld [vmem:[#allocation6 + $0x350] sm:$0xff]
          %v1692 = vld [vmem:[#allocation6 + $0x358] sm:$0xff]
          %v1693 = vld [vmem:[#allocation6 + $0x360] sm:$0xff]
          %v1694 = vld [vmem:[#allocation6 + $0x368] sm:$0xff]
          %v1695 = vld [vmem:[#allocation6 + $0x370] sm:$0xff]
          %v1696 = vld [vmem:[#allocation6 + $0x378] sm:$0xff]
          %v1697 = vld [vmem:[#allocation6 + $0x380] sm:$0xff]
          %v1698 = vld [vmem:[#allocation6 + $0x388] sm:$0xff]
          %v1699 = vld [vmem:[#allocation6 + $0x390] sm:$0xff]
          %v1700 = vld [vmem:[#allocation6 + $0x398] sm:$0xff]
          %v1701 = vld [vmem:[#allocation6 + $0x3a0] sm:$0xff]
          %v1702 = vld [vmem:[#allocation6 + $0x3a8] sm:$0xff]
          %v1703 = vld [vmem:[#allocation6 + $0x3b0] sm:$0xff]
          %v1704 = vld [vmem:[#allocation6 + $0x3b8] sm:$0xff]
          %v1705 = vld [vmem:[#allocation6 + $0x3c0] sm:$0xff]
          %v1706 = vld [vmem:[#allocation6 + $0x3c8] sm:$0xff]
          %v1707 = vld [vmem:[#allocation6 + $0x3d0] sm:$0xff]
          %v1708 = vld [vmem:[#allocation6 + $0x3d8] sm:$0xff]
          %v1709 = vld [vmem:[#allocation6 + $0x3e0] sm:$0xff]
          %v1710 = vld [vmem:[#allocation6 + $0x3e8] sm:$0xff]
          %v1711 = vld [vmem:[#allocation6 + $0x3f0] sm:$0xff]
          %v1712 = vld [vmem:[#allocation6 + $0x3f8] sm:$0xff]
          %v1713 = vld [vmem:[#allocation6 + $0x400] sm:$0xff]
          %v1714 = vld [vmem:[#allocation6 + $0x408] sm:$0xff]
          %v1715 = vld [vmem:[#allocation6 + $0x410] sm:$0xff]
          %v1716 = vld [vmem:[#allocation6 + $0x418] sm:$0xff]
          %v1717 = vld [vmem:[#allocation6 + $0x420] sm:$0xff]
          %v1718 = vld [vmem:[#allocation6 + $0x428] sm:$0xff]
          %v1719 = vld [vmem:[#allocation6 + $0x430] sm:$0xff]
          %v1720 = vld [vmem:[#allocation6 + $0x438] sm:$0xff]
          %v1721 = vld [vmem:[#allocation6 + $0x440] sm:$0xff]
          %v1722 = vld [vmem:[#allocation6 + $0x448] sm:$0xff]
          %v1723 = vld [vmem:[#allocation6 + $0x450] sm:$0xff]
          %v1724 = vld [vmem:[#allocation6 + $0x458] sm:$0xff]
          %v1725 = vld [vmem:[#allocation6 + $0x460] sm:$0xff]
          %v1726 = vld [vmem:[#allocation6 + $0x468] sm:$0xff]
          %v1727 = vld [vmem:[#allocation6 + $0x470] sm:$0xff]
          %v1728 = vld [vmem:[#allocation6 + $0x478] sm:$0xff]
          %v1729 = vld [vmem:[#allocation6 + $0x480] sm:$0xff]
          %v1730 = vld [vmem:[#allocation6 + $0x488] sm:$0xff]
          %v1731 = vld [vmem:[#allocation6 + $0x490] sm:$0xff]
          %v1732 = vld [vmem:[#allocation6 + $0x498] sm:$0xff]
          %v1733 = vld [vmem:[#allocation6 + $0x4a0] sm:$0xff]
          %v1734 = vld [vmem:[#allocation6 + $0x4a8] sm:$0xff]
          %v1735 = vld [vmem:[#allocation6 + $0x4b0] sm:$0xff]
          %v1736 = vld [vmem:[#allocation6 + $0x4b8] sm:$0xff]
          %v1737 = vld [vmem:[#allocation6 + $0x4c0] sm:$0xff]
          %v1738 = vld [vmem:[#allocation6 + $0x4c8] sm:$0xff]
          %v1739 = vld [vmem:[#allocation6 + $0x4d0] sm:$0xff]
          %v1740 = vld [vmem:[#allocation6 + $0x4d8] sm:$0xff]
          %v1741 = vld [vmem:[#allocation6 + $0x4e0] sm:$0xff]
          %v1742 = vld [vmem:[#allocation6 + $0x4e8] sm:$0xff]
          %v1743 = vld [vmem:[#allocation6 + $0x4f0] sm:$0xff]
          %v1744 = vld [vmem:[#allocation6 + $0x4f8] sm:$0xff]
          %v1745 = vld [vmem:[#allocation6 + $0x500] sm:$0xff]
          %v1746 = vld [vmem:[#allocation6 + $0x508] sm:$0xff]
          %v1747 = vld [vmem:[#allocation6 + $0x510] sm:$0xff]
          %v1748 = vld [vmem:[#allocation6 + $0x518] sm:$0xff]
          %v1749 = vld [vmem:[#allocation6 + $0x520] sm:$0xff]
          %v1750 = vld [vmem:[#allocation6 + $0x528] sm:$0xff]
          %v1751 = vld [vmem:[#allocation6 + $0x530] sm:$0xff]
          %v1752 = vld [vmem:[#allocation6 + $0x538] sm:$0xff]
          %v1753 = vld [vmem:[#allocation6 + $0x540] sm:$0xff]
          %v1754 = vld [vmem:[#allocation6 + $0x548] sm:$0xff]
          %v1755 = vld [vmem:[#allocation6 + $0x550] sm:$0xff]
          %v1756 = vld [vmem:[#allocation6 + $0x558] sm:$0xff]
          %v1757 = vld [vmem:[#allocation6 + $0x560] sm:$0xff]
          %v1758 = vld [vmem:[#allocation6 + $0x568] sm:$0xff]
          %v1759 = vld [vmem:[#allocation6 + $0x570] sm:$0xff]
          %v1760 = vld [vmem:[#allocation6 + $0x578] sm:$0xff]
          %v1761 = vld [vmem:[#allocation6 + $0x580] sm:$0xff]
          %v1762 = vld [vmem:[#allocation6 + $0x588] sm:$0xff]
          %v1763 = vld [vmem:[#allocation6 + $0x590] sm:$0xff]
          %v1764 = vld [vmem:[#allocation6 + $0x598] sm:$0xff]
          %v1765 = vld [vmem:[#allocation6 + $0x5a0] sm:$0xff]
          %v1766 = vld [vmem:[#allocation6 + $0x5a8] sm:$0xff]
          %v1767 = vld [vmem:[#allocation6 + $0x5b0] sm:$0xff]
          %v1768 = vld [vmem:[#allocation6 + $0x5b8] sm:$0xff]
          %v1769 = vld [vmem:[#allocation6 + $0x5c0] sm:$0xff]
          %v1770 = vld [vmem:[#allocation6 + $0x5c8] sm:$0xff]
          %v1771 = vld [vmem:[#allocation6 + $0x5d0] sm:$0xff]
          %v1772 = vld [vmem:[#allocation6 + $0x5d8] sm:$0xff]
          %v1773 = vld [vmem:[#allocation6 + $0x5e0] sm:$0xff]
          %v1774 = vld [vmem:[#allocation6 + $0x5e8] sm:$0xff]
          %v1775 = vld [vmem:[#allocation6 + $0x5f0] sm:$0xff]
          %v1776 = vld [vmem:[#allocation6 + $0x5f8] sm:$0xff]
          %v1777 = vld [vmem:[#allocation6 + $0x600] sm:$0xff]
          %v1778 = vld [vmem:[#allocation6 + $0x608] sm:$0xff]
          %v1779 = vld [vmem:[#allocation6 + $0x610] sm:$0xff]
          %v1780 = vld [vmem:[#allocation6 + $0x618] sm:$0xff]
          %v1781 = vld [vmem:[#allocation6 + $0x620] sm:$0xff]
          %v1782 = vld [vmem:[#allocation6 + $0x628] sm:$0xff]
          %v1783 = vld [vmem:[#allocation6 + $0x630] sm:$0xff]
          %v1784 = vld [vmem:[#allocation6 + $0x638] sm:$0xff]
          %v1785 = vld [vmem:[#allocation6 + $0x640] sm:$0xff]
          %v1786 = vld [vmem:[#allocation6 + $0x648] sm:$0xff]
          %v1787 = vld [vmem:[#allocation6 + $0x650] sm:$0xff]
          %v1788 = vld [vmem:[#allocation6 + $0x658] sm:$0xff]
          %v1789 = vld [vmem:[#allocation6 + $0x660] sm:$0xff]
          %v1790 = vld [vmem:[#allocation6 + $0x668] sm:$0xff]
          %v1791 = vld [vmem:[#allocation6 + $0x670] sm:$0xff]
          %v1792 = vld [vmem:[#allocation6 + $0x678] sm:$0xff]
          %v1793 = vld [vmem:[#allocation6 + $0x680] sm:$0xff]
          %v1794 = vld [vmem:[#allocation6 + $0x688] sm:$0xff]
          %v1795 = vld [vmem:[#allocation6 + $0x690] sm:$0xff]
          %v1796 = vld [vmem:[#allocation6 + $0x698] sm:$0xff]
          %v1797 = vld [vmem:[#allocation6 + $0x6a0] sm:$0xff]
          %v1798 = vld [vmem:[#allocation6 + $0x6a8] sm:$0xff]
          %v1799 = vld [vmem:[#allocation6 + $0x6b0] sm:$0xff]
          %v1800 = vld [vmem:[#allocation6 + $0x6b8] sm:$0xff]
          %v1801 = vld [vmem:[#allocation6 + $0x6c0] sm:$0xff]
          %v1802 = vld [vmem:[#allocation6 + $0x6c8] sm:$0xff]
          %v1803 = vld [vmem:[#allocation6 + $0x6d0] sm:$0xff]
          %v1804 = vld [vmem:[#allocation6 + $0x6d8] sm:$0xff]
          %v1805 = vld [vmem:[#allocation6 + $0x6e0] sm:$0xff]
          %v1806 = vld [vmem:[#allocation6 + $0x6e8] sm:$0xff]
          %v1807 = vld [vmem:[#allocation6 + $0x6f0] sm:$0xff]
          %v1808 = vld [vmem:[#allocation6 + $0x6f8] sm:$0xff]
          %v1809 = vld [vmem:[#allocation6 + $0x700] sm:$0xff]
          %v1810 = vld [vmem:[#allocation6 + $0x708] sm:$0xff]
          %v1811 = vld [vmem:[#allocation6 + $0x710] sm:$0xff]
          %v1812 = vld [vmem:[#allocation6 + $0x718] sm:$0xff]
          %v1813 = vld [vmem:[#allocation6 + $0x720] sm:$0xff]
          %v1814 = vld [vmem:[#allocation6 + $0x728] sm:$0xff]
          %v1815 = vld [vmem:[#allocation6 + $0x730] sm:$0xff]
          %v1816 = vld [vmem:[#allocation6 + $0x738] sm:$0xff]
          %v1817 = vld [vmem:[#allocation6 + $0x740] sm:$0xff]
          %v1818 = vld [vmem:[#allocation6 + $0x748] sm:$0xff]
          %v1819 = vld [vmem:[#allocation6 + $0x750] sm:$0xff]
          %v1820 = vld [vmem:[#allocation6 + $0x758] sm:$0xff]
          %v1821 = vld [vmem:[#allocation6 + $0x760] sm:$0xff]
          %v1822 = vld [vmem:[#allocation6 + $0x768] sm:$0xff]
          %v1823 = vld [vmem:[#allocation6 + $0x770] sm:$0xff]
          %v1824 = vld [vmem:[#allocation6 + $0x778] sm:$0xff]
          %v1825 = vld [vmem:[#allocation6 + $0x780] sm:$0xff]
          %v1826 = vld [vmem:[#allocation6 + $0x788] sm:$0xff]
          %v1827 = vld [vmem:[#allocation6 + $0x790] sm:$0xff]
          %v1828 = vld [vmem:[#allocation6 + $0x798] sm:$0xff]
          %v1829 = vld [vmem:[#allocation6 + $0x7a0] sm:$0xff]
          %v1830 = vld [vmem:[#allocation6 + $0x7a8] sm:$0xff]
          %v1831 = vld [vmem:[#allocation6 + $0x7b0] sm:$0xff]
          %v1832 = vld [vmem:[#allocation6 + $0x7b8] sm:$0xff]
          %v1833 = vld [vmem:[#allocation6 + $0x7c0] sm:$0xff]
          %v1834 = vld [vmem:[#allocation6 + $0x7c8] sm:$0xff]
          %v1835 = vld [vmem:[#allocation6 + $0x7d0] sm:$0xff]
          %v1836 = vld [vmem:[#allocation6 + $0x7d8] sm:$0xff]
          %v1837 = vld [vmem:[#allocation6 + $0x7e0] sm:$0xff]
          %v1838 = vld [vmem:[#allocation6 + $0x7e8] sm:$0xff]
          %v1839 = vld [vmem:[#allocation6 + $0x7f0] sm:$0xff]
          %v1840 = vld [vmem:[#allocation6 + $0x7f8] sm:$0xff]
          %v1841 = vld [vmem:[%s8] sm:$0xf]
          %v1843 = vlaneseq
          %v1844 = vshrl.u32 %v1843, 7
          %v1845 = vsub.s32 0, %v1844
          %v1846 = vrot.slane %v1841, %v1845
          %v1847 = vlaneseq
          %v1848 = vshrl.u32 %v1847, 7
          %v1849 = vsub.s32 1, %v1848
          %v1850 = vrot.slane %v1841, %v1849
          %v1851 = vlaneseq
          %v1852 = vshrl.u32 %v1851, 7
          %v1853 = vsub.s32 2, %v1852
          %v1854 = vrot.slane %v1841, %v1853
          %v1855 = vlaneseq
          %v1856 = vshrl.u32 %v1855, 7
          %v1857 = vsub.s32 3, %v1856
          %v1858 = vrot.slane %v1841, %v1857
          %v2119 = vunpack.c.l.b16 %v1585
          %v2120 = vunpack.c.h.b16 %v1585
          %v2121 = vunpack.c.l.b16 %v1586
          %v2122 = vunpack.c.h.b16 %v1586
          %v2123 = vunpack.c.l.b16 %v1587
          %v2124 = vunpack.c.h.b16 %v1587
          %v2125 = vunpack.c.l.b16 %v1588
          %v2126 = vunpack.c.h.b16 %v1588
          %v2127 = vunpack.c.l.b16 %v1589
          %v2128 = vunpack.c.h.b16 %v1589
          %v2129 = vunpack.c.l.b16 %v1590
          %v2130 = vunpack.c.h.b16 %v1590
          %v2131 = vunpack.c.l.b16 %v1591
          %v2132 = vunpack.c.h.b16 %v1591
          %v2133 = vunpack.c.l.b16 %v1592
          %v2134 = vunpack.c.h.b16 %v1592
          %v2135 = vunpack.c.l.b16 %v1593
          %v2136 = vunpack.c.h.b16 %v1593
          %v2137 = vunpack.c.l.b16 %v1594
          %v2138 = vunpack.c.h.b16 %v1594
          %v2139 = vunpack.c.l.b16 %v1595
          %v2140 = vunpack.c.h.b16 %v1595
          %v2141 = vunpack.c.l.b16 %v1596
          %v2142 = vunpack.c.h.b16 %v1596
          %v2143 = vunpack.c.l.b16 %v1597
          %v2144 = vunpack.c.h.b16 %v1597
          %v2145 = vunpack.c.l.b16 %v1598
          %v2146 = vunpack.c.h.b16 %v1598
          %v2147 = vunpack.c.l.b16 %v1599
          %v2148 = vunpack.c.h.b16 %v1599
          %v2149 = vunpack.c.l.b16 %v1600
          %v2150 = vunpack.c.h.b16 %v1600
          %v2151 = vunpack.c.l.b16 %v1601
          %v2152 = vunpack.c.h.b16 %v1601
          %v2153 = vunpack.c.l.b16 %v1602
          %v2154 = vunpack.c.h.b16 %v1602
          %v2155 = vunpack.c.l.b16 %v1603
          %v2156 = vunpack.c.h.b16 %v1603
          %v2157 = vunpack.c.l.b16 %v1604
          %v2158 = vunpack.c.h.b16 %v1604
          %v2159 = vunpack.c.l.b16 %v1605
          %v2160 = vunpack.c.h.b16 %v1605
          %v2161 = vunpack.c.l.b16 %v1606
          %v2162 = vunpack.c.h.b16 %v1606
          %v2163 = vunpack.c.l.b16 %v1607
          %v2164 = vunpack.c.h.b16 %v1607
          %v2165 = vunpack.c.l.b16 %v1608
          %v2166 = vunpack.c.h.b16 %v1608
          %v2167 = vunpack.c.l.b16 %v1609
          %v2168 = vunpack.c.h.b16 %v1609
          %v2169 = vunpack.c.l.b16 %v1610
          %v2170 = vunpack.c.h.b16 %v1610
          %v2171 = vunpack.c.l.b16 %v1611
          %v2172 = vunpack.c.h.b16 %v1611
          %v2173 = vunpack.c.l.b16 %v1612
          %v2174 = vunpack.c.h.b16 %v1612
          %v2175 = vunpack.c.l.b16 %v1613
          %v2176 = vunpack.c.h.b16 %v1613
          %v2177 = vunpack.c.l.b16 %v1614
          %v2178 = vunpack.c.h.b16 %v1614
          %v2179 = vunpack.c.l.b16 %v1615
          %v2180 = vunpack.c.h.b16 %v1615
          %v2181 = vunpack.c.l.b16 %v1616
          %v2182 = vunpack.c.h.b16 %v1616
          %v2183 = vunpack.c.l.b16 %v1617
          %v2184 = vunpack.c.h.b16 %v1617
          %v2185 = vunpack.c.l.b16 %v1618
          %v2186 = vunpack.c.h.b16 %v1618
          %v2187 = vunpack.c.l.b16 %v1619
          %v2188 = vunpack.c.h.b16 %v1619
          %v2189 = vunpack.c.l.b16 %v1620
          %v2190 = vunpack.c.h.b16 %v1620
          %v2191 = vunpack.c.l.b16 %v1621
          %v2192 = vunpack.c.h.b16 %v1621
          %v2193 = vunpack.c.l.b16 %v1622
          %v2194 = vunpack.c.h.b16 %v1622
          %v2195 = vunpack.c.l.b16 %v1623
          %v2196 = vunpack.c.h.b16 %v1623
          %v2197 = vunpack.c.l.b16 %v1624
          %v2198 = vunpack.c.h.b16 %v1624
          %v2199 = vunpack.c.l.b16 %v1625
          %v2200 = vunpack.c.h.b16 %v1625
          %v2201 = vunpack.c.l.b16 %v1626
          %v2202 = vunpack.c.h.b16 %v1626
          %v2203 = vunpack.c.l.b16 %v1627
          %v2204 = vunpack.c.h.b16 %v1627
          %v2205 = vunpack.c.l.b16 %v1628
          %v2206 = vunpack.c.h.b16 %v1628
          %v2207 = vunpack.c.l.b16 %v1629
          %v2208 = vunpack.c.h.b16 %v1629
          %v2209 = vunpack.c.l.b16 %v1630
          %v2210 = vunpack.c.h.b16 %v1630
          %v2211 = vunpack.c.l.b16 %v1631
          %v2212 = vunpack.c.h.b16 %v1631
          %v2213 = vunpack.c.l.b16 %v1632
          %v2214 = vunpack.c.h.b16 %v1632
          %v2215 = vunpack.c.l.b16 %v1633
          %v2216 = vunpack.c.h.b16 %v1633
          %v2217 = vunpack.c.l.b16 %v1634
          %v2218 = vunpack.c.h.b16 %v1634
          %v2219 = vunpack.c.l.b16 %v1635
          %v2220 = vunpack.c.h.b16 %v1635
          %v2221 = vunpack.c.l.b16 %v1636
          %v2222 = vunpack.c.h.b16 %v1636
          %v2223 = vunpack.c.l.b16 %v1637
          %v2224 = vunpack.c.h.b16 %v1637
          %v2225 = vunpack.c.l.b16 %v1638
          %v2226 = vunpack.c.h.b16 %v1638
          %v2227 = vunpack.c.l.b16 %v1639
          %v2228 = vunpack.c.h.b16 %v1639
          %v2229 = vunpack.c.l.b16 %v1640
          %v2230 = vunpack.c.h.b16 %v1640
          %v2231 = vunpack.c.l.b16 %v1641
          %v2232 = vunpack.c.h.b16 %v1641
          %v2233 = vunpack.c.l.b16 %v1642
          %v2234 = vunpack.c.h.b16 %v1642
          %v2235 = vunpack.c.l.b16 %v1643
          %v2236 = vunpack.c.h.b16 %v1643
          %v2237 = vunpack.c.l.b16 %v1644
          %v2238 = vunpack.c.h.b16 %v1644
          %v2239 = vunpack.c.l.b16 %v1645
          %v2240 = vunpack.c.h.b16 %v1645
          %v2241 = vunpack.c.l.b16 %v1646
          %v2242 = vunpack.c.h.b16 %v1646
          %v2243 = vunpack.c.l.b16 %v1647
          %v2244 = vunpack.c.h.b16 %v1647
          %v2245 = vunpack.c.l.b16 %v1648
          %v2246 = vunpack.c.h.b16 %v1648
          %v2247 = vunpack.c.l.b16 %v1649
          %v2248 = vunpack.c.h.b16 %v1649
          %v2249 = vunpack.c.l.b16 %v1650
          %v2250 = vunpack.c.h.b16 %v1650
          %v2251 = vunpack.c.l.b16 %v1651
          %v2252 = vunpack.c.h.b16 %v1651
          %v2253 = vunpack.c.l.b16 %v1652
          %v2254 = vunpack.c.h.b16 %v1652
          %v2255 = vunpack.c.l.b16 %v1653
          %v2256 = vunpack.c.h.b16 %v1653
          %v2257 = vunpack.c.l.b16 %v1654
          %v2258 = vunpack.c.h.b16 %v1654
          %v2259 = vunpack.c.l.b16 %v1655
          %v2260 = vunpack.c.h.b16 %v1655
          %v2261 = vunpack.c.l.b16 %v1656
          %v2262 = vunpack.c.h.b16 %v1656
          %v2263 = vunpack.c.l.b16 %v1657
          %v2264 = vunpack.c.h.b16 %v1657
          %v2265 = vunpack.c.l.b16 %v1658
          %v2266 = vunpack.c.h.b16 %v1658
          %v2267 = vunpack.c.l.b16 %v1659
          %v2268 = vunpack.c.h.b16 %v1659
          %v2269 = vunpack.c.l.b16 %v1660
          %v2270 = vunpack.c.h.b16 %v1660
          %v2271 = vunpack.c.l.b16 %v1661
          %v2272 = vunpack.c.h.b16 %v1661
          %v2273 = vunpack.c.l.b16 %v1662
          %v2274 = vunpack.c.h.b16 %v1662
          %v2275 = vunpack.c.l.b16 %v1663
          %v2276 = vunpack.c.h.b16 %v1663
          %v2277 = vunpack.c.l.b16 %v1664
          %v2278 = vunpack.c.h.b16 %v1664
          %v2279 = vunpack.c.l.b16 %v1665
          %v2280 = vunpack.c.h.b16 %v1665
          %v2281 = vunpack.c.l.b16 %v1666
          %v2282 = vunpack.c.h.b16 %v1666
          %v2283 = vunpack.c.l.b16 %v1667
          %v2284 = vunpack.c.h.b16 %v1667
          %v2285 = vunpack.c.l.b16 %v1668
          %v2286 = vunpack.c.h.b16 %v1668
          %v2287 = vunpack.c.l.b16 %v1669
          %v2288 = vunpack.c.h.b16 %v1669
          %v2289 = vunpack.c.l.b16 %v1670
          %v2290 = vunpack.c.h.b16 %v1670
          %v2291 = vunpack.c.l.b16 %v1671
          %v2292 = vunpack.c.h.b16 %v1671
          %v2293 = vunpack.c.l.b16 %v1672
          %v2294 = vunpack.c.h.b16 %v1672
          %v2295 = vunpack.c.l.b16 %v1673
          %v2296 = vunpack.c.h.b16 %v1673
          %v2297 = vunpack.c.l.b16 %v1674
          %v2298 = vunpack.c.h.b16 %v1674
          %v2299 = vunpack.c.l.b16 %v1675
          %v2300 = vunpack.c.h.b16 %v1675
          %v2301 = vunpack.c.l.b16 %v1676
          %v2302 = vunpack.c.h.b16 %v1676
          %v2303 = vunpack.c.l.b16 %v1677
          %v2304 = vunpack.c.h.b16 %v1677
          %v2305 = vunpack.c.l.b16 %v1678
          %v2306 = vunpack.c.h.b16 %v1678
          %v2307 = vunpack.c.l.b16 %v1679
          %v2308 = vunpack.c.h.b16 %v1679
          %v2309 = vunpack.c.l.b16 %v1680
          %v2310 = vunpack.c.h.b16 %v1680
          %v2311 = vunpack.c.l.b16 %v1681
          %v2312 = vunpack.c.h.b16 %v1681
          %v2313 = vunpack.c.l.b16 %v1682
          %v2314 = vunpack.c.h.b16 %v1682
          %v2315 = vunpack.c.l.b16 %v1683
          %v2316 = vunpack.c.h.b16 %v1683
          %v2317 = vunpack.c.l.b16 %v1684
          %v2318 = vunpack.c.h.b16 %v1684
          %v2319 = vunpack.c.l.b16 %v1685
          %v2320 = vunpack.c.h.b16 %v1685
          %v2321 = vunpack.c.l.b16 %v1686
          %v2322 = vunpack.c.h.b16 %v1686
          %v2323 = vunpack.c.l.b16 %v1687
          %v2324 = vunpack.c.h.b16 %v1687
          %v2325 = vunpack.c.l.b16 %v1688
          %v2326 = vunpack.c.h.b16 %v1688
          %v2327 = vunpack.c.l.b16 %v1689
          %v2328 = vunpack.c.h.b16 %v1689
          %v2329 = vunpack.c.l.b16 %v1690
          %v2330 = vunpack.c.h.b16 %v1690
          %v2331 = vunpack.c.l.b16 %v1691
          %v2332 = vunpack.c.h.b16 %v1691
          %v2333 = vunpack.c.l.b16 %v1692
          %v2334 = vunpack.c.h.b16 %v1692
          %v2335 = vunpack.c.l.b16 %v1693
          %v2336 = vunpack.c.h.b16 %v1693
          %v2337 = vunpack.c.l.b16 %v1694
          %v2338 = vunpack.c.h.b16 %v1694
          %v2339 = vunpack.c.l.b16 %v1695
          %v2340 = vunpack.c.h.b16 %v1695
          %v2341 = vunpack.c.l.b16 %v1696
          %v2342 = vunpack.c.h.b16 %v1696
          %v2343 = vunpack.c.l.b16 %v1697
          %v2344 = vunpack.c.h.b16 %v1697
          %v2345 = vunpack.c.l.b16 %v1698
          %v2346 = vunpack.c.h.b16 %v1698
          %v2347 = vunpack.c.l.b16 %v1699
          %v2348 = vunpack.c.h.b16 %v1699
          %v2349 = vunpack.c.l.b16 %v1700
          %v2350 = vunpack.c.h.b16 %v1700
          %v2351 = vunpack.c.l.b16 %v1701
          %v2352 = vunpack.c.h.b16 %v1701
          %v2353 = vunpack.c.l.b16 %v1702
          %v2354 = vunpack.c.h.b16 %v1702
          %v2355 = vunpack.c.l.b16 %v1703
          %v2356 = vunpack.c.h.b16 %v1703
          %v2357 = vunpack.c.l.b16 %v1704
          %v2358 = vunpack.c.h.b16 %v1704
          %v2359 = vunpack.c.l.b16 %v1705
          %v2360 = vunpack.c.h.b16 %v1705
          %v2361 = vunpack.c.l.b16 %v1706
          %v2362 = vunpack.c.h.b16 %v1706
          %v2363 = vunpack.c.l.b16 %v1707
          %v2364 = vunpack.c.h.b16 %v1707
          %v2365 = vunpack.c.l.b16 %v1708
          %v2366 = vunpack.c.h.b16 %v1708
          %v2367 = vunpack.c.l.b16 %v1709
          %v2368 = vunpack.c.h.b16 %v1709
          %v2369 = vunpack.c.l.b16 %v1710
          %v2370 = vunpack.c.h.b16 %v1710
          %v2371 = vunpack.c.l.b16 %v1711
          %v2372 = vunpack.c.h.b16 %v1711
          %v2373 = vunpack.c.l.b16 %v1712
          %v2374 = vunpack.c.h.b16 %v1712
          %v2375 = vunpack.c.l.b16 %v1713
          %v2376 = vunpack.c.h.b16 %v1713
          %v2377 = vunpack.c.l.b16 %v1714
          %v2378 = vunpack.c.h.b16 %v1714
          %v2379 = vunpack.c.l.b16 %v1715
          %v2380 = vunpack.c.h.b16 %v1715
          %v2381 = vunpack.c.l.b16 %v1716
          %v2382 = vunpack.c.h.b16 %v1716
          %v2383 = vunpack.c.l.b16 %v1717
          %v2384 = vunpack.c.h.b16 %v1717
          %v2385 = vunpack.c.l.b16 %v1718
          %v2386 = vunpack.c.h.b16 %v1718
          %v2387 = vunpack.c.l.b16 %v1719
          %v2388 = vunpack.c.h.b16 %v1719
          %v2389 = vunpack.c.l.b16 %v1720
          %v2390 = vunpack.c.h.b16 %v1720
          %v2391 = vunpack.c.l.b16 %v1721
          %v2392 = vunpack.c.h.b16 %v1721
          %v2393 = vunpack.c.l.b16 %v1722
          %v2394 = vunpack.c.h.b16 %v1722
          %v2395 = vunpack.c.l.b16 %v1723
          %v2396 = vunpack.c.h.b16 %v1723
          %v2397 = vunpack.c.l.b16 %v1724
          %v2398 = vunpack.c.h.b16 %v1724
          %v2399 = vunpack.c.l.b16 %v1725
          %v2400 = vunpack.c.h.b16 %v1725
          %v2401 = vunpack.c.l.b16 %v1726
          %v2402 = vunpack.c.h.b16 %v1726
          %v2403 = vunpack.c.l.b16 %v1727
          %v2404 = vunpack.c.h.b16 %v1727
          %v2405 = vunpack.c.l.b16 %v1728
          %v2406 = vunpack.c.h.b16 %v1728
          %v2407 = vunpack.c.l.b16 %v1729
          %v2408 = vunpack.c.h.b16 %v1729
          %v2409 = vunpack.c.l.b16 %v1730
          %v2410 = vunpack.c.h.b16 %v1730
          %v2411 = vunpack.c.l.b16 %v1731
          %v2412 = vunpack.c.h.b16 %v1731
          %v2413 = vunpack.c.l.b16 %v1732
          %v2414 = vunpack.c.h.b16 %v1732
          %v2415 = vunpack.c.l.b16 %v1733
          %v2416 = vunpack.c.h.b16 %v1733
          %v2417 = vunpack.c.l.b16 %v1734
          %v2418 = vunpack.c.h.b16 %v1734
          %v2419 = vunpack.c.l.b16 %v1735
          %v2420 = vunpack.c.h.b16 %v1735
          %v2421 = vunpack.c.l.b16 %v1736
          %v2422 = vunpack.c.h.b16 %v1736
          %v2423 = vunpack.c.l.b16 %v1737
          %v2424 = vunpack.c.h.b16 %v1737
          %v2425 = vunpack.c.l.b16 %v1738
          %v2426 = vunpack.c.h.b16 %v1738
          %v2427 = vunpack.c.l.b16 %v1739
          %v2428 = vunpack.c.h.b16 %v1739
          %v2429 = vunpack.c.l.b16 %v1740
          %v2430 = vunpack.c.h.b16 %v1740
          %v2431 = vunpack.c.l.b16 %v1741
          %v2432 = vunpack.c.h.b16 %v1741
          %v2433 = vunpack.c.l.b16 %v1742
          %v2434 = vunpack.c.h.b16 %v1742
          %v2435 = vunpack.c.l.b16 %v1743
          %v2436 = vunpack.c.h.b16 %v1743
          %v2437 = vunpack.c.l.b16 %v1744
          %v2438 = vunpack.c.h.b16 %v1744
          %v2439 = vunpack.c.l.b16 %v1745
          %v2440 = vunpack.c.h.b16 %v1745
          %v2441 = vunpack.c.l.b16 %v1746
          %v2442 = vunpack.c.h.b16 %v1746
          %v2443 = vunpack.c.l.b16 %v1747
          %v2444 = vunpack.c.h.b16 %v1747
          %v2445 = vunpack.c.l.b16 %v1748
          %v2446 = vunpack.c.h.b16 %v1748
          %v2447 = vunpack.c.l.b16 %v1749
          %v2448 = vunpack.c.h.b16 %v1749
          %v2449 = vunpack.c.l.b16 %v1750
          %v2450 = vunpack.c.h.b16 %v1750
          %v2451 = vunpack.c.l.b16 %v1751
          %v2452 = vunpack.c.h.b16 %v1751
          %v2453 = vunpack.c.l.b16 %v1752
          %v2454 = vunpack.c.h.b16 %v1752
          %v2455 = vunpack.c.l.b16 %v1753
          %v2456 = vunpack.c.h.b16 %v1753
          %v2457 = vunpack.c.l.b16 %v1754
          %v2458 = vunpack.c.h.b16 %v1754
          %v2459 = vunpack.c.l.b16 %v1755
          %v2460 = vunpack.c.h.b16 %v1755
          %v2461 = vunpack.c.l.b16 %v1756
          %v2462 = vunpack.c.h.b16 %v1756
          %v2463 = vunpack.c.l.b16 %v1757
          %v2464 = vunpack.c.h.b16 %v1757
          %v2465 = vunpack.c.l.b16 %v1758
          %v2466 = vunpack.c.h.b16 %v1758
          %v2467 = vunpack.c.l.b16 %v1759
          %v2468 = vunpack.c.h.b16 %v1759
          %v2469 = vunpack.c.l.b16 %v1760
          %v2470 = vunpack.c.h.b16 %v1760
          %v2471 = vunpack.c.l.b16 %v1761
          %v2472 = vunpack.c.h.b16 %v1761
          %v2473 = vunpack.c.l.b16 %v1762
          %v2474 = vunpack.c.h.b16 %v1762
          %v2475 = vunpack.c.l.b16 %v1763
          %v2476 = vunpack.c.h.b16 %v1763
          %v2477 = vunpack.c.l.b16 %v1764
          %v2478 = vunpack.c.h.b16 %v1764
          %v2479 = vunpack.c.l.b16 %v1765
          %v2480 = vunpack.c.h.b16 %v1765
          %v2481 = vunpack.c.l.b16 %v1766
          %v2482 = vunpack.c.h.b16 %v1766
          %v2483 = vunpack.c.l.b16 %v1767
          %v2484 = vunpack.c.h.b16 %v1767
          %v2485 = vunpack.c.l.b16 %v1768
          %v2486 = vunpack.c.h.b16 %v1768
          %v2487 = vunpack.c.l.b16 %v1769
          %v2488 = vunpack.c.h.b16 %v1769
          %v2489 = vunpack.c.l.b16 %v1770
          %v2490 = vunpack.c.h.b16 %v1770
          %v2491 = vunpack.c.l.b16 %v1771
          %v2492 = vunpack.c.h.b16 %v1771
          %v2493 = vunpack.c.l.b16 %v1772
          %v2494 = vunpack.c.h.b16 %v1772
          %v2495 = vunpack.c.l.b16 %v1773
          %v2496 = vunpack.c.h.b16 %v1773
          %v2497 = vunpack.c.l.b16 %v1774
          %v2498 = vunpack.c.h.b16 %v1774
          %v2499 = vunpack.c.l.b16 %v1775
          %v2500 = vunpack.c.h.b16 %v1775
          %v2501 = vunpack.c.l.b16 %v1776
          %v2502 = vunpack.c.h.b16 %v1776
          %v2503 = vunpack.c.l.b16 %v1777
          %v2504 = vunpack.c.h.b16 %v1777
          %v2505 = vunpack.c.l.b16 %v1778
          %v2506 = vunpack.c.h.b16 %v1778
          %v2507 = vunpack.c.l.b16 %v1779
          %v2508 = vunpack.c.h.b16 %v1779
          %v2509 = vunpack.c.l.b16 %v1780
          %v2510 = vunpack.c.h.b16 %v1780
          %v2511 = vunpack.c.l.b16 %v1781
          %v2512 = vunpack.c.h.b16 %v1781
          %v2513 = vunpack.c.l.b16 %v1782
          %v2514 = vunpack.c.h.b16 %v1782
          %v2515 = vunpack.c.l.b16 %v1783
          %v2516 = vunpack.c.h.b16 %v1783
          %v2517 = vunpack.c.l.b16 %v1784
          %v2518 = vunpack.c.h.b16 %v1784
          %v2519 = vunpack.c.l.b16 %v1785
          %v2520 = vunpack.c.h.b16 %v1785
          %v2521 = vunpack.c.l.b16 %v1786
          %v2522 = vunpack.c.h.b16 %v1786
          %v2523 = vunpack.c.l.b16 %v1787
          %v2524 = vunpack.c.h.b16 %v1787
          %v2525 = vunpack.c.l.b16 %v1788
          %v2526 = vunpack.c.h.b16 %v1788
          %v2527 = vunpack.c.l.b16 %v1789
          %v2528 = vunpack.c.h.b16 %v1789
          %v2529 = vunpack.c.l.b16 %v1790
          %v2530 = vunpack.c.h.b16 %v1790
          %v2531 = vunpack.c.l.b16 %v1791
          %v2532 = vunpack.c.h.b16 %v1791
          %v2533 = vunpack.c.l.b16 %v1792
          %v2534 = vunpack.c.h.b16 %v1792
          %v2535 = vunpack.c.l.b16 %v1793
          %v2536 = vunpack.c.h.b16 %v1793
          %v2537 = vunpack.c.l.b16 %v1794
          %v2538 = vunpack.c.h.b16 %v1794
          %v2539 = vunpack.c.l.b16 %v1795
          %v2540 = vunpack.c.h.b16 %v1795
          %v2541 = vunpack.c.l.b16 %v1796
          %v2542 = vunpack.c.h.b16 %v1796
          %v2543 = vunpack.c.l.b16 %v1797
          %v2544 = vunpack.c.h.b16 %v1797
          %v2545 = vunpack.c.l.b16 %v1798
          %v2546 = vunpack.c.h.b16 %v1798
          %v2547 = vunpack.c.l.b16 %v1799
          %v2548 = vunpack.c.h.b16 %v1799
          %v2549 = vunpack.c.l.b16 %v1800
          %v2550 = vunpack.c.h.b16 %v1800
          %v2551 = vunpack.c.l.b16 %v1801
          %v2552 = vunpack.c.h.b16 %v1801
          %v2553 = vunpack.c.l.b16 %v1802
          %v2554 = vunpack.c.h.b16 %v1802
          %v2555 = vunpack.c.l.b16 %v1803
          %v2556 = vunpack.c.h.b16 %v1803
          %v2557 = vunpack.c.l.b16 %v1804
          %v2558 = vunpack.c.h.b16 %v1804
          %v2559 = vunpack.c.l.b16 %v1805
          %v2560 = vunpack.c.h.b16 %v1805
          %v2561 = vunpack.c.l.b16 %v1806
          %v2562 = vunpack.c.h.b16 %v1806
          %v2563 = vunpack.c.l.b16 %v1807
          %v2564 = vunpack.c.h.b16 %v1807
          %v2565 = vunpack.c.l.b16 %v1808
          %v2566 = vunpack.c.h.b16 %v1808
          %v2567 = vunpack.c.l.b16 %v1809
          %v2568 = vunpack.c.h.b16 %v1809
          %v2569 = vunpack.c.l.b16 %v1810
          %v2570 = vunpack.c.h.b16 %v1810
          %v2571 = vunpack.c.l.b16 %v1811
          %v2572 = vunpack.c.h.b16 %v1811
          %v2573 = vunpack.c.l.b16 %v1812
          %v2574 = vunpack.c.h.b16 %v1812
          %v2575 = vunpack.c.l.b16 %v1813
          %v2576 = vunpack.c.h.b16 %v1813
          %v2577 = vunpack.c.l.b16 %v1814
          %v2578 = vunpack.c.h.b16 %v1814
          %v2579 = vunpack.c.l.b16 %v1815
          %v2580 = vunpack.c.h.b16 %v1815
          %v2581 = vunpack.c.l.b16 %v1816
          %v2582 = vunpack.c.h.b16 %v1816
          %v2583 = vunpack.c.l.b16 %v1817
          %v2584 = vunpack.c.h.b16 %v1817
          %v2585 = vunpack.c.l.b16 %v1818
          %v2586 = vunpack.c.h.b16 %v1818
          %v2587 = vunpack.c.l.b16 %v1819
          %v2588 = vunpack.c.h.b16 %v1819
          %v2589 = vunpack.c.l.b16 %v1820
          %v2590 = vunpack.c.h.b16 %v1820
          %v2591 = vunpack.c.l.b16 %v1821
          %v2592 = vunpack.c.h.b16 %v1821
          %v2593 = vunpack.c.l.b16 %v1822
          %v2594 = vunpack.c.h.b16 %v1822
          %v2595 = vunpack.c.l.b16 %v1823
          %v2596 = vunpack.c.h.b16 %v1823
          %v2597 = vunpack.c.l.b16 %v1824
          %v2598 = vunpack.c.h.b16 %v1824
          %v2599 = vunpack.c.l.b16 %v1825
          %v2600 = vunpack.c.h.b16 %v1825
          %v2601 = vunpack.c.l.b16 %v1826
          %v2602 = vunpack.c.h.b16 %v1826
          %v2603 = vunpack.c.l.b16 %v1827
          %v2604 = vunpack.c.h.b16 %v1827
          %v2605 = vunpack.c.l.b16 %v1828
          %v2606 = vunpack.c.h.b16 %v1828
          %v2607 = vunpack.c.l.b16 %v1829
          %v2608 = vunpack.c.h.b16 %v1829
          %v2609 = vunpack.c.l.b16 %v1830
          %v2610 = vunpack.c.h.b16 %v1830
          %v2611 = vunpack.c.l.b16 %v1831
          %v2612 = vunpack.c.h.b16 %v1831
          %v2613 = vunpack.c.l.b16 %v1832
          %v2614 = vunpack.c.h.b16 %v1832
          %v2615 = vunpack.c.l.b16 %v1833
          %v2616 = vunpack.c.h.b16 %v1833
          %v2617 = vunpack.c.l.b16 %v1834
          %v2618 = vunpack.c.h.b16 %v1834
          %v2619 = vunpack.c.l.b16 %v1835
          %v2620 = vunpack.c.h.b16 %v1835
          %v2621 = vunpack.c.l.b16 %v1836
          %v2622 = vunpack.c.h.b16 %v1836
          %v2623 = vunpack.c.l.b16 %v1837
          %v2624 = vunpack.c.h.b16 %v1837
          %v2625 = vunpack.c.l.b16 %v1838
          %v2626 = vunpack.c.h.b16 %v1838
          %v2627 = vunpack.c.l.b16 %v1839
          %v2628 = vunpack.c.h.b16 %v1839
          %v2629 = vunpack.c.l.b16 %v1840
          %v2630 = vunpack.c.h.b16 %v1840
          %v2631 = vpack.c.b16 %v2123, %v2119
          %v2632 = vpack.c.b16 %v2124, %v2120
          %v2633 = vpack.c.b16 %v2125, %v2121
          %v2634 = vpack.c.b16 %v2126, %v2122
          %v2635 = vpack.c.b16 %v2131, %v2127
          %v2636 = vpack.c.b16 %v2132, %v2128
          %v2637 = vpack.c.b16 %v2133, %v2129
          %v2638 = vpack.c.b16 %v2134, %v2130
          %v2639 = vpack.c.b16 %v2139, %v2135
          %v2640 = vpack.c.b16 %v2140, %v2136
          %v2641 = vpack.c.b16 %v2141, %v2137
          %v2642 = vpack.c.b16 %v2142, %v2138
          %v2643 = vpack.c.b16 %v2147, %v2143
          %v2644 = vpack.c.b16 %v2148, %v2144
          %v2645 = vpack.c.b16 %v2149, %v2145
          %v2646 = vpack.c.b16 %v2150, %v2146
          %v2647 = vpack.c.b16 %v2155, %v2151
          %v2648 = vpack.c.b16 %v2156, %v2152
          %v2649 = vpack.c.b16 %v2157, %v2153
          %v2650 = vpack.c.b16 %v2158, %v2154
          %v2651 = vpack.c.b16 %v2163, %v2159
          %v2652 = vpack.c.b16 %v2164, %v2160
          %v2653 = vpack.c.b16 %v2165, %v2161
          %v2654 = vpack.c.b16 %v2166, %v2162
          %v2655 = vpack.c.b16 %v2171, %v2167
          %v2656 = vpack.c.b16 %v2172, %v2168
          %v2657 = vpack.c.b16 %v2173, %v2169
          %v2658 = vpack.c.b16 %v2174, %v2170
          %v2659 = vpack.c.b16 %v2179, %v2175
          %v2660 = vpack.c.b16 %v2180, %v2176
          %v2661 = vpack.c.b16 %v2181, %v2177
          %v2662 = vpack.c.b16 %v2182, %v2178
          %v2663 = vpack.c.b16 %v2187, %v2183
          %v2664 = vpack.c.b16 %v2188, %v2184
          %v2665 = vpack.c.b16 %v2189, %v2185
          %v2666 = vpack.c.b16 %v2190, %v2186
          %v2667 = vpack.c.b16 %v2195, %v2191
          %v2668 = vpack.c.b16 %v2196, %v2192
          %v2669 = vpack.c.b16 %v2197, %v2193
          %v2670 = vpack.c.b16 %v2198, %v2194
          %v2671 = vpack.c.b16 %v2203, %v2199
          %v2672 = vpack.c.b16 %v2204, %v2200
          %v2673 = vpack.c.b16 %v2205, %v2201
          %v2674 = vpack.c.b16 %v2206, %v2202
          %v2675 = vpack.c.b16 %v2211, %v2207
          %v2676 = vpack.c.b16 %v2212, %v2208
          %v2677 = vpack.c.b16 %v2213, %v2209
          %v2678 = vpack.c.b16 %v2214, %v2210
          %v2679 = vpack.c.b16 %v2219, %v2215
          %v2680 = vpack.c.b16 %v2220, %v2216
          %v2681 = vpack.c.b16 %v2221, %v2217
          %v2682 = vpack.c.b16 %v2222, %v2218
          %v2683 = vpack.c.b16 %v2227, %v2223
          %v2684 = vpack.c.b16 %v2228, %v2224
          %v2685 = vpack.c.b16 %v2229, %v2225
          %v2686 = vpack.c.b16 %v2230, %v2226
          %v2687 = vpack.c.b16 %v2235, %v2231
          %v2688 = vpack.c.b16 %v2236, %v2232
          %v2689 = vpack.c.b16 %v2237, %v2233
          %v2690 = vpack.c.b16 %v2238, %v2234
          %v2691 = vpack.c.b16 %v2243, %v2239
          %v2692 = vpack.c.b16 %v2244, %v2240
          %v2693 = vpack.c.b16 %v2245, %v2241
          %v2694 = vpack.c.b16 %v2246, %v2242
          %v2695 = vpack.c.b16 %v2251, %v2247
          %v2696 = vpack.c.b16 %v2252, %v2248
          %v2697 = vpack.c.b16 %v2253, %v2249
          %v2698 = vpack.c.b16 %v2254, %v2250
          %v2699 = vpack.c.b16 %v2259, %v2255
          %v2700 = vpack.c.b16 %v2260, %v2256
          %v2701 = vpack.c.b16 %v2261, %v2257
          %v2702 = vpack.c.b16 %v2262, %v2258
          %v2703 = vpack.c.b16 %v2267, %v2263
          %v2704 = vpack.c.b16 %v2268, %v2264
          %v2705 = vpack.c.b16 %v2269, %v2265
          %v2706 = vpack.c.b16 %v2270, %v2266
          %v2707 = vpack.c.b16 %v2275, %v2271
          %v2708 = vpack.c.b16 %v2276, %v2272
          %v2709 = vpack.c.b16 %v2277, %v2273
          %v2710 = vpack.c.b16 %v2278, %v2274
          %v2711 = vpack.c.b16 %v2283, %v2279
          %v2712 = vpack.c.b16 %v2284, %v2280
          %v2713 = vpack.c.b16 %v2285, %v2281
          %v2714 = vpack.c.b16 %v2286, %v2282
          %v2715 = vpack.c.b16 %v2291, %v2287
          %v2716 = vpack.c.b16 %v2292, %v2288
          %v2717 = vpack.c.b16 %v2293, %v2289
          %v2718 = vpack.c.b16 %v2294, %v2290
          %v2719 = vpack.c.b16 %v2299, %v2295
          %v2720 = vpack.c.b16 %v2300, %v2296
          %v2721 = vpack.c.b16 %v2301, %v2297
          %v2722 = vpack.c.b16 %v2302, %v2298
          %v2723 = vpack.c.b16 %v2307, %v2303
          %v2724 = vpack.c.b16 %v2308, %v2304
          %v2725 = vpack.c.b16 %v2309, %v2305
          %v2726 = vpack.c.b16 %v2310, %v2306
          %v2727 = vpack.c.b16 %v2315, %v2311
          %v2728 = vpack.c.b16 %v2316, %v2312
          %v2729 = vpack.c.b16 %v2317, %v2313
          %v2730 = vpack.c.b16 %v2318, %v2314
          %v2731 = vpack.c.b16 %v2323, %v2319
          %v2732 = vpack.c.b16 %v2324, %v2320
          %v2733 = vpack.c.b16 %v2325, %v2321
          %v2734 = vpack.c.b16 %v2326, %v2322
          %v2735 = vpack.c.b16 %v2331, %v2327
          %v2736 = vpack.c.b16 %v2332, %v2328
          %v2737 = vpack.c.b16 %v2333, %v2329
          %v2738 = vpack.c.b16 %v2334, %v2330
          %v2739 = vpack.c.b16 %v2339, %v2335
          %v2740 = vpack.c.b16 %v2340, %v2336
          %v2741 = vpack.c.b16 %v2341, %v2337
          %v2742 = vpack.c.b16 %v2342, %v2338
          %v2743 = vpack.c.b16 %v2347, %v2343
          %v2744 = vpack.c.b16 %v2348, %v2344
          %v2745 = vpack.c.b16 %v2349, %v2345
          %v2746 = vpack.c.b16 %v2350, %v2346
          %v2747 = vpack.c.b16 %v2355, %v2351
          %v2748 = vpack.c.b16 %v2356, %v2352
          %v2749 = vpack.c.b16 %v2357, %v2353
          %v2750 = vpack.c.b16 %v2358, %v2354
          %v2751 = vpack.c.b16 %v2363, %v2359
          %v2752 = vpack.c.b16 %v2364, %v2360
          %v2753 = vpack.c.b16 %v2365, %v2361
          %v2754 = vpack.c.b16 %v2366, %v2362
          %v2755 = vpack.c.b16 %v2371, %v2367
          %v2756 = vpack.c.b16 %v2372, %v2368
          %v2757 = vpack.c.b16 %v2373, %v2369
          %v2758 = vpack.c.b16 %v2374, %v2370
          %v2759 = vpack.c.b16 %v2379, %v2375
          %v2760 = vpack.c.b16 %v2380, %v2376
          %v2761 = vpack.c.b16 %v2381, %v2377
          %v2762 = vpack.c.b16 %v2382, %v2378
          %v2763 = vpack.c.b16 %v2387, %v2383
          %v2764 = vpack.c.b16 %v2388, %v2384
          %v2765 = vpack.c.b16 %v2389, %v2385
          %v2766 = vpack.c.b16 %v2390, %v2386
          %v2767 = vpack.c.b16 %v2395, %v2391
          %v2768 = vpack.c.b16 %v2396, %v2392
          %v2769 = vpack.c.b16 %v2397, %v2393
          %v2770 = vpack.c.b16 %v2398, %v2394
          %v2771 = vpack.c.b16 %v2403, %v2399
          %v2772 = vpack.c.b16 %v2404, %v2400
          %v2773 = vpack.c.b16 %v2405, %v2401
          %v2774 = vpack.c.b16 %v2406, %v2402
          %v2775 = vpack.c.b16 %v2411, %v2407
          %v2776 = vpack.c.b16 %v2412, %v2408
          %v2777 = vpack.c.b16 %v2413, %v2409
          %v2778 = vpack.c.b16 %v2414, %v2410
          %v2779 = vpack.c.b16 %v2419, %v2415
          %v2780 = vpack.c.b16 %v2420, %v2416
          %v2781 = vpack.c.b16 %v2421, %v2417
          %v2782 = vpack.c.b16 %v2422, %v2418
          %v2783 = vpack.c.b16 %v2427, %v2423
          %v2784 = vpack.c.b16 %v2428, %v2424
          %v2785 = vpack.c.b16 %v2429, %v2425
          %v2786 = vpack.c.b16 %v2430, %v2426
          %v2787 = vpack.c.b16 %v2435, %v2431
          %v2788 = vpack.c.b16 %v2436, %v2432
          %v2789 = vpack.c.b16 %v2437, %v2433
          %v2790 = vpack.c.b16 %v2438, %v2434
          %v2791 = vpack.c.b16 %v2443, %v2439
          %v2792 = vpack.c.b16 %v2444, %v2440
          %v2793 = vpack.c.b16 %v2445, %v2441
          %v2794 = vpack.c.b16 %v2446, %v2442
          %v2795 = vpack.c.b16 %v2451, %v2447
          %v2796 = vpack.c.b16 %v2452, %v2448
          %v2797 = vpack.c.b16 %v2453, %v2449
          %v2798 = vpack.c.b16 %v2454, %v2450
          %v2799 = vpack.c.b16 %v2459, %v2455
          %v2800 = vpack.c.b16 %v2460, %v2456
          %v2801 = vpack.c.b16 %v2461, %v2457
          %v2802 = vpack.c.b16 %v2462, %v2458
          %v2803 = vpack.c.b16 %v2467, %v2463
          %v2804 = vpack.c.b16 %v2468, %v2464
          %v2805 = vpack.c.b16 %v2469, %v2465
          %v2806 = vpack.c.b16 %v2470, %v2466
          %v2807 = vpack.c.b16 %v2475, %v2471
          %v2808 = vpack.c.b16 %v2476, %v2472
          %v2809 = vpack.c.b16 %v2477, %v2473
          %v2810 = vpack.c.b16 %v2478, %v2474
          %v2811 = vpack.c.b16 %v2483, %v2479
          %v2812 = vpack.c.b16 %v2484, %v2480
          %v2813 = vpack.c.b16 %v2485, %v2481
          %v2814 = vpack.c.b16 %v2486, %v2482
          %v2815 = vpack.c.b16 %v2491, %v2487
          %v2816 = vpack.c.b16 %v2492, %v2488
          %v2817 = vpack.c.b16 %v2493, %v2489
          %v2818 = vpack.c.b16 %v2494, %v2490
          %v2819 = vpack.c.b16 %v2499, %v2495
          %v2820 = vpack.c.b16 %v2500, %v2496
          %v2821 = vpack.c.b16 %v2501, %v2497
          %v2822 = vpack.c.b16 %v2502, %v2498
          %v2823 = vpack.c.b16 %v2507, %v2503
          %v2824 = vpack.c.b16 %v2508, %v2504
          %v2825 = vpack.c.b16 %v2509, %v2505
          %v2826 = vpack.c.b16 %v2510, %v2506
          %v2827 = vpack.c.b16 %v2515, %v2511
          %v2828 = vpack.c.b16 %v2516, %v2512
          %v2829 = vpack.c.b16 %v2517, %v2513
          %v2830 = vpack.c.b16 %v2518, %v2514
          %v2831 = vpack.c.b16 %v2523, %v2519
          %v2832 = vpack.c.b16 %v2524, %v2520
          %v2833 = vpack.c.b16 %v2525, %v2521
          %v2834 = vpack.c.b16 %v2526, %v2522
          %v2835 = vpack.c.b16 %v2531, %v2527
          %v2836 = vpack.c.b16 %v2532, %v2528
          %v2837 = vpack.c.b16 %v2533, %v2529
          %v2838 = vpack.c.b16 %v2534, %v2530
          %v2839 = vpack.c.b16 %v2539, %v2535
          %v2840 = vpack.c.b16 %v2540, %v2536
          %v2841 = vpack.c.b16 %v2541, %v2537
          %v2842 = vpack.c.b16 %v2542, %v2538
          %v2843 = vpack.c.b16 %v2547, %v2543
          %v2844 = vpack.c.b16 %v2548, %v2544
          %v2845 = vpack.c.b16 %v2549, %v2545
          %v2846 = vpack.c.b16 %v2550, %v2546
          %v2847 = vpack.c.b16 %v2555, %v2551
          %v2848 = vpack.c.b16 %v2556, %v2552
          %v2849 = vpack.c.b16 %v2557, %v2553
          %v2850 = vpack.c.b16 %v2558, %v2554
          %v2851 = vpack.c.b16 %v2563, %v2559
          %v2852 = vpack.c.b16 %v2564, %v2560
          %v2853 = vpack.c.b16 %v2565, %v2561
          %v2854 = vpack.c.b16 %v2566, %v2562
          %v2855 = vpack.c.b16 %v2571, %v2567
          %v2856 = vpack.c.b16 %v2572, %v2568
          %v2857 = vpack.c.b16 %v2573, %v2569
          %v2858 = vpack.c.b16 %v2574, %v2570
          %v2859 = vpack.c.b16 %v2579, %v2575
          %v2860 = vpack.c.b16 %v2580, %v2576
          %v2861 = vpack.c.b16 %v2581, %v2577
          %v2862 = vpack.c.b16 %v2582, %v2578
          %v2863 = vpack.c.b16 %v2587, %v2583
          %v2864 = vpack.c.b16 %v2588, %v2584
          %v2865 = vpack.c.b16 %v2589, %v2585
          %v2866 = vpack.c.b16 %v2590, %v2586
          %v2867 = vpack.c.b16 %v2595, %v2591
          %v2868 = vpack.c.b16 %v2596, %v2592
          %v2869 = vpack.c.b16 %v2597, %v2593
          %v2870 = vpack.c.b16 %v2598, %v2594
          %v2871 = vpack.c.b16 %v2603, %v2599
          %v2872 = vpack.c.b16 %v2604, %v2600
          %v2873 = vpack.c.b16 %v2605, %v2601
          %v2874 = vpack.c.b16 %v2606, %v2602
          %v2875 = vpack.c.b16 %v2611, %v2607
          %v2876 = vpack.c.b16 %v2612, %v2608
          %v2877 = vpack.c.b16 %v2613, %v2609
          %v2878 = vpack.c.b16 %v2614, %v2610
          %v2879 = vpack.c.b16 %v2619, %v2615
          %v2880 = vpack.c.b16 %v2620, %v2616
          %v2881 = vpack.c.b16 %v2621, %v2617
          %v2882 = vpack.c.b16 %v2622, %v2618
          %v2883 = vpack.c.b16 %v2627, %v2623
          %v2884 = vpack.c.b16 %v2628, %v2624
          %v2885 = vpack.c.b16 %v2629, %v2625
          %v2886 = vpack.c.b16 %v2630, %v2626
          %3143 = vmatprep.subr.bf16.mxu0 %v2660
          %3144 = vmatpush1.bf16.msra.mxu0 %v2659
          %3145 = vmatprep.subr.bf16.mxu0 %v2656
          %3146 = vmatpush1.bf16.msra.mxu0 %v2655
          %3147 = vmatprep.subr.bf16.mxu0 %v2652
          %3148 = vmatpush1.bf16.msra.mxu0 %v2651
          %3149 = vmatprep.subr.bf16.mxu0 %v2648
          %3150 = vmatpush1.bf16.msra.mxu0 %v2647
          %3151 = vmatprep.subr.bf16.mxu0 %v2644
          %3152 = vmatpush1.bf16.msra.mxu0 %v2643
          %3153 = vmatprep.subr.bf16.mxu0 %v2640
          %3154 = vmatpush1.bf16.msra.mxu0 %v2639
          %3155 = vmatprep.subr.bf16.mxu0 %v2636
          %3156 = vmatpush1.bf16.msra.mxu0 %v2635
          %3157 = vmatprep.subr.bf16.mxu0 %v2632
          %3158 = vmatpush1.bf16.msra.mxu0 %v2631
          %3159 = vmatprep.subr.bf16.mxu0 %v2692
          %3160 = vmatpush2.bf16.msra.mxu0 %v2691
          %3161 = vmatprep.subr.bf16.mxu0 %v2688
          %3162 = vmatpush2.bf16.msra.mxu0 %v2687
          %3163 = vmatprep.subr.bf16.mxu0 %v2684
          %3164 = vmatpush2.bf16.msra.mxu0 %v2683
          %3165 = vmatprep.subr.bf16.mxu0 %v2680
          %3166 = vmatpush2.bf16.msra.mxu0 %v2679
          %3167 = vmatprep.subr.bf16.mxu0 %v2676
          %3168 = vmatpush2.bf16.msra.mxu0 %v2675
          %3169 = vmatprep.subr.bf16.mxu0 %v2672
          %3170 = vmatpush2.bf16.msra.mxu0 %v2671
          %3171 = vmatprep.subr.bf16.mxu0 %v2668
          %3172 = vmatpush2.bf16.msra.mxu0 %v2667
          %3173 = vmatprep.subr.bf16.mxu0 %v2664
          %3174 = vmatpush2.bf16.msra.mxu0 %v2663
          %3175 = vmatprep.mubr.bf16.mxu0 %v1578
          %3176 = vmatmul.mubr.bf16.gmra.mxu0 %v1577
          %v3177 = vpop.f32.mrf.mxu0
          %v3178 = vadd.f32 %v1846, %v3177
          %v3179 = vpop.f32.mrf.mxu0
          %v3180 = vadd.f32 %v1850, %v3179
          %v3181 = vpop.f32.mrf.mxu0
          %v3182 = vpop.f32.mrf.mxu0
          %3183 = vdwg.mxu0
          %3184 = vmatprep.subr.bf16.mxu0 %v2724
          %3185 = vmatpush1.bf16.msra.mxu0 %v2723
          %3186 = vmatprep.subr.bf16.mxu0 %v2720
          %3187 = vmatpush1.bf16.msra.mxu0 %v2719
          %3188 = vmatprep.subr.bf16.mxu0 %v2716
          %3189 = vmatpush1.bf16.msra.mxu0 %v2715
          %3190 = vmatprep.subr.bf16.mxu0 %v2712
          %3191 = vmatpush1.bf16.msra.mxu0 %v2711
          %3192 = vmatprep.subr.bf16.mxu0 %v2708
          %3193 = vmatpush1.bf16.msra.mxu0 %v2707
          %3194 = vmatprep.subr.bf16.mxu0 %v2704
          %3195 = vmatpush1.bf16.msra.mxu0 %v2703
          %3196 = vmatprep.subr.bf16.mxu0 %v2700
          %3197 = vmatpush1.bf16.msra.mxu0 %v2699
          %3198 = vmatprep.subr.bf16.mxu0 %v2696
          %3199 = vmatpush1.bf16.msra.mxu0 %v2695
          %3200 = vmatprep.subr.bf16.mxu0 %v2756
          %3201 = vmatpush2.bf16.msra.mxu0 %v2755
          %3202 = vmatprep.subr.bf16.mxu0 %v2752
          %3203 = vmatpush2.bf16.msra.mxu0 %v2751
          %3204 = vmatprep.subr.bf16.mxu0 %v2748
          %3205 = vmatpush2.bf16.msra.mxu0 %v2747
          %3206 = vmatprep.subr.bf16.mxu0 %v2744
          %3207 = vmatpush2.bf16.msra.mxu0 %v2743
          %3208 = vmatprep.subr.bf16.mxu0 %v2740
          %3209 = vmatpush2.bf16.msra.mxu0 %v2739
          %3210 = vmatprep.subr.bf16.mxu0 %v2736
          %3211 = vmatpush2.bf16.msra.mxu0 %v2735
          %3212 = vmatprep.subr.bf16.mxu0 %v2732
          %3213 = vmatpush2.bf16.msra.mxu0 %v2731
          %3214 = vmatprep.subr.bf16.mxu0 %v2728
          %3215 = vmatpush2.bf16.msra.mxu0 %v2727
          %3216 = vmatprep.mubr.bf16.mxu0 %v1580
          %3217 = vmatmul.mubr.bf16.gmra.mxu0 %v1579
          %v3218 = vpop.f32.mrf.mxu0
          %v3219 = vadd.f32 %v3178, %v3218
          %v3220 = vpop.f32.mrf.mxu0
          %v3221 = vadd.f32 %v3180, %v3220
          %v3222 = vpop.f32.mrf.mxu0
          %v3223 = vpop.f32.mrf.mxu0
          %3224 = vdwg.mxu0
          %3225 = vmatprep.subr.bf16.mxu0 %v2788
          %3226 = vmatpush1.bf16.msra.mxu0 %v2787
          %3227 = vmatprep.subr.bf16.mxu0 %v2784
          %3228 = vmatpush1.bf16.msra.mxu0 %v2783
          %3229 = vmatprep.subr.bf16.mxu0 %v2780
          %3230 = vmatpush1.bf16.msra.mxu0 %v2779
          %3231 = vmatprep.subr.bf16.mxu0 %v2776
          %3232 = vmatpush1.bf16.msra.mxu0 %v2775
          %3233 = vmatprep.subr.bf16.mxu0 %v2772
          %3234 = vmatpush1.bf16.msra.mxu0 %v2771
          %3235 = vmatprep.subr.bf16.mxu0 %v2768
          %3236 = vmatpush1.bf16.msra.mxu0 %v2767
          %3237 = vmatprep.subr.bf16.mxu0 %v2764
          %3238 = vmatpush1.bf16.msra.mxu0 %v2763
          %3239 = vmatprep.subr.bf16.mxu0 %v2760
          %3240 = vmatpush1.bf16.msra.mxu0 %v2759
          %3241 = vmatprep.subr.bf16.mxu0 %v2820
          %3242 = vmatpush2.bf16.msra.mxu0 %v2819
          %3243 = vmatprep.subr.bf16.mxu0 %v2816
          %3244 = vmatpush2.bf16.msra.mxu0 %v2815
          %3245 = vmatprep.subr.bf16.mxu0 %v2812
          %3246 = vmatpush2.bf16.msra.mxu0 %v2811
          %3247 = vmatprep.subr.bf16.mxu0 %v2808
          %3248 = vmatpush2.bf16.msra.mxu0 %v2807
          %3249 = vmatprep.subr.bf16.mxu0 %v2804
          %3250 = vmatpush2.bf16.msra.mxu0 %v2803
          %3251 = vmatprep.subr.bf16.mxu0 %v2800
          %3252 = vmatpush2.bf16.msra.mxu0 %v2799
          %3253 = vmatprep.subr.bf16.mxu0 %v2796
          %3254 = vmatpush2.bf16.msra.mxu0 %v2795
          %3255 = vmatprep.subr.bf16.mxu0 %v2792
          %3256 = vmatpush2.bf16.msra.mxu0 %v2791
          %3257 = vmatprep.mubr.bf16.mxu0 %v1582
          %3258 = vmatmul.mubr.bf16.gmra.mxu0 %v1581
          %v3259 = vpop.f32.mrf.mxu0
          %v3260 = vadd.f32 %v3219, %v3259
          %v3261 = vpop.f32.mrf.mxu0
          %v3262 = vadd.f32 %v3221, %v3261
          %v3263 = vpop.f32.mrf.mxu0
          %v3264 = vpop.f32.mrf.mxu0
          %3265 = vdwg.mxu0
          %3266 = vmatprep.subr.bf16.mxu0 %v2852
          %3267 = vmatpush1.bf16.msra.mxu0 %v2851
          %3268 = vmatprep.subr.bf16.mxu0 %v2848
          %3269 = vmatpush1.bf16.msra.mxu0 %v2847
          %3270 = vmatprep.subr.bf16.mxu0 %v2844
          %3271 = vmatpush1.bf16.msra.mxu0 %v2843
          %3272 = vmatprep.subr.bf16.mxu0 %v2840
          %3273 = vmatpush1.bf16.msra.mxu0 %v2839
          %3274 = vmatprep.subr.bf16.mxu0 %v2836
          %3275 = vmatpush1.bf16.msra.mxu0 %v2835
          %3276 = vmatprep.subr.bf16.mxu0 %v2832
          %3277 = vmatpush1.bf16.msra.mxu0 %v2831
          %3278 = vmatprep.subr.bf16.mxu0 %v2828
          %3279 = vmatpush1.bf16.msra.mxu0 %v2827
          %3280 = vmatprep.subr.bf16.mxu0 %v2824
          %3281 = vmatpush1.bf16.msra.mxu0 %v2823
          %3282 = vmatprep.subr.bf16.mxu0 %v2884
          %3283 = vmatpush2.bf16.msra.mxu0 %v2883
          %3284 = vmatprep.subr.bf16.mxu0 %v2880
          %3285 = vmatpush2.bf16.msra.mxu0 %v2879
          %3286 = vmatprep.subr.bf16.mxu0 %v2876
          %3287 = vmatpush2.bf16.msra.mxu0 %v2875
          %3288 = vmatprep.subr.bf16.mxu0 %v2872
          %3289 = vmatpush2.bf16.msra.mxu0 %v2871
          %3290 = vmatprep.subr.bf16.mxu0 %v2868
          %3291 = vmatpush2.bf16.msra.mxu0 %v2867
          %3292 = vmatprep.subr.bf16.mxu0 %v2864
          %3293 = vmatpush2.bf16.msra.mxu0 %v2863
          %3294 = vmatprep.subr.bf16.mxu0 %v2860
          %3295 = vmatpush2.bf16.msra.mxu0 %v2859
          %3296 = vmatprep.subr.bf16.mxu0 %v2856
          %3297 = vmatpush2.bf16.msra.mxu0 %v2855
          %3298 = vmatprep.mubr.bf16.mxu0 %v1584
          %3299 = vmatmul.mubr.bf16.gmra.mxu0 %v1583
          %v3300 = vpop.f32.mrf.mxu0
          %v3301 = vadd.f32 %v3260, %v3300
          %v3302 = vpop.f32.mrf.mxu0
          %v3303 = vadd.f32 %v3262, %v3302
          %v3304 = vpop.f32.mrf.mxu0
          %v3305 = vpop.f32.mrf.mxu0
          %3306 = vdwg.mxu0
          %3307 = vmatprep.subr.bf16.mxu0 %v2662
          %3308 = vmatpush1.bf16.msra.mxu0 %v2661
          %3309 = vmatprep.subr.bf16.mxu0 %v2658
          %3310 = vmatpush1.bf16.msra.mxu0 %v2657
          %3311 = vmatprep.subr.bf16.mxu0 %v2654
          %3312 = vmatpush1.bf16.msra.mxu0 %v2653
          %3313 = vmatprep.subr.bf16.mxu0 %v2650
          %3314 = vmatpush1.bf16.msra.mxu0 %v2649
          %3315 = vmatprep.subr.bf16.mxu0 %v2646
          %3316 = vmatpush1.bf16.msra.mxu0 %v2645
          %3317 = vmatprep.subr.bf16.mxu0 %v2642
          %3318 = vmatpush1.bf16.msra.mxu0 %v2641
          %3319 = vmatprep.subr.bf16.mxu0 %v2638
          %3320 = vmatpush1.bf16.msra.mxu0 %v2637
          %3321 = vmatprep.subr.bf16.mxu0 %v2634
          %3322 = vmatpush1.bf16.msra.mxu0 %v2633
          %3323 = vmatprep.subr.bf16.mxu0 %v2694
          %3324 = vmatpush2.bf16.msra.mxu0 %v2693
          %3325 = vmatprep.subr.bf16.mxu0 %v2690
          %3326 = vmatpush2.bf16.msra.mxu0 %v2689
          %3327 = vmatprep.subr.bf16.mxu0 %v2686
          %3328 = vmatpush2.bf16.msra.mxu0 %v2685
          %3329 = vmatprep.subr.bf16.mxu0 %v2682
          %3330 = vmatpush2.bf16.msra.mxu0 %v2681
          %3331 = vmatprep.subr.bf16.mxu0 %v2678
          %3332 = vmatpush2.bf16.msra.mxu0 %v2677
          %3333 = vmatprep.subr.bf16.mxu0 %v2674
          %3334 = vmatpush2.bf16.msra.mxu0 %v2673
          %3335 = vmatprep.subr.bf16.mxu0 %v2670
          %3336 = vmatpush2.bf16.msra.mxu0 %v2669
          %3337 = vmatprep.subr.bf16.mxu0 %v2666
          %3338 = vmatpush2.bf16.msra.mxu0 %v2665
          %3339 = vmatprep.mubr.bf16.mxu0 %v1578
          %3340 = vmatmul.mubr.bf16.gmra.mxu0 %v1577
          %v3341 = vpop.f32.mrf.mxu0
          %v3342 = vadd.f32 %v1854, %v3341
          %v3343 = vpop.f32.mrf.mxu0
          %v3344 = vadd.f32 %v1858, %v3343
          %v3345 = vpop.f32.mrf.mxu0
          %v3346 = vpop.f32.mrf.mxu0
          %3347 = vdwg.mxu0
          %3348 = vmatprep.subr.bf16.mxu0 %v2726
          %3349 = vmatpush1.bf16.msra.mxu0 %v2725
          %3350 = vmatprep.subr.bf16.mxu0 %v2722
          %3351 = vmatpush1.bf16.msra.mxu0 %v2721
          %3352 = vmatprep.subr.bf16.mxu0 %v2718
          %3353 = vmatpush1.bf16.msra.mxu0 %v2717
          %3354 = vmatprep.subr.bf16.mxu0 %v2714
          %3355 = vmatpush1.bf16.msra.mxu0 %v2713
          %3356 = vmatprep.subr.bf16.mxu0 %v2710
          %3357 = vmatpush1.bf16.msra.mxu0 %v2709
          %3358 = vmatprep.subr.bf16.mxu0 %v2706
          %3359 = vmatpush1.bf16.msra.mxu0 %v2705
          %3360 = vmatprep.subr.bf16.mxu0 %v2702
          %3361 = vmatpush1.bf16.msra.mxu0 %v2701
          %3362 = vmatprep.subr.bf16.mxu0 %v2698
          %3363 = vmatpush1.bf16.msra.mxu0 %v2697
          %3364 = vmatprep.subr.bf16.mxu0 %v2758
          %3365 = vmatpush2.bf16.msra.mxu0 %v2757
          %3366 = vmatprep.subr.bf16.mxu0 %v2754
          %3367 = vmatpush2.bf16.msra.mxu0 %v2753
          %3368 = vmatprep.subr.bf16.mxu0 %v2750
          %3369 = vmatpush2.bf16.msra.mxu0 %v2749
          %3370 = vmatprep.subr.bf16.mxu0 %v2746
          %3371 = vmatpush2.bf16.msra.mxu0 %v2745
          %3372 = vmatprep.subr.bf16.mxu0 %v2742
          %3373 = vmatpush2.bf16.msra.mxu0 %v2741
          %3374 = vmatprep.subr.bf16.mxu0 %v2738
          %3375 = vmatpush2.bf16.msra.mxu0 %v2737
          %3376 = vmatprep.subr.bf16.mxu0 %v2734
          %3377 = vmatpush2.bf16.msra.mxu0 %v2733
          %3378 = vmatprep.subr.bf16.mxu0 %v2730
          %3379 = vmatpush2.bf16.msra.mxu0 %v2729
          %3380 = vmatprep.mubr.bf16.mxu0 %v1580
          %3381 = vmatmul.mubr.bf16.gmra.mxu0 %v1579
          %v3382 = vpop.f32.mrf.mxu0
          %v3383 = vadd.f32 %v3342, %v3382
          %v3384 = vpop.f32.mrf.mxu0
          %v3385 = vadd.f32 %v3344, %v3384
          %v3386 = vpop.f32.mrf.mxu0
          %v3387 = vpop.f32.mrf.mxu0
          %3388 = vdwg.mxu0
          %3389 = vmatprep.subr.bf16.mxu0 %v2790
          %3390 = vmatpush1.bf16.msra.mxu0 %v2789
          %3391 = vmatprep.subr.bf16.mxu0 %v2786
          %3392 = vmatpush1.bf16.msra.mxu0 %v2785
          %3393 = vmatprep.subr.bf16.mxu0 %v2782
          %3394 = vmatpush1.bf16.msra.mxu0 %v2781
          %3395 = vmatprep.subr.bf16.mxu0 %v2778
          %3396 = vmatpush1.bf16.msra.mxu0 %v2777
          %3397 = vmatprep.subr.bf16.mxu0 %v2774
          %3398 = vmatpush1.bf16.msra.mxu0 %v2773
          %3399 = vmatprep.subr.bf16.mxu0 %v2770
          %3400 = vmatpush1.bf16.msra.mxu0 %v2769
          %3401 = vmatprep.subr.bf16.mxu0 %v2766
          %3402 = vmatpush1.bf16.msra.mxu0 %v2765
          %3403 = vmatprep.subr.bf16.mxu0 %v2762
          %3404 = vmatpush1.bf16.msra.mxu0 %v2761
          %3405 = vmatprep.subr.bf16.mxu0 %v2822
          %3406 = vmatpush2.bf16.msra.mxu0 %v2821
          %3407 = vmatprep.subr.bf16.mxu0 %v2818
          %3408 = vmatpush2.bf16.msra.mxu0 %v2817
          %3409 = vmatprep.subr.bf16.mxu0 %v2814
          %3410 = vmatpush2.bf16.msra.mxu0 %v2813
          %3411 = vmatprep.subr.bf16.mxu0 %v2810
          %3412 = vmatpush2.bf16.msra.mxu0 %v2809
          %3413 = vmatprep.subr.bf16.mxu0 %v2806
          %3414 = vmatpush2.bf16.msra.mxu0 %v2805
          %3415 = vmatprep.subr.bf16.mxu0 %v2802
          %3416 = vmatpush2.bf16.msra.mxu0 %v2801
          %3417 = vmatprep.subr.bf16.mxu0 %v2798
          %3418 = vmatpush2.bf16.msra.mxu0 %v2797
          %3419 = vmatprep.subr.bf16.mxu0 %v2794
          %3420 = vmatpush2.bf16.msra.mxu0 %v2793
          %3421 = vmatprep.mubr.bf16.mxu0 %v1582
          %3422 = vmatmul.mubr.bf16.gmra.mxu0 %v1581
          %v3423 = vpop.f32.mrf.mxu0
          %v3424 = vadd.f32 %v3383, %v3423
          %v3425 = vpop.f32.mrf.mxu0
          %v3426 = vadd.f32 %v3385, %v3425
          %v3427 = vpop.f32.mrf.mxu0
          %v3428 = vpop.f32.mrf.mxu0
          %3429 = vdwg.mxu0
          %3430 = vmatprep.subr.bf16.mxu0 %v2854
          %3431 = vmatpush1.bf16.msra.mxu0 %v2853
          %3432 = vmatprep.subr.bf16.mxu0 %v2850
          %3433 = vmatpush1.bf16.msra.mxu0 %v2849
          %3434 = vmatprep.subr.bf16.mxu0 %v2846
          %3435 = vmatpush1.bf16.msra.mxu0 %v2845
          %3436 = vmatprep.subr.bf16.mxu0 %v2842
          %3437 = vmatpush1.bf16.msra.mxu0 %v2841
          %3438 = vmatprep.subr.bf16.mxu0 %v2838
          %3439 = vmatpush1.bf16.msra.mxu0 %v2837
          %3440 = vmatprep.subr.bf16.mxu0 %v2834
          %3441 = vmatpush1.bf16.msra.mxu0 %v2833
          %3442 = vmatprep.subr.bf16.mxu0 %v2830
          %3443 = vmatpush1.bf16.msra.mxu0 %v2829
          %3444 = vmatprep.subr.bf16.mxu0 %v2826
          %3445 = vmatpush1.bf16.msra.mxu0 %v2825
          %3446 = vmatprep.subr.bf16.mxu0 %v2886
          %3447 = vmatpush2.bf16.msra.mxu0 %v2885
          %3448 = vmatprep.subr.bf16.mxu0 %v2882
          %3449 = vmatpush2.bf16.msra.mxu0 %v2881
          %3450 = vmatprep.subr.bf16.mxu0 %v2878
          %3451 = vmatpush2.bf16.msra.mxu0 %v2877
          %3452 = vmatprep.subr.bf16.mxu0 %v2874
          %3453 = vmatpush2.bf16.msra.mxu0 %v2873
          %3454 = vmatprep.subr.bf16.mxu0 %v2870
          %3455 = vmatpush2.bf16.msra.mxu0 %v2869
          %3456 = vmatprep.subr.bf16.mxu0 %v2866
          %3457 = vmatpush2.bf16.msra.mxu0 %v2865
          %3458 = vmatprep.subr.bf16.mxu0 %v2862
          %3459 = vmatpush2.bf16.msra.mxu0 %v2861
          %3460 = vmatprep.subr.bf16.mxu0 %v2858
          %3461 = vmatpush2.bf16.msra.mxu0 %v2857
          %3462 = vmatprep.mubr.bf16.mxu0 %v1584
          %3463 = vmatmul.mubr.bf16.gmra.mxu0 %v1583
          %v3464 = vpop.f32.mrf.mxu0
          %v3465 = vadd.f32 %v3424, %v3464
          %v3466 = vpop.f32.mrf.mxu0
          %v3467 = vadd.f32 %v3426, %v3466
          %v3468 = vpop.f32.mrf.mxu0
          %v3469 = vpop.f32.mrf.mxu0
          %3470 = vdwg.mxu0
          %v3471 = vmax.f32 %v3301, 0.0
          %v3472 = vmax.f32 %v3303, 0.0
          %v3473 = vmax.f32 %v3465, 0.0
          %v3474 = vmax.f32 %v3467, 0.0
          %v3475 = vpack.c.bf16 %v3471, %v3471
          %v3476 = vpack.c.bf16 %v3472, %v3472
          %v3477 = vpack.c.bf16 %v3473, %v3473
          %v3478 = vpack.c.bf16 %v3474, %v3474
          %v3479 = vld [vmem:[#allocation8] sm:$0xff]
          %v3480 = vld [vmem:[#allocation8 + $0x8] sm:$0xff]
          %v3481 = vld [vmem:[#allocation8 + $0x10] sm:$0xff]
          %v3482 = vld [vmem:[#allocation8 + $0x18] sm:$0xff]
          %v3483 = vld [vmem:[#allocation8 + $0x20] sm:$0xff]
          %v3484 = vld [vmem:[#allocation8 + $0x28] sm:$0xff]
          %v3485 = vld [vmem:[#allocation8 + $0x30] sm:$0xff]
          %v3486 = vld [vmem:[#allocation8 + $0x38] sm:$0xff]
          %v3487 = vld [vmem:[#allocation8 + $0x40] sm:$0xff]
          %v3488 = vld [vmem:[#allocation8 + $0x48] sm:$0xff]
          %v3489 = vld [vmem:[#allocation8 + $0x50] sm:$0xff]
          %v3490 = vld [vmem:[#allocation8 + $0x58] sm:$0xff]
          %v3491 = vld [vmem:[#allocation8 + $0x60] sm:$0xff]
          %v3492 = vld [vmem:[#allocation8 + $0x68] sm:$0xff]
          %v3493 = vld [vmem:[#allocation8 + $0x70] sm:$0xff]
          %v3494 = vld [vmem:[#allocation8 + $0x78] sm:$0xff]
          %v3495 = vld [vmem:[#allocation8 + $0x80] sm:$0xff]
          %v3496 = vld [vmem:[#allocation8 + $0x88] sm:$0xff]
          %v3497 = vld [vmem:[#allocation8 + $0x90] sm:$0xff]
          %v3498 = vld [vmem:[#allocation8 + $0x98] sm:$0xff]
          %v3499 = vld [vmem:[#allocation8 + $0xa0] sm:$0xff]
          %v3500 = vld [vmem:[#allocation8 + $0xa8] sm:$0xff]
          %v3501 = vld [vmem:[#allocation8 + $0xb0] sm:$0xff]
          %v3502 = vld [vmem:[#allocation8 + $0xb8] sm:$0xff]
          %v3503 = vld [vmem:[#allocation8 + $0xc0] sm:$0xff]
          %v3504 = vld [vmem:[#allocation8 + $0xc8] sm:$0xff]
          %v3505 = vld [vmem:[#allocation8 + $0xd0] sm:$0xff]
          %v3506 = vld [vmem:[#allocation8 + $0xd8] sm:$0xff]
          %v3507 = vld [vmem:[#allocation8 + $0xe0] sm:$0xff]
          %v3508 = vld [vmem:[#allocation8 + $0xe8] sm:$0xff]
          %v3509 = vld [vmem:[#allocation8 + $0xf0] sm:$0xff]
          %v3510 = vld [vmem:[#allocation8 + $0xf8] sm:$0xff]
          %v3511 = vld [vmem:[#allocation8 + $0x100] sm:$0xff]
          %v3512 = vld [vmem:[#allocation8 + $0x108] sm:$0xff]
          %v3513 = vld [vmem:[#allocation8 + $0x110] sm:$0xff]
          %v3514 = vld [vmem:[#allocation8 + $0x118] sm:$0xff]
          %v3515 = vld [vmem:[#allocation8 + $0x120] sm:$0xff]
          %v3516 = vld [vmem:[#allocation8 + $0x128] sm:$0xff]
          %v3517 = vld [vmem:[#allocation8 + $0x130] sm:$0xff]
          %v3518 = vld [vmem:[#allocation8 + $0x138] sm:$0xff]
          %v3519 = vld [vmem:[#allocation8 + $0x140] sm:$0xff]
          %v3520 = vld [vmem:[#allocation8 + $0x148] sm:$0xff]
          %v3521 = vld [vmem:[#allocation8 + $0x150] sm:$0xff]
          %v3522 = vld [vmem:[#allocation8 + $0x158] sm:$0xff]
          %v3523 = vld [vmem:[#allocation8 + $0x160] sm:$0xff]
          %v3524 = vld [vmem:[#allocation8 + $0x168] sm:$0xff]
          %v3525 = vld [vmem:[#allocation8 + $0x170] sm:$0xff]
          %v3526 = vld [vmem:[#allocation8 + $0x178] sm:$0xff]
          %v3527 = vld [vmem:[#allocation8 + $0x180] sm:$0xff]
          %v3528 = vld [vmem:[#allocation8 + $0x188] sm:$0xff]
          %v3529 = vld [vmem:[#allocation8 + $0x190] sm:$0xff]
          %v3530 = vld [vmem:[#allocation8 + $0x198] sm:$0xff]
          %v3531 = vld [vmem:[#allocation8 + $0x1a0] sm:$0xff]
          %v3532 = vld [vmem:[#allocation8 + $0x1a8] sm:$0xff]
          %v3533 = vld [vmem:[#allocation8 + $0x1b0] sm:$0xff]
          %v3534 = vld [vmem:[#allocation8 + $0x1b8] sm:$0xff]
          %v3535 = vld [vmem:[#allocation8 + $0x1c0] sm:$0xff]
          %v3536 = vld [vmem:[#allocation8 + $0x1c8] sm:$0xff]
          %v3537 = vld [vmem:[#allocation8 + $0x1d0] sm:$0xff]
          %v3538 = vld [vmem:[#allocation8 + $0x1d8] sm:$0xff]
          %v3539 = vld [vmem:[#allocation8 + $0x1e0] sm:$0xff]
          %v3540 = vld [vmem:[#allocation8 + $0x1e8] sm:$0xff]
          %v3541 = vld [vmem:[#allocation8 + $0x1f0] sm:$0xff]
          %v3542 = vld [vmem:[#allocation8 + $0x1f8] sm:$0xff]
          %v3543 = vld [vmem:[%s10] sm:$0x3]
          %v3545 = vlaneseq
          %v3546 = vshrl.u32 %v3545, 7
          %v3547 = vsub.s32 0, %v3546
          %v3548 = vrot.slane %v3543, %v3547
          %v3549 = vlaneseq
          %v3550 = vshrl.u32 %v3549, 7
          %v3551 = vsub.s32 1, %v3550
          %v3552 = vrot.slane %v3543, %v3551
          %v3619 = vunpack.c.l.b16 %v3479
          %v3620 = vunpack.c.h.b16 %v3479
          %v3621 = vunpack.c.l.b16 %v3480
          %v3622 = vunpack.c.h.b16 %v3480
          %v3623 = vunpack.c.l.b16 %v3481
          %v3624 = vunpack.c.h.b16 %v3481
          %v3625 = vunpack.c.l.b16 %v3482
          %v3626 = vunpack.c.h.b16 %v3482
          %v3627 = vunpack.c.l.b16 %v3483
          %v3628 = vunpack.c.h.b16 %v3483
          %v3629 = vunpack.c.l.b16 %v3484
          %v3630 = vunpack.c.h.b16 %v3484
          %v3631 = vunpack.c.l.b16 %v3485
          %v3632 = vunpack.c.h.b16 %v3485
          %v3633 = vunpack.c.l.b16 %v3486
          %v3634 = vunpack.c.h.b16 %v3486
          %v3635 = vunpack.c.l.b16 %v3487
          %v3636 = vunpack.c.h.b16 %v3487
          %v3637 = vunpack.c.l.b16 %v3488
          %v3638 = vunpack.c.h.b16 %v3488
          %v3639 = vunpack.c.l.b16 %v3489
          %v3640 = vunpack.c.h.b16 %v3489
          %v3641 = vunpack.c.l.b16 %v3490
          %v3642 = vunpack.c.h.b16 %v3490
          %v3643 = vunpack.c.l.b16 %v3491
          %v3644 = vunpack.c.h.b16 %v3491
          %v3645 = vunpack.c.l.b16 %v3492
          %v3646 = vunpack.c.h.b16 %v3492
          %v3647 = vunpack.c.l.b16 %v3493
          %v3648 = vunpack.c.h.b16 %v3493
          %v3649 = vunpack.c.l.b16 %v3494
          %v3650 = vunpack.c.h.b16 %v3494
          %v3651 = vunpack.c.l.b16 %v3495
          %v3652 = vunpack.c.h.b16 %v3495
          %v3653 = vunpack.c.l.b16 %v3496
          %v3654 = vunpack.c.h.b16 %v3496
          %v3655 = vunpack.c.l.b16 %v3497
          %v3656 = vunpack.c.h.b16 %v3497
          %v3657 = vunpack.c.l.b16 %v3498
          %v3658 = vunpack.c.h.b16 %v3498
          %v3659 = vunpack.c.l.b16 %v3499
          %v3660 = vunpack.c.h.b16 %v3499
          %v3661 = vunpack.c.l.b16 %v3500
          %v3662 = vunpack.c.h.b16 %v3500
          %v3663 = vunpack.c.l.b16 %v3501
          %v3664 = vunpack.c.h.b16 %v3501
          %v3665 = vunpack.c.l.b16 %v3502
          %v3666 = vunpack.c.h.b16 %v3502
          %v3667 = vunpack.c.l.b16 %v3503
          %v3668 = vunpack.c.h.b16 %v3503
          %v3669 = vunpack.c.l.b16 %v3504
          %v3670 = vunpack.c.h.b16 %v3504
          %v3671 = vunpack.c.l.b16 %v3505
          %v3672 = vunpack.c.h.b16 %v3505
          %v3673 = vunpack.c.l.b16 %v3506
          %v3674 = vunpack.c.h.b16 %v3506
          %v3675 = vunpack.c.l.b16 %v3507
          %v3676 = vunpack.c.h.b16 %v3507
          %v3677 = vunpack.c.l.b16 %v3508
          %v3678 = vunpack.c.h.b16 %v3508
          %v3679 = vunpack.c.l.b16 %v3509
          %v3680 = vunpack.c.h.b16 %v3509
          %v3681 = vunpack.c.l.b16 %v3510
          %v3682 = vunpack.c.h.b16 %v3510
          %v3683 = vunpack.c.l.b16 %v3511
          %v3684 = vunpack.c.h.b16 %v3511
          %v3685 = vunpack.c.l.b16 %v3512
          %v3686 = vunpack.c.h.b16 %v3512
          %v3687 = vunpack.c.l.b16 %v3513
          %v3688 = vunpack.c.h.b16 %v3513
          %v3689 = vunpack.c.l.b16 %v3514
          %v3690 = vunpack.c.h.b16 %v3514
          %v3691 = vunpack.c.l.b16 %v3515
          %v3692 = vunpack.c.h.b16 %v3515
          %v3693 = vunpack.c.l.b16 %v3516
          %v3694 = vunpack.c.h.b16 %v3516
          %v3695 = vunpack.c.l.b16 %v3517
          %v3696 = vunpack.c.h.b16 %v3517
          %v3697 = vunpack.c.l.b16 %v3518
          %v3698 = vunpack.c.h.b16 %v3518
          %v3699 = vunpack.c.l.b16 %v3519
          %v3700 = vunpack.c.h.b16 %v3519
          %v3701 = vunpack.c.l.b16 %v3520
          %v3702 = vunpack.c.h.b16 %v3520
          %v3703 = vunpack.c.l.b16 %v3521
          %v3704 = vunpack.c.h.b16 %v3521
          %v3705 = vunpack.c.l.b16 %v3522
          %v3706 = vunpack.c.h.b16 %v3522
          %v3707 = vunpack.c.l.b16 %v3523
          %v3708 = vunpack.c.h.b16 %v3523
          %v3709 = vunpack.c.l.b16 %v3524
          %v3710 = vunpack.c.h.b16 %v3524
          %v3711 = vunpack.c.l.b16 %v3525
          %v3712 = vunpack.c.h.b16 %v3525
          %v3713 = vunpack.c.l.b16 %v3526
          %v3714 = vunpack.c.h.b16 %v3526
          %v3715 = vunpack.c.l.b16 %v3527
          %v3716 = vunpack.c.h.b16 %v3527
          %v3717 = vunpack.c.l.b16 %v3528
          %v3718 = vunpack.c.h.b16 %v3528
          %v3719 = vunpack.c.l.b16 %v3529
          %v3720 = vunpack.c.h.b16 %v3529
          %v3721 = vunpack.c.l.b16 %v3530
          %v3722 = vunpack.c.h.b16 %v3530
          %v3723 = vunpack.c.l.b16 %v3531
          %v3724 = vunpack.c.h.b16 %v3531
          %v3725 = vunpack.c.l.b16 %v3532
          %v3726 = vunpack.c.h.b16 %v3532
          %v3727 = vunpack.c.l.b16 %v3533
          %v3728 = vunpack.c.h.b16 %v3533
          %v3729 = vunpack.c.l.b16 %v3534
          %v3730 = vunpack.c.h.b16 %v3534
          %v3731 = vunpack.c.l.b16 %v3535
          %v3732 = vunpack.c.h.b16 %v3535
          %v3733 = vunpack.c.l.b16 %v3536
          %v3734 = vunpack.c.h.b16 %v3536
          %v3735 = vunpack.c.l.b16 %v3537
          %v3736 = vunpack.c.h.b16 %v3537
          %v3737 = vunpack.c.l.b16 %v3538
          %v3738 = vunpack.c.h.b16 %v3538
          %v3739 = vunpack.c.l.b16 %v3539
          %v3740 = vunpack.c.h.b16 %v3539
          %v3741 = vunpack.c.l.b16 %v3540
          %v3742 = vunpack.c.h.b16 %v3540
          %v3743 = vunpack.c.l.b16 %v3541
          %v3744 = vunpack.c.h.b16 %v3541
          %v3745 = vunpack.c.l.b16 %v3542
          %v3746 = vunpack.c.h.b16 %v3542
          %v3747 = vpack.c.b16 %v3621, %v3619
          %v3748 = vpack.c.b16 %v3622, %v3620
          %v3749 = vpack.c.b16 %v3625, %v3623
          %v3750 = vpack.c.b16 %v3626, %v3624
          %v3751 = vpack.c.b16 %v3629, %v3627
          %v3752 = vpack.c.b16 %v3630, %v3628
          %v3753 = vpack.c.b16 %v3633, %v3631
          %v3754 = vpack.c.b16 %v3634, %v3632
          %v3755 = vpack.c.b16 %v3637, %v3635
          %v3756 = vpack.c.b16 %v3638, %v3636
          %v3757 = vpack.c.b16 %v3641, %v3639
          %v3758 = vpack.c.b16 %v3642, %v3640
          %v3759 = vpack.c.b16 %v3645, %v3643
          %v3760 = vpack.c.b16 %v3646, %v3644
          %v3761 = vpack.c.b16 %v3649, %v3647
          %v3762 = vpack.c.b16 %v3650, %v3648
          %v3763 = vpack.c.b16 %v3653, %v3651
          %v3764 = vpack.c.b16 %v3654, %v3652
          %v3765 = vpack.c.b16 %v3657, %v3655
          %v3766 = vpack.c.b16 %v3658, %v3656
          %v3767 = vpack.c.b16 %v3661, %v3659
          %v3768 = vpack.c.b16 %v3662, %v3660
          %v3769 = vpack.c.b16 %v3665, %v3663
          %v3770 = vpack.c.b16 %v3666, %v3664
          %v3771 = vpack.c.b16 %v3669, %v3667
          %v3772 = vpack.c.b16 %v3670, %v3668
          %v3773 = vpack.c.b16 %v3673, %v3671
          %v3774 = vpack.c.b16 %v3674, %v3672
          %v3775 = vpack.c.b16 %v3677, %v3675
          %v3776 = vpack.c.b16 %v3678, %v3676
          %v3777 = vpack.c.b16 %v3681, %v3679
          %v3778 = vpack.c.b16 %v3682, %v3680
          %v3779 = vpack.c.b16 %v3685, %v3683
          %v3780 = vpack.c.b16 %v3686, %v3684
          %v3781 = vpack.c.b16 %v3689, %v3687
          %v3782 = vpack.c.b16 %v3690, %v3688
          %v3783 = vpack.c.b16 %v3693, %v3691
          %v3784 = vpack.c.b16 %v3694, %v3692
          %v3785 = vpack.c.b16 %v3697, %v3695
          %v3786 = vpack.c.b16 %v3698, %v3696
          %v3787 = vpack.c.b16 %v3701, %v3699
          %v3788 = vpack.c.b16 %v3702, %v3700
          %v3789 = vpack.c.b16 %v3705, %v3703
          %v3790 = vpack.c.b16 %v3706, %v3704
          %v3791 = vpack.c.b16 %v3709, %v3707
          %v3792 = vpack.c.b16 %v3710, %v3708
          %v3793 = vpack.c.b16 %v3713, %v3711
          %v3794 = vpack.c.b16 %v3714, %v3712
          %v3795 = vpack.c.b16 %v3717, %v3715
          %v3796 = vpack.c.b16 %v3718, %v3716
          %v3797 = vpack.c.b16 %v3721, %v3719
          %v3798 = vpack.c.b16 %v3722, %v3720
          %v3799 = vpack.c.b16 %v3725, %v3723
          %v3800 = vpack.c.b16 %v3726, %v3724
          %v3801 = vpack.c.b16 %v3729, %v3727
          %v3802 = vpack.c.b16 %v3730, %v3728
          %v3803 = vpack.c.b16 %v3733, %v3731
          %v3804 = vpack.c.b16 %v3734, %v3732
          %v3805 = vpack.c.b16 %v3737, %v3735
          %v3806 = vpack.c.b16 %v3738, %v3736
          %v3807 = vpack.c.b16 %v3741, %v3739
          %v3808 = vpack.c.b16 %v3742, %v3740
          %v3809 = vpack.c.b16 %v3745, %v3743
          %v3810 = vpack.c.b16 %v3746, %v3744
          %3875 = vmatprep.subr.bf16.mxu0 %v3762
          %3876 = vmatpush1.bf16.msra.mxu0 %v3761
          %3877 = vmatprep.subr.bf16.mxu0 %v3760
          %3878 = vmatpush1.bf16.msra.mxu0 %v3759
          %3879 = vmatprep.subr.bf16.mxu0 %v3758
          %3880 = vmatpush1.bf16.msra.mxu0 %v3757
          %3881 = vmatprep.subr.bf16.mxu0 %v3756
          %3882 = vmatpush1.bf16.msra.mxu0 %v3755
          %3883 = vmatprep.subr.bf16.mxu0 %v3754
          %3884 = vmatpush1.bf16.msra.mxu0 %v3753
          %3885 = vmatprep.subr.bf16.mxu0 %v3752
          %3886 = vmatpush1.bf16.msra.mxu0 %v3751
          %3887 = vmatprep.subr.bf16.mxu0 %v3750
          %3888 = vmatpush1.bf16.msra.mxu0 %v3749
          %3889 = vmatprep.subr.bf16.mxu0 %v3748
          %3890 = vmatpush1.bf16.msra.mxu0 %v3747
          %3891 = vmatprep.subr.bf16.mxu0 %v3778
          %3892 = vmatpush2.bf16.msra.mxu0 %v3777
          %3893 = vmatprep.subr.bf16.mxu0 %v3776
          %3894 = vmatpush2.bf16.msra.mxu0 %v3775
          %3895 = vmatprep.subr.bf16.mxu0 %v3774
          %3896 = vmatpush2.bf16.msra.mxu0 %v3773
          %3897 = vmatprep.subr.bf16.mxu0 %v3772
          %3898 = vmatpush2.bf16.msra.mxu0 %v3771
          %3899 = vmatprep.subr.bf16.mxu0 %v3770
          %3900 = vmatpush2.bf16.msra.mxu0 %v3769
          %3901 = vmatprep.subr.bf16.mxu0 %v3768
          %3902 = vmatpush2.bf16.msra.mxu0 %v3767
          %3903 = vmatprep.subr.bf16.mxu0 %v3766
          %3904 = vmatpush2.bf16.msra.mxu0 %v3765
          %3905 = vmatprep.subr.bf16.mxu0 %v3764
          %3906 = vmatpush2.bf16.msra.mxu0 %v3763
          %3907 = vmatprep.mubr.bf16.mxu0 %v3476
          %3908 = vmatmul.mubr.bf16.gmra.mxu0 %v3475
          %v3909 = vpop.f32.mrf.mxu0
          %v3910 = vadd.f32 %v3548, %v3909
          %v3911 = vpop.f32.mrf.mxu0
          %v3912 = vadd.f32 %v3552, %v3911
          %v3913 = vpop.f32.mrf.mxu0
          %v3914 = vpop.f32.mrf.mxu0
          %3915 = vdwg.mxu0
          %3916 = vmatprep.subr.bf16.mxu0 %v3794
          %3917 = vmatpush1.bf16.msra.mxu0 %v3793
          %3918 = vmatprep.subr.bf16.mxu0 %v3792
          %3919 = vmatpush1.bf16.msra.mxu0 %v3791
          %3920 = vmatprep.subr.bf16.mxu0 %v3790
          %3921 = vmatpush1.bf16.msra.mxu0 %v3789
          %3922 = vmatprep.subr.bf16.mxu0 %v3788
          %3923 = vmatpush1.bf16.msra.mxu0 %v3787
          %3924 = vmatprep.subr.bf16.mxu0 %v3786
          %3925 = vmatpush1.bf16.msra.mxu0 %v3785
          %3926 = vmatprep.subr.bf16.mxu0 %v3784
          %3927 = vmatpush1.bf16.msra.mxu0 %v3783
          %3928 = vmatprep.subr.bf16.mxu0 %v3782
          %3929 = vmatpush1.bf16.msra.mxu0 %v3781
          %3930 = vmatprep.subr.bf16.mxu0 %v3780
          %3931 = vmatpush1.bf16.msra.mxu0 %v3779
          %3932 = vmatprep.subr.bf16.mxu0 %v3810
          %3933 = vmatpush2.bf16.msra.mxu0 %v3809
          %3934 = vmatprep.subr.bf16.mxu0 %v3808
          %3935 = vmatpush2.bf16.msra.mxu0 %v3807
          %3936 = vmatprep.subr.bf16.mxu0 %v3806
          %3937 = vmatpush2.bf16.msra.mxu0 %v3805
          %3938 = vmatprep.subr.bf16.mxu0 %v3804
          %3939 = vmatpush2.bf16.msra.mxu0 %v3803
          %3940 = vmatprep.subr.bf16.mxu0 %v3802
          %3941 = vmatpush2.bf16.msra.mxu0 %v3801
          %3942 = vmatprep.subr.bf16.mxu0 %v3800
          %3943 = vmatpush2.bf16.msra.mxu0 %v3799
          %3944 = vmatprep.subr.bf16.mxu0 %v3798
          %3945 = vmatpush2.bf16.msra.mxu0 %v3797
          %3946 = vmatprep.subr.bf16.mxu0 %v3796
          %3947 = vmatpush2.bf16.msra.mxu0 %v3795
          %3948 = vmatprep.mubr.bf16.mxu0 %v3478
          %3949 = vmatmul.mubr.bf16.gmra.mxu0 %v3477
          %v3950 = vpop.f32.mrf.mxu0
          %v3951 = vadd.f32 %v3910, %v3950
          %v3952 = vpop.f32.mrf.mxu0
          %v3953 = vadd.f32 %v3912, %v3952
          %v3954 = vpop.f32.mrf.mxu0
          %v3955 = vpop.f32.mrf.mxu0
          %3956 = vdwg.mxu0
          %v3957 = vmax.f32 %v3951, 0.0
          %v3958 = vmax.f32 %v3953, 0.0
          %v3959 = vpack.c.bf16 %v3957, %v3957
          %v3960 = vpack.c.bf16 %v3958, %v3958
          %v3961 = vld [vmem:[%s11] sm:$0xf]
          %v3962 = vld [vmem:[%s11 + $0x4] sm:$0xf]
          %v3963 = vld [vmem:[%s11 + $0x8] sm:$0xf]
          %v3964 = vld [vmem:[%s11 + $0xc] sm:$0xf]
          %v3965 = vld [vmem:[%s11 + $0x10] sm:$0xf]
          %v3966 = vld [vmem:[%s11 + $0x14] sm:$0xf]
          %v3967 = vld [vmem:[%s11 + $0x18] sm:$0xf]
          %v3968 = vld [vmem:[%s11 + $0x1c] sm:$0xf]
          %v3969 = vld [vmem:[%s11 + $0x20] sm:$0xf]
          %v3970 = vld [vmem:[%s11 + $0x24] sm:$0xf]
          %v3971 = vld [vmem:[%s11 + $0x28] sm:$0xf]
          %v3972 = vld [vmem:[%s11 + $0x2c] sm:$0xf]
          %v3973 = vld [vmem:[%s11 + $0x30] sm:$0xf]
          %v3974 = vld [vmem:[%s11 + $0x34] sm:$0xf]
          %v3975 = vld [vmem:[%s11 + $0x38] sm:$0xf]
          %v3976 = vld [vmem:[%s11 + $0x3c] sm:$0xf]
          %v3977 = vld [vmem:[%s11 + $0x40] sm:$0xf]
          %v3978 = vld [vmem:[%s11 + $0x44] sm:$0xf]
          %v3979 = vld [vmem:[%s11 + $0x48] sm:$0xf]
          %v3980 = vld [vmem:[%s11 + $0x4c] sm:$0xf]
          %v3981 = vld [vmem:[%s11 + $0x50] sm:$0xf]
          %v3982 = vld [vmem:[%s11 + $0x54] sm:$0xf]
          %v3983 = vld [vmem:[%s11 + $0x58] sm:$0xf]
          %v3984 = vld [vmem:[%s11 + $0x5c] sm:$0xf]
          %v3985 = vld [vmem:[%s11 + $0x60] sm:$0xf]
          %v3986 = vld [vmem:[%s11 + $0x64] sm:$0xf]
          %v3987 = vld [vmem:[%s11 + $0x68] sm:$0xf]
          %v3988 = vld [vmem:[%s11 + $0x6c] sm:$0xf]
          %v3989 = vld [vmem:[%s11 + $0x70] sm:$0xf]
          %v3990 = vld [vmem:[%s11 + $0x74] sm:$0xf]
          %v3991 = vld [vmem:[%s11 + $0x78] sm:$0xf]
          %v3992 = vld [vmem:[%s11 + $0x7c] sm:$0xf]
          %v3993 = vld [vmem:[%s12] sm:$0x1]
          %v3995 = vlaneseq
          %v3996 = vshrl.u32 %v3995, 7
          %v3997 = vsub.s32 0, %v3996
          %v3998 = vrot.slane %v3993, %v3997
          %v4032 = vunpack.c.l.b16 %v3961
          %v4033 = vunpack.c.l.b16 %v3962
          %v4034 = vunpack.c.l.b16 %v3963
          %v4035 = vunpack.c.l.b16 %v3964
          %v4036 = vunpack.c.l.b16 %v3965
          %v4037 = vunpack.c.l.b16 %v3966
          %v4038 = vunpack.c.l.b16 %v3967
          %v4039 = vunpack.c.l.b16 %v3968
          %v4040 = vunpack.c.l.b16 %v3969
          %v4041 = vunpack.c.l.b16 %v3970
          %v4042 = vunpack.c.l.b16 %v3971
          %v4043 = vunpack.c.l.b16 %v3972
          %v4044 = vunpack.c.l.b16 %v3973
          %v4045 = vunpack.c.l.b16 %v3974
          %v4046 = vunpack.c.l.b16 %v3975
          %v4047 = vunpack.c.l.b16 %v3976
          %v4048 = vunpack.c.l.b16 %v3977
          %v4049 = vunpack.c.l.b16 %v3978
          %v4050 = vunpack.c.l.b16 %v3979
          %v4051 = vunpack.c.l.b16 %v3980
          %v4052 = vunpack.c.l.b16 %v3981
          %v4053 = vunpack.c.l.b16 %v3982
          %v4054 = vunpack.c.l.b16 %v3983
          %v4055 = vunpack.c.l.b16 %v3984
          %v4056 = vunpack.c.l.b16 %v3985
          %v4057 = vunpack.c.l.b16 %v3986
          %v4058 = vunpack.c.l.b16 %v3987
          %v4059 = vunpack.c.l.b16 %v3988
          %v4060 = vunpack.c.l.b16 %v3989
          %v4061 = vunpack.c.l.b16 %v3990
          %v4062 = vunpack.c.l.b16 %v3991
          %v4063 = vunpack.c.l.b16 %v3992
          %v4064 = vpack.c.b16 %v4033, %v4032
          %v4065 = vpack.c.b16 %v4035, %v4034
          %v4066 = vpack.c.b16 %v4037, %v4036
          %v4067 = vpack.c.b16 %v4039, %v4038
          %v4068 = vpack.c.b16 %v4041, %v4040
          %v4069 = vpack.c.b16 %v4043, %v4042
          %v4070 = vpack.c.b16 %v4045, %v4044
          %v4071 = vpack.c.b16 %v4047, %v4046
          %v4072 = vpack.c.b16 %v4049, %v4048
          %v4073 = vpack.c.b16 %v4051, %v4050
          %v4074 = vpack.c.b16 %v4053, %v4052
          %v4075 = vpack.c.b16 %v4055, %v4054
          %v4076 = vpack.c.b16 %v4057, %v4056
          %v4077 = vpack.c.b16 %v4059, %v4058
          %v4078 = vpack.c.b16 %v4061, %v4060
          %v4079 = vpack.c.b16 %v4063, %v4062
          %4096 = vmatprep.subr.bf16.mxu0 0
          %4097 = vmatpush1.bf16.msra.mxu0 %v4071
          %4098 = vmatprep.subr.bf16.mxu0 0
          %4099 = vmatpush1.bf16.msra.mxu0 %v4070
          %4100 = vmatprep.subr.bf16.mxu0 0
          %4101 = vmatpush1.bf16.msra.mxu0 %v4069
          %4102 = vmatprep.subr.bf16.mxu0 0
          %4103 = vmatpush1.bf16.msra.mxu0 %v4068
          %4104 = vmatprep.subr.bf16.mxu0 0
          %4105 = vmatpush1.bf16.msra.mxu0 %v4067
          %4106 = vmatprep.subr.bf16.mxu0 0
          %4107 = vmatpush1.bf16.msra.mxu0 %v4066
          %4108 = vmatprep.subr.bf16.mxu0 0
          %4109 = vmatpush1.bf16.msra.mxu0 %v4065
          %4110 = vmatprep.subr.bf16.mxu0 0
          %4111 = vmatpush1.bf16.msra.mxu0 %v4064
          %4112 = vmatprep.subr.bf16.mxu0 0
          %4113 = vmatpush2.bf16.msra.mxu0 %v4079
          %4114 = vmatprep.subr.bf16.mxu0 0
          %4115 = vmatpush2.bf16.msra.mxu0 %v4078
          %4116 = vmatprep.subr.bf16.mxu0 0
          %4117 = vmatpush2.bf16.msra.mxu0 %v4077
          %4118 = vmatprep.subr.bf16.mxu0 0
          %4119 = vmatpush2.bf16.msra.mxu0 %v4076
          %4120 = vmatprep.subr.bf16.mxu0 0
          %4121 = vmatpush2.bf16.msra.mxu0 %v4075
          %4122 = vmatprep.subr.bf16.mxu0 0
          %4123 = vmatpush2.bf16.msra.mxu0 %v4074
          %4124 = vmatprep.subr.bf16.mxu0 0
          %4125 = vmatpush2.bf16.msra.mxu0 %v4073
          %4126 = vmatprep.subr.bf16.mxu0 0
          %4127 = vmatpush2.bf16.msra.mxu0 %v4072
          %4128 = vmatprep.mubr.bf16.mxu0 %v3960
          %4129 = vmatmul.mubr.bf16.gmra.mxu0 %v3959
          %v4130 = vpop.f32.mrf.mxu0
          %v4131 = vadd.f32 %v3998, %v4130
          %v4132 = vpop.f32.mrf.mxu0
          %v4133 = vpop.f32.mrf.mxu0
          %v4134 = vpop.f32.mrf.mxu0
          %4135 = vdwg.mxu0
          %v4136 = vld [vmem:[%s13] sm:$0x7]
          %4138 = vset.pattern.permute.xlu0 0
          %4139 = vperm.xlu0 %4138, %v4131
          %v4140 = vpop.permute.xlu0 %4139
          %v4142 = vlaneseq
          %v4143 = vshrl.u32 %v4142, 7
          %v4144 = vsub.s32 0, %v4143
          %v4145 = vrot.slane %v4136, %v4144
          %v4146 = vmul.f32 %v4140, %v4145
          %4147 = vset.pattern.permute.xlu0 1
          %4148 = vperm.xlu0 %4147, %v4131
          %v4149 = vpop.permute.xlu0 %4148
          %v4151 = vlaneseq
          %v4152 = vshrl.u32 %v4151, 7
          %v4153 = vsub.s32 1, %v4152
          %v4154 = vrot.slane %v4136, %v4153
          %v4155 = vmul.f32 %v4149, %v4154
          %v4156 = vadd.f32 %v4146, %v4155
          %4157 = vset.pattern.permute.xlu0 2
          %4158 = vperm.xlu0 %4157, %v4131
          %v4159 = vpop.permute.xlu0 %4158
          %v4161 = vlaneseq
          %v4162 = vshrl.u32 %v4161, 7
          %v4163 = vsub.s32 2, %v4162
          %v4164 = vrot.slane %v4136, %v4163
          %v4165 = vmul.f32 %v4159, %v4164
          %v4166 = vadd.f32 %v4156, %v4165
          %v4169 = vunpack.c.l.s4 1966171168
          %v4170 = vunpack.c.0.s8 %v4169
          %v4171 = vlaneseq
          %v4172 = vshrl.u32 %v4171, 7
          %v4173 = vsub.s32 %v4170, %v4172
          %v4174 = vrot.slane %v4166, %v4173
          %v4175 = vcombine.high %v4174, %v4174
          %v4177 = vunpack.c.l.s4 1966171168
          %v4178 = vunpack.c.0.s8 %v4177
          %v4179 = vlaneseq
          %v4180 = vshrl.u32 %v4179, 7
          %v4181 = vsub.s32 %v4178, %v4180
          %v4182 = vrot.slane %v4174, %v4181
          %v4184 = vunpack.c.l.s4 1966171168
          %v4185 = vunpack.c.0.s8 %v4184
          %v4186 = vlaneseq
          %v4187 = vshrl.u32 %v4186, 7
          %v4188 = vsub.s32 %v4185, %v4187
          %v4189 = vrot.slane %v4175, %v4188
          %4192 = vset.pattern.permute.xlu0 3
          %4193 = vperm.xlu0 %4192, %v4131
          %v4194 = vpop.permute.xlu0 %4193
          %v4196 = vmul.f32 %v4194, %v4145
          %4197 = vset.pattern.permute.xlu0 4
          %4198 = vperm.xlu0 %4197, %v4131
          %v4199 = vpop.permute.xlu0 %4198
          %v4201 = vmul.f32 %v4199, %v4154
          %v4202 = vadd.f32 %v4196, %v4201
          %4203 = vset.pattern.permute.xlu0 5
          %4204 = vperm.xlu0 %4203, %v4131
          %v4205 = vpop.permute.xlu0 %4204
          %v4207 = vmul.f32 %v4205, %v4164
          %v4208 = vadd.f32 %v4202, %v4207
          %v4211 = vunpack.c.l.s4 1966171168
          %v4212 = vunpack.c.0.s8 %v4211
          %v4213 = vlaneseq
          %v4214 = vshrl.u32 %v4213, 7
          %v4215 = vsub.s32 %v4212, %v4214
          %v4216 = vrot.slane %v4208, %v4215
          %v4217 = vcombine.high %v4216, %v4216
          %v4219 = vunpack.c.l.s4 1966171168
          %v4220 = vunpack.c.0.s8 %v4219
          %v4221 = vlaneseq
          %v4222 = vshrl.u32 %v4221, 7
          %v4223 = vsub.s32 %v4220, %v4222
          %v4224 = vrot.slane %v4216, %v4223
          %v4226 = vunpack.c.l.s4 1966171168
          %v4227 = vunpack.c.0.s8 %v4226
          %v4228 = vlaneseq
          %v4229 = vshrl.u32 %v4228, 7
          %v4230 = vsub.s32 %v4227, %v4229
          %v4231 = vrot.slane %v4217, %v4230
          %4232 = vset.pattern.permute.xlu0 6
          %4233 = vperm.xlu0 %4232, %v4131
          %v4234 = vpop.permute.xlu0 %4233
          %v4236 = vmul.f32 %v4234, %v4145
          %4237 = vset.pattern.permute.xlu0 7
          %4238 = vperm.xlu0 %4237, %v4131
          %v4239 = vpop.permute.xlu0 %4238
          %v4241 = vmul.f32 %v4239, %v4154
          %v4242 = vadd.f32 %v4236, %v4241
          %4243 = vset.pattern.permute.xlu0 8
          %4244 = vperm.xlu0 %4243, %v4131
          %v4245 = vpop.permute.xlu0 %4244
          %v4247 = vmul.f32 %v4245, %v4164
          %v4248 = vadd.f32 %v4242, %v4247
          %v4251 = vunpack.c.l.s4 1966171168
          %v4252 = vunpack.c.0.s8 %v4251
          %v4253 = vlaneseq
          %v4254 = vshrl.u32 %v4253, 7
          %v4255 = vsub.s32 %v4252, %v4254
          %v4256 = vrot.slane %v4248, %v4255
          %v4257 = vcombine.high %v4256, %v4256
          %v4259 = vunpack.c.l.s4 1966171168
          %v4260 = vunpack.c.0.s8 %v4259
          %v4261 = vlaneseq
          %v4262 = vshrl.u32 %v4261, 7
          %v4263 = vsub.s32 %v4260, %v4262
          %v4264 = vrot.slane %v4256, %v4263
          %v4266 = vunpack.c.l.s4 1966171168
          %v4267 = vunpack.c.0.s8 %v4266
          %v4268 = vlaneseq
          %v4269 = vshrl.u32 %v4268, 7
          %v4270 = vsub.s32 %v4267, %v4269
          %v4271 = vrot.slane %v4257, %v4270
          %v4272 = vlaneseq
          %v4273 = vshrl.u32 %v4272, 7
          %v4274 = vsub.s32 0, %v4273
          %v4275 = vrot.slane %v4224, %v4274
          %v4276 = vlaneseq
          %v4277 = vshrl.u32 %v4276, 7
          %v4278 = vsub.s32 0, %v4277
          %v4279 = vrot.slane %v4231, %v4278
          %v4282 = vlaneseq
          %v4283 = vshrl.u32 %v4282, 7
          %v4284 = vsub.s32 0, %v4283
          %v4285 = vrot.slane %v4264, %v4284
          %v4286 = vlaneseq
          %v4287 = vshrl.u32 %v4286, 7
          %v4288 = vsub.s32 0, %v4287
          %v4289 = vrot.slane %v4271, %v4288
          %vm4292 = vcmask 1040384
          %v4293 = vsel %vm4292, %v4182, %v4275
          %v4294 = vsel %vm4292, %v4189, %v4279
          %v4295 = vsel %vm570, %v4293, %v4285
          %v4296 = vsel %vm570, %v4294, %v4289
          %v4297 = vpack.c.bf16 %v4295, %v4295
          %v4298 = vpack.c.bf16 %v4296, %v4296
          %vm4299 = vcmask 517120
          %vm4300 = vsmask.f32 1280
          %vm4301 = vmand %vm4299, %vm4300
          %v4302 = vld [vmem:[%s14] sm:$0x3]
          %v4303 = vsel %vm4301, %v4297, %v4302
          %4304 = vst [vmem:[%s14] sm:$0x3] %v4303
          %v4305 = vld [vmem:[%s14 + $0x2] sm:$0x3]
          %v4306 = vsel %vm4301, %v4298, %v4305
          %4307 = vst [vmem:[%s14 + $0x2] sm:$0x3] %v4306
        $region137: #{tpu_custom_call.1} parent=112 // pred_fallthru
          _
        // Predicated region
        $region138: #{tpu_custom_call.1} parent=112 // pred_check
          %p4308 = pneg %p339
        $region139: #{tpu_custom_call.1} parent=112 // pred_check_branch
          %4310 = sbr.rel (%p4308) target = $region141
        $region140: #{tpu_custom_call.1} parent=112 // pred_region
          _
        $region141: #{tpu_custom_call.1} parent=112 // pred_fallthru
          _
        // Predicated region
        $region142: #{tpu_custom_call.1} parent=112 // pred_check
          %p4311 = pneg %p339
        $region143: #{tpu_custom_call.1} parent=112 // pred_check_branch
          %4313 = sbr.rel (%p4311) target = $region145
        $region144: #{tpu_custom_call.1} parent=112 // pred_region
          _
        $region145: #{tpu_custom_call.1} parent=112 // pred_fallthru
          _
      $region113: #{tpu_custom_call.1} parent=5 // pred_fallthru
        _
      %p4314 = scmp.le.s32.totalorder 2, %s22
      // Predicated region
      $region146: #{tpu_custom_call.1} parent=5 // pred_check
        %p4315 = pneg %p4314
      $region147: #{tpu_custom_call.1} parent=5 // pred_check_branch
        %4317 = sbr.rel (%p4315) target = $region149
      $region148: #{tpu_custom_call.1} parent=5 // pred_region
        %s4318 = ssub.s32 %s22, 2
      $region149: #{tpu_custom_call.1} parent=5 // pred_fallthru
        _
    $region6: #{tpu_custom_call.1} parent=1 // loop_footer
      %s26 = sadd.s32 1, %s22
    $region7: #{tpu_custom_call.1} parent=1 // loop_footer_branch
      %21 = sbr.rel target = $region3
    $region8: #{tpu_custom_call.1} parent=1 // loop_exit
      _
    %4319 = vsyncpa [#allocation5], 1
    %s4320 = scalar_lea.sflag [#allocation5], 1
    %4321 = vsyncpa %s4320, 1
    %4322 = vsyncpa [#allocation7], 1

</llo_original>
